<compile_context>
chip_gen: v7x
topology: tpu7x:2x2x1
jax: 0.10.0
libtpu: 0.0.40
codegen_flags: <defaults>
</compile_context>

<pallas_src>
import math

import jax
import jax.numpy as jnp
from jax import lax
from jax.experimental import pallas as pl
from jax.experimental.pallas import tpu as pltpu

# ----------------------------- model constants ------------------------------
GLIMPSE_SIZE = 12
NUM_SCALES = 4
IMG_SIZE = 128
CLASS_NUM = 10
HIDDEN = 128
NUM_GLIMPSES = 8
NGS = GLIMPSE_SIZE / (IMG_SIZE / 2)          # normalized glimpse size
LOC_MIN = -1.0 + NGS / 2
LOC_MAX = 1.0 - NGS / 2
GLIMPSE_FLAT = 3 * NUM_SCALES * GLIMPSE_SIZE * GLIMPSE_SIZE   # 1728
GLIMPSE_PAD = 1792                                            # 14 * 128
CTX_FLAT = 3 * GLIMPSE_SIZE * GLIMPSE_SIZE                    # 432
CTX_PAD = 512                                                 # 4 * 128

# fused head column layout (lane-dense (B, 128) output)
HEAD_EM0 = 0                       # emission raw output: cols [0, 4)
HEAD_ACT0 = 4                      # action logits:       cols [4, 4 + CLASS_NUM)
HEAD_BASE = HEAD_ACT0 + CLASS_NUM  # baseline:            col  14

_COMPILER_PARAMS = pltpu.CompilerParams(dimension_semantics=("arbitrary",))


# ------------------------------ Pallas kernels -------------------------------
def _step_kernel(g_ref, loc_ref, h1_ref, c1_ref, h2_ref, c2_ref,
                 gw_ref, gb_ref, lw_ref, lb_ref, cw_ref, cb_ref,
                 w1_ref, b1_ref, w2_ref, b2_ref, wh_ref, bh_ref,
                 h1_out, c1_out, h2_out, c2_out, head_out):
    """Fused per-glimpse step: glimpse net + LSTM1 + LSTM2 + fused heads."""
    H = HIDDEN

    # ----- glimpse network -----
    # "what" pathway (bf16 matmul operands, f32 accumulate / activations)
    hg = jnp.dot(g_ref[...], gw_ref[...], preferred_element_type=jnp.float32)
    hg = jnp.maximum(hg + gb_ref[...], 0.0)
    # "where" pathway (tiny K=2, kept in f32)
    hl = jnp.dot(loc_ref[...], lw_ref[...], preferred_element_type=jnp.float32)
    hl = jnp.maximum(hl + lb_ref[...], 0.0)
    # combination: single K=2H matmul on concat([hg, hl])
    hgl = jnp.concatenate([hg, hl], axis=1).astype(jnp.bfloat16)
    gfeat = jnp.dot(hgl, cw_ref[...], preferred_element_type=jnp.float32)
    gfeat = jnp.maximum(gfeat + cb_ref[...], 0.0)

    # ----- fused LSTM cell (single K=2H gate matmul) -----
    def lstm(x, h, c, w_ref, b_ref):
        xh = jnp.concatenate([x, h], axis=1).astype(jnp.bfloat16)
        gates = jnp.dot(xh, w_ref[...], preferred_element_type=jnp.float32)
        gates = gates + b_ref[...]
        i = jax.nn.sigmoid(gates[:, 0 * H:1 * H])
        f = jax.nn.sigmoid(gates[:, 1 * H:2 * H])
        g = jnp.tanh(gates[:, 2 * H:3 * H])
        o = jax.nn.sigmoid(gates[:, 3 * H:4 * H])
        c_new = f * c + i * g
        h_new = o * jnp.tanh(c_new)
        return h_new, c_new

    h1n, c1n = lstm(gfeat, h1_ref[...], c1_ref[...], w1_ref, b1_ref)
    h2n, c2n = lstm(h1n, h2_ref[...], c2_ref[...], w2_ref, b2_ref)

    # ----- fused lane-dense heads (emission / action / baseline) -----
    h12 = jnp.concatenate([h1n, h2n], axis=1).astype(jnp.bfloat16)
    head = jnp.dot(h12, wh_ref[...], preferred_element_type=jnp.float32)
    head = head + bh_ref[...]

    h1_out[...] = h1n
    c1_out[...] = c1n
    h2_out[...] = h2n
    c2_out[...] = c2n
    head_out[...] = head


def _init_kernel(ctx_ref, cw_ref, cb_ref, wh2_ref, bh_ref, h2_out, head_out):
    """Context network init of h2 + initial emission head."""
    h2 = jnp.dot(ctx_ref[...], cw_ref[...], preferred_element_type=jnp.float32)
    h2 = jnp.tanh(h2 + cb_ref[...])
    head = jnp.dot(h2.astype(jnp.bfloat16), wh2_ref[...],
                   preferred_element_type=jnp.float32)
    head = head + bh_ref[...]
    h2_out[...] = h2
    head_out[...] = head


# ------------------------------ kernel wrappers -------------------------------
def pallas_step(gflat, loc, h1, c1, h2, c2, wp):
    B = gflat.shape[0]
    H = HIDDEN
    in_specs = [
        pl.BlockSpec((B, GLIMPSE_PAD), lambda i: (0, 0)),   # glimpse feats (bf16)
        pl.BlockSpec((B, 2), lambda i: (0, 0)),             # location
        pl.BlockSpec((B, H), lambda i: (0, 0)),             # h1
        pl.BlockSpec((B, H), lambda i: (0, 0)),             # c1
        pl.BlockSpec((B, H), lambda i: (0, 0)),             # h2
        pl.BlockSpec((B, H), lambda i: (0, 0)),             # c2
        pl.BlockSpec((GLIMPSE_PAD, H), lambda i: (0, 0)),   # gw (bf16)
        pl.BlockSpec((1, H), lambda i: (0, 0)),             # gb
        pl.BlockSpec((2, H), lambda i: (0, 0)),             # lw
        pl.BlockSpec((1, H), lambda i: (0, 0)),             # lb
        pl.BlockSpec((2 * H, H), lambda i: (0, 0)),         # cw (bf16)
        pl.BlockSpec((1, H), lambda i: (0, 0)),             # cb
        pl.BlockSpec((2 * H, 4 * H), lambda i: (0, 0)),     # w1 (bf16)
        pl.BlockSpec((1, 4 * H), lambda i: (0, 0)),         # b1
        pl.BlockSpec((2 * H, 4 * H), lambda i: (0, 0)),     # w2 (bf16)
        pl.BlockSpec((1, 4 * H), lambda i: (0, 0)),         # b2
        pl.BlockSpec((2 * H, H), lambda i: (0, 0)),         # wh (bf16)
        pl.BlockSpec((1, H), lambda i: (0, 0)),             # bh
    ]
    out_specs = tuple(pl.BlockSpec((B, H), lambda i: (0, 0)) for _ in range(5))
    out_shape = tuple(jax.ShapeDtypeStruct((B, H), jnp.float32) for _ in range(5))
    return pl.pallas_call(
        _step_kernel,
        out_shape=out_shape,
        grid=(1,),
        in_specs=in_specs,
        out_specs=out_specs,
        compiler_params=_COMPILER_PARAMS,
    )(gflat, loc, h1, c1, h2, c2,
      wp["gw"], wp["gb"], wp["lw"], wp["lb"], wp["cw"], wp["cb"],
      wp["w1"], wp["b1"], wp["w2"], wp["b2"], wp["wh"], wp["bh"])


def pallas_init(ctx, wp):
    B = ctx.shape[0]
    H = HIDDEN
    wh2 = wp["wh"][H:, :]   # h2 half of the fused head weight (h1 is zero at init)
    return pl.pallas_call(
        _init_kernel,
        out_shape=(jax.ShapeDtypeStruct((B, H), jnp.float32),
                   jax.ShapeDtypeStruct((B, H), jnp.float32)),
        grid=(1,),
        in_specs=[
            pl.BlockSpec((B, CTX_PAD), lambda i: (0, 0)),
            pl.BlockSpec((CTX_PAD, H), lambda i: (0, 0)),
            pl.BlockSpec((1, H), lambda i: (0, 0)),
            pl.BlockSpec((H, H), lambda i: (0, 0)),
            pl.BlockSpec((1, H), lambda i: (0, 0)),
        ],
        out_specs=(pl.BlockSpec((B, H), lambda i: (0, 0)),
                   pl.BlockSpec((B, H), lambda i: (0, 0))),
        compiler_params=_COMPILER_PARAMS,
    )(ctx, wp["ctxw"], wp["ctxb"], wh2, wp["bh"])


# --------------------------- plain-JAX glue pieces ---------------------------
def get_glimpse_from_padded(xp, loc, glimpse_size, num_scales, orig_h, orig_w,
                            pad):
    """Multi-scale retina glimpse from a PRE-padded NCHW image."""
    # TODO(synk): original get_glimpse implementation not provided; this follows
    # the standard DRAM multi-resolution retina (zero padding at boundaries).
    _, C, Hp, Wp = xp.shape
    center = (loc + 1.0) * 0.5 * jnp.array([orig_h, orig_w], jnp.float32) + pad

    def extract_one(img_p, c):
        patches = []
        for s in range(num_scales):
            psz = glimpse_size * 2 ** s
            start = jnp.round(c - psz / 2.0).astype(jnp.int32)
            start = jnp.clip(start, 0, jnp.array([Hp - psz, Wp - psz]))
            patch = lax.dynamic_slice(img_p, (0, start[0], start[1]),
                                      (C, psz, psz))
            k = 2 ** s
            patch = patch.reshape(C, glimpse_size, k, glimpse_size, k)
            patch = patch.mean(axis=(2, 4))
            patches.append(patch)
        return jnp.concatenate(patches, axis=0)   # (C*num_scales, gs, gs)

    return jax.vmap(extract_one)(xp, center)


def _emission_from_head(head):
    # TODO(synk): Gaussian location sampling is made deterministic (loc = mean);
    # log_prob is evaluated at the mean.
    mu = jnp.tanh(head[:, HEAD_EM0:HEAD_EM0 + 2])
    log_std = 0.5 * jnp.tanh(head[:, HEAD_EM0 + 2:HEAD_EM0 + 4])
    std = jnp.exp(log_std)
    log_prob = jnp.sum(-log_std - 0.5 * jnp.log(2.0 * jnp.pi), axis=1)
    return mu, std, log_prob


# ------------------------------ parameter init -------------------------------
def _uniform(key, shape, fan_in):
    bound = 1.0 / math.sqrt(fan_in)
    return jax.random.uniform(key, shape, jnp.float32, -bound, bound)


def init_params(key):
    ks = jax.random.split(key, 24)
    p = {}
    # glimpse network
    p["g_w"] = _uniform(ks[0], (GLIMPSE_FLAT, HIDDEN), GLIMPSE_FLAT)
    p["g_b"] = _uniform(ks[1], (HIDDEN,), GLIMPSE_FLAT)
    p["l_w"] = _uniform(ks[2], (2, HIDDEN), 2)
    p["l_b"] = _uniform(ks[3], (HIDDEN,), 2)
    p["gg_w"] = _uniform(ks[4], (HIDDEN, HIDDEN), HIDDEN)
    p["ll_w"] = _uniform(ks[5], (HIDDEN, HIDDEN), HIDDEN)
    p["o_b"] = _uniform(ks[6], (HIDDEN,), HIDDEN)
    # rnn1 (glimpse LSTM)
    p["lstm1_wih"] = _uniform(ks[7], (HIDDEN, 4 * HIDDEN), HIDDEN)
    p["lstm1_whh"] = _uniform(ks[8], (HIDDEN, 4 * HIDDEN), HIDDEN)
    p["lstm1_b"] = _uniform(ks[9], (4 * HIDDEN,), HIDDEN)
    # rnn2 (location LSTM)
    p["lstm2_wih"] = _uniform(ks[10], (HIDDEN, 4 * HIDDEN), HIDDEN)
    p["lstm2_whh"] = _uniform(ks[11], (HIDDEN, 4 * HIDDEN), HIDDEN)
    p["lstm2_b"] = _uniform(ks[12], (4 * HIDDEN,), HIDDEN)
    # context network (init of rnn2 hidden from downsampled image)
    p["ctx_w"] = _uniform(ks[13], (CTX_FLAT, HIDDEN), CTX_FLAT)
    p["ctx_b"] = _uniform(ks[14], (HIDDEN,), CTX_FLAT)
    # emission network (mean + log-std)
    p["em_w"] = _uniform(ks[15], (HIDDEN, 4), HIDDEN)
    p["em_b"] = _uniform(ks[16], (4,), HIDDEN)
    # action network
    p["act_w"] = _uniform(ks[17], (HIDDEN, CLASS_NUM), HIDDEN)
    p["act_b"] = _uniform(ks[18], (CLASS_NUM,), HIDDEN)
    # baseline network
    p["base_w"] = _uniform(ks[19], (2 * HIDDEN, 1), 2 * HIDDEN)
    p["base_b"] = _uniform(ks[20], (1,), 2 * HIDDEN)
    return p


def prepare_params(p):
    """Build kernel-ready fused / padded / bf16 weights (done once)."""
    H = HIDDEN
    wp = {}
    # glimpse "what" weight padded 1728 -> 1792 (lane-dense activation loads)
    gw = jnp.zeros((GLIMPSE_PAD, H), jnp.float32).at[:GLIMPSE_FLAT].set(p["g_w"])
    wp["gw"] = gw.astype(jnp.bfloat16)
    wp["gb"] = p["g_b"].reshape(1, H)
    wp["lw"] = p["l_w"]                                    # (2, H) f32 (tiny)
    wp["lb"] = p["l_b"].reshape(1, H)
    # combination layer: single (2H, H) weight for concat([hg, hl])
    wp["cw"] = jnp.concatenate([p["gg_w"], p["ll_w"]], axis=0).astype(jnp.bfloat16)
    wp["cb"] = p["o_b"].reshape(1, H)
    # fused LSTM gate weights (2H, 4H) for concat([x, h])
    wp["w1"] = jnp.concatenate([p["lstm1_wih"], p["lstm1_whh"]],
                               axis=0).astype(jnp.bfloat16)
    wp["b1"] = p["lstm1_b"].reshape(1, 4 * H)
    wp["w2"] = jnp.concatenate([p["lstm2_wih"], p["lstm2_whh"]],
                               axis=0).astype(jnp.bfloat16)
    wp["b2"] = p["lstm2_b"].reshape(1, 4 * H)
    # fused lane-dense heads: cols [0,4)=emission(h2), [4,14)=action(h1), 14=baseline
    wh1 = jnp.zeros((H, H), jnp.float32)
    wh1 = wh1.at[:, HEAD_ACT0:HEAD_ACT0 + CLASS_NUM].set(p["act_w"])
    wh1 = wh1.at[:, HEAD_BASE:HEAD_BASE + 1].set(p["base_w"][:H])
    wh2 = jnp.zeros((H, H), jnp.float32)
    wh2 = wh2.at[:, HEAD_EM0:HEAD_EM0 + 4].set(p["em_w"])
    wh2 = wh2.at[:, HEAD_BASE:HEAD_BASE + 1].set(p["base_w"][H:])
    wp["wh"] = jnp.concatenate([wh1, wh2], axis=0).astype(jnp.bfloat16)
    bh = jnp.zeros((1, H), jnp.float32)
    bh = bh.at[0, HEAD_EM0:HEAD_EM0 + 4].set(p["em_b"])
    bh = bh.at[0, HEAD_ACT0:HEAD_ACT0 + CLASS_NUM].set(p["act_b"])
    bh = bh.at[0, HEAD_BASE].set(p["base_b"][0])
    wp["bh"] = bh
    # context network padded 432 -> 512
    cw = jnp.zeros((CTX_PAD, H), jnp.float32).at[:CTX_FLAT].set(p["ctx_w"])
    wp["ctxw"] = cw.astype(jnp.bfloat16)
    wp["ctxb"] = p["ctx_b"].reshape(1, H)
    return wp


# -------------------------------- forward pass --------------------------------
def gdram_forward(wp, x):
    B, C, H_img, W_img = x.shape

    # hoisted loop-invariant image padding for glimpse extraction
    max_patch = GLIMPSE_SIZE * 2 ** (NUM_SCALES - 1)
    pad = max_patch // 2
    xp = jnp.pad(x, ((0, 0), (0, 0), (pad, pad), (pad, pad)))

    # rnn1 init: zeros
    h1 = jnp.zeros((B, HIDDEN), jnp.float32)
    c1 = jnp.zeros((B, HIDDEN), jnp.float32)
    # rnn2 init: context network on a downsampled image
    # TODO(synk): LocationLSTMCoreNetwork.init_hidden reconstructed as a
    # DRAM-style context network (low-res image -> linear -> tanh).
    ctx = jax.image.resize(x, (B, C, GLIMPSE_SIZE, GLIMPSE_SIZE), "linear")
    ctx = ctx.reshape(B, -1)
    ctx = jnp.pad(ctx, ((0, 0), (0, CTX_PAD - CTX_FLAT))).astype(jnp.bfloat16)
    h2, head0 = pallas_init(ctx, wp)
    c2 = jnp.zeros((B, HIDDEN), jnp.float32)

    mu, std, log_prob = _emission_from_head(head0)
    location = jnp.clip(mu, LOC_MIN, LOC_MAX)

    locations, loc_log_probs, baselines, weights_list = [], [], [], []
    weight = jnp.ones((B,), jnp.float32)
    action_logits = jnp.zeros((B, CLASS_NUM), jnp.float32)
    weight_sum = jnp.zeros((B, 1), jnp.float32)

    for _ in range(NUM_GLIMPSES):
        locations.append(location)
        loc_log_probs.append(log_prob)

        glimpse = get_glimpse_from_padded(xp, lax.stop_gradient(location),
                                          GLIMPSE_SIZE, NUM_SCALES,
                                          H_img, W_img, pad)
        gflat = glimpse.reshape(B, -1)
        gflat = jnp.pad(gflat, ((0, 0), (0, GLIMPSE_PAD - GLIMPSE_FLAT)))
        gflat = gflat.astype(jnp.bfloat16)

        # one fused kernel: glimpse net + LSTM1 + LSTM2 + emission/action/baseline
        h1, c1, h2, c2, head = pallas_step(gflat, location, h1, c1, h2, c2, wp)

        mu, std, log_prob = _emission_from_head(head)
        loc_diff = mu * (NGS / 2 * 2 ** (NUM_SCALES - 1))
        location = jnp.clip(lax.stop_gradient(location) + loc_diff,
                            LOC_MIN, LOC_MAX)

        baselines.append(head[:, HEAD_BASE])

        w = weight[:, None]                                    # (B,1)
        action_logits = action_logits + w * head[:, HEAD_ACT0:HEAD_ACT0 + CLASS_NUM]
        weights_list.append(weight)
        weight_sum = weight_sum + w

        std_m = jnp.mean(std, axis=1)
        normalized_std = (std_m - math.exp(-0.5)) / (math.exp(0.5)
                                                     - math.exp(-0.5))
        weight = 1.0 - normalized_std

    action_logits = action_logits / weight_sum
    return (action_logits,
            jnp.stack(locations, axis=1),
            jnp.stack(loc_log_probs, axis=1),
            jnp.stack(baselines, axis=1),
            jnp.stack(weights_list, axis=1))


# ----------------------------------- main -------------------------------------
if __name__ == "__main__":
    key = jax.random.PRNGKey(0)
    pkey, xkey = jax.random.split(key)
    raw_params = init_params(pkey)
    wp = prepare_params(raw_params)
    x = jax.random.normal(xkey, (2, 3, IMG_SIZE, IMG_SIZE), jnp.float32)

    outs = jax.jit(gdram_forward)(wp, x)
    outs = jax.block_until_ready(outs)

    action_logits, locations, location_log_probs, baselines, weights = outs
    assert action_logits.shape == (2, CLASS_NUM)
    assert locations.shape == (2, NUM_GLIMPSES, 2)
    assert location_log_probs.shape == (2, NUM_GLIMPSES)
    assert baselines.shape == (2, NUM_GLIMPSES)
    assert weights.shape == (2, NUM_GLIMPSES)
    for o in outs:
        assert bool(jnp.all(jnp.isfinite(o)))
    print("KERNEL_OK")
</pallas_src>

<mosaic_0001>
module attributes {stable_mosaic.version = 11 : i64} {
  func.func @_init_kernel(%arg0: i32, %arg1: memref<2x512xbf16, #tpu.memory_space<vmem>>, %arg2: memref<512x128xbf16, #tpu.memory_space<vmem>>, %arg3: memref<1x128xf32, #tpu.memory_space<vmem>>, %arg4: memref<128x128xbf16, #tpu.memory_space<vmem>>, %arg5: memref<1x128xf32, #tpu.memory_space<vmem>>, %arg6: memref<2x128xf32, #tpu.memory_space<vmem>>, %arg7: memref<2x128xf32, #tpu.memory_space<vmem>>) attributes {dimension_semantics = [#tpu.dimension_semantics<arbitrary>], iteration_bounds = array<i64: 1>, scalar_prefetch = 0 : i64, scratch_operands = 0 : i64, tpu.core_type = #tpu.core_type<tc>, window_params = [{pipeline_mode = #tpu.pipeline_mode<synchronous>, transform_indices = @transform_0, window_bounds = array<i64: 2, 512>}, {pipeline_mode = #tpu.pipeline_mode<synchronous>, transform_indices = @transform_1, window_bounds = array<i64: 512, 128>}, {pipeline_mode = #tpu.pipeline_mode<synchronous>, transform_indices = @transform_2, window_bounds = array<i64: 1, 128>}, {pipeline_mode = #tpu.pipeline_mode<synchronous>, transform_indices = @transform_3, window_bounds = array<i64: 128, 128>}, {pipeline_mode = #tpu.pipeline_mode<synchronous>, transform_indices = @transform_4, window_bounds = array<i64: 1, 128>}, {pipeline_mode = #tpu.pipeline_mode<synchronous>, transform_indices = @transform_5, window_bounds = array<i64: 2, 128>}, {pipeline_mode = #tpu.pipeline_mode<synchronous>, transform_indices = @transform_6, window_bounds = array<i64: 2, 128>}]} {
    %c0 = arith.constant 0 : index
    %c0_0 = arith.constant 0 : index
    %0 = vector.load %arg1[%c0, %c0_0] : memref<2x512xbf16, #tpu.memory_space<vmem>>, vector<2x512xbf16>
    %c0_1 = arith.constant 0 : index
    %c0_2 = arith.constant 0 : index
    %1 = vector.load %arg2[%c0_1, %c0_2] : memref<512x128xbf16, #tpu.memory_space<vmem>>, vector<512x128xbf16>
    %cst = arith.constant dense<0.000000e+00> : vector<2x128xf32>
    %2 = tpu.matmul %0, %1, %cst {dimension_numbers = #tpu.dot_dimension_numbers<[1], [0], [0], [1], [0, 0, 1, 1], [], []>} : vector<2x512xbf16>, vector<512x128xbf16>, vector<2x128xf32> -> vector<2x128xf32>
    %c0_3 = arith.constant 0 : index
    %c0_4 = arith.constant 0 : index
    %3 = vector.load %arg3[%c0_3, %c0_4] : memref<1x128xf32, #tpu.memory_space<vmem>>, vector<1x128xf32>
    %4 = vector.broadcast %3 : vector<1x128xf32> to vector<2x128xf32>
    %5 = arith.addf %2, %4 : vector<2x128xf32>
    %6 = math.tanh %5 : vector<2x128xf32>
    %7 = arith.truncf %6 : vector<2x128xf32> to vector<2x128xbf16>
    %c0_5 = arith.constant 0 : index
    %c0_6 = arith.constant 0 : index
    %8 = vector.load %arg4[%c0_5, %c0_6] : memref<128x128xbf16, #tpu.memory_space<vmem>>, vector<128x128xbf16>
    %cst_7 = arith.constant dense<0.000000e+00> : vector<2x128xf32>
    %9 = tpu.matmul %7, %8, %cst_7 {dimension_numbers = #tpu.dot_dimension_numbers<[1], [0], [0], [1], [0, 0, 1, 1], [], []>} : vector<2x128xbf16>, vector<128x128xbf16>, vector<2x128xf32> -> vector<2x128xf32>
    %c0_8 = arith.constant 0 : index
    %c0_9 = arith.constant 0 : index
    %10 = vector.load %arg5[%c0_8, %c0_9] : memref<1x128xf32, #tpu.memory_space<vmem>>, vector<1x128xf32>
    %11 = vector.broadcast %10 : vector<1x128xf32> to vector<2x128xf32>
    %12 = arith.addf %9, %11 : vector<2x128xf32>
    %c0_10 = arith.constant 0 : index
    %c0_11 = arith.constant 0 : index
    %13 = vector.load %arg6[%c0_10, %c0_11] : memref<2x128xf32, #tpu.memory_space<vmem>>, vector<2x128xf32>
    tpu.vector_store %arg6[%c0_10, %c0_11], %6 {strides = array<i32>} : memref<2x128xf32, #tpu.memory_space<vmem>>, vector<2x128xf32>,
    %c0_12 = arith.constant 0 : index
    %c0_13 = arith.constant 0 : index
    %14 = vector.load %arg7[%c0_12, %c0_13] : memref<2x128xf32, #tpu.memory_space<vmem>>, vector<2x128xf32>
    tpu.vector_store %arg7[%c0_12, %c0_13], %12 {strides = array<i32>} : memref<2x128xf32, #tpu.memory_space<vmem>>, vector<2x128xf32>,
    return
  }
  func.func @transform_0(%arg0: i32) -> (i32, i32) {
    %c0_i32 = arith.constant 0 : i32
    %c0_i32_0 = arith.constant 0 : i32
    %c0_i32_1 = arith.constant 0 : i32
    return %c0_i32, %c0_i32_0 : i32, i32
  }
  func.func @transform_1(%arg0: i32) -> (i32, i32) {
    %c0_i32 = arith.constant 0 : i32
    %c0_i32_0 = arith.constant 0 : i32
    %c0_i32_1 = arith.constant 0 : i32
    return %c0_i32, %c0_i32_0 : i32, i32
  }
  func.func @transform_2(%arg0: i32) -> (i32, i32) {
    %c0_i32 = arith.constant 0 : i32
    %c0_i32_0 = arith.constant 0 : i32
    %c0_i32_1 = arith.constant 0 : i32
    return %c0_i32, %c0_i32_0 : i32, i32
  }
  func.func @transform_3(%arg0: i32) -> (i32, i32) {
    %c0_i32 = arith.constant 0 : i32
    %c0_i32_0 = arith.constant 0 : i32
    %c0_i32_1 = arith.constant 0 : i32
    return %c0_i32, %c0_i32_0 : i32, i32
  }
  func.func @transform_4(%arg0: i32) -> (i32, i32) {
    %c0_i32 = arith.constant 0 : i32
    %c0_i32_0 = arith.constant 0 : i32
    %c0_i32_1 = arith.constant 0 : i32
    return %c0_i32, %c0_i32_0 : i32, i32
  }
  func.func @transform_5(%arg0: i32) -> (i32, i32) {
    %c0_i32 = arith.constant 0 : i32
    %c0_i32_0 = arith.constant 0 : i32
    %c0_i32_1 = arith.constant 0 : i32
    return %c0_i32, %c0_i32_0 : i32, i32
  }
  func.func @transform_6(%arg0: i32) -> (i32, i32) {
    %c0_i32 = arith.constant 0 : i32
    %c0_i32_0 = arith.constant 0 : i32
    %c0_i32_1 = arith.constant 0 : i32
    return %c0_i32, %c0_i32_0 : i32, i32
  }
}

module attributes {stable_mosaic.version = 11 : i64} {
  func.func @_step_kernel(%arg0: i32, %arg1: memref<2x1792xbf16, #tpu.memory_space<vmem>>, %arg2: memref<2x2xf32, #tpu.memory_space<vmem>>, %arg3: memref<2x128xf32, #tpu.memory_space<vmem>>, %arg4: memref<2x128xf32, #tpu.memory_space<vmem>>, %arg5: memref<2x128xf32, #tpu.memory_space<vmem>>, %arg6: memref<2x128xf32, #tpu.memory_space<vmem>>, %arg7: memref<1792x128xbf16, #tpu.memory_space<vmem>>, %arg8: memref<1x128xf32, #tpu.memory_space<vmem>>, %arg9: memref<2x128xf32, #tpu.memory_space<vmem>>, %arg10: memref<1x128xf32, #tpu.memory_space<vmem>>, %arg11: memref<256x128xbf16, #tpu.memory_space<vmem>>, %arg12: memref<1x128xf32, #tpu.memory_space<vmem>>, %arg13: memref<256x512xbf16, #tpu.memory_space<vmem>>, %arg14: memref<1x512xf32, #tpu.memory_space<vmem>>, %arg15: memref<256x512xbf16, #tpu.memory_space<vmem>>, %arg16: memref<1x512xf32, #tpu.memory_space<vmem>>, %arg17: memref<256x128xbf16, #tpu.memory_space<vmem>>, %arg18: memref<1x128xf32, #tpu.memory_space<vmem>>, %arg19: memref<2x128xf32, #tpu.memory_space<vmem>>, %arg20: memref<2x128xf32, #tpu.memory_space<vmem>>, %arg21: memref<2x128xf32, #tpu.memory_space<vmem>>, %arg22: memref<2x128xf32, #tpu.memory_space<vmem>>, %arg23: memref<2x128xf32, #tpu.memory_space<vmem>>) attributes {dimension_semantics = [#tpu.dimension_semantics<arbitrary>], iteration_bounds = array<i64: 1>, scalar_prefetch = 0 : i64, scratch_operands = 0 : i64, tpu.core_type = #tpu.core_type<tc>, window_params = [{pipeline_mode = #tpu.pipeline_mode<synchronous>, transform_indices = @transform_0, window_bounds = array<i64: 2, 1792>}, {pipeline_mode = #tpu.pipeline_mode<synchronous>, transform_indices = @transform_1, window_bounds = array<i64: 2, 2>}, {pipeline_mode = #tpu.pipeline_mode<synchronous>, transform_indices = @transform_2, window_bounds = array<i64: 2, 128>}, {pipeline_mode = #tpu.pipeline_mode<synchronous>, transform_indices = @transform_3, window_bounds = array<i64: 2, 128>}, {pipeline_mode = #tpu.pipeline_mode<synchronous>, transform_indices = @transform_4, window_bounds = array<i64: 2, 128>}, {pipeline_mode = #tpu.pipeline_mode<synchronous>, transform_indices = @transform_5, window_bounds = array<i64: 2, 128>}, {pipeline_mode = #tpu.pipeline_mode<synchronous>, transform_indices = @transform_6, window_bounds = array<i64: 1792, 128>}, {pipeline_mode = #tpu.pipeline_mode<synchronous>, transform_indices = @transform_7, window_bounds = array<i64: 1, 128>}, {pipeline_mode = #tpu.pipeline_mode<synchronous>, transform_indices = @transform_8, window_bounds = array<i64: 2, 128>}, {pipeline_mode = #tpu.pipeline_mode<synchronous>, transform_indices = @transform_9, window_bounds = array<i64: 1, 128>}, {pipeline_mode = #tpu.pipeline_mode<synchronous>, transform_indices = @transform_10, window_bounds = array<i64: 256, 128>}, {pipeline_mode = #tpu.pipeline_mode<synchronous>, transform_indices = @transform_11, window_bounds = array<i64: 1, 128>}, {pipeline_mode = #tpu.pipeline_mode<synchronous>, transform_indices = @transform_12, window_bounds = array<i64: 256, 512>}, {pipeline_mode = #tpu.pipeline_mode<synchronous>, transform_indices = @transform_13, window_bounds = array<i64: 1, 512>}, {pipeline_mode = #tpu.pipeline_mode<synchronous>, transform_indices = @transform_14, window_bounds = array<i64: 256, 512>}, {pipeline_mode = #tpu.pipeline_mode<synchronous>, transform_indices = @transform_15, window_bounds = array<i64: 1, 512>}, {pipeline_mode = #tpu.pipeline_mode<synchronous>, transform_indices = @transform_16, window_bounds = array<i64: 256, 128>}, {pipeline_mode = #tpu.pipeline_mode<synchronous>, transform_indices = @transform_17, window_bounds = array<i64: 1, 128>}, {pipeline_mode = #tpu.pipeline_mode<synchronous>, transform_indices = @transform_18, window_bounds = array<i64: 2, 128>}, {pipeline_mode = #tpu.pipeline_mode<synchronous>, transform_indices = @transform_19, window_bounds = array<i64: 2, 128>}, {pipeline_mode = #tpu.pipeline_mode<synchronous>, transform_indices = @transform_20, window_bounds = array<i64: 2, 128>}, {pipeline_mode = #tpu.pipeline_mode<synchronous>, transform_indices = @transform_21, window_bounds = array<i64: 2, 128>}, {pipeline_mode = #tpu.pipeline_mode<synchronous>, transform_indices = @transform_22, window_bounds = array<i64: 2, 128>}]} {
    %c0 = arith.constant 0 : index
    %c0_0 = arith.constant 0 : index
    %0 = vector.load %arg1[%c0, %c0_0] : memref<2x1792xbf16, #tpu.memory_space<vmem>>, vector<2x1792xbf16>
    %c0_1 = arith.constant 0 : index
    %c0_2 = arith.constant 0 : index
    %1 = vector.load %arg7[%c0_1, %c0_2] : memref<1792x128xbf16, #tpu.memory_space<vmem>>, vector<1792x128xbf16>
    %cst = arith.constant dense<0.000000e+00> : vector<2x128xf32>
    %2 = tpu.matmul %0, %1, %cst {dimension_numbers = #tpu.dot_dimension_numbers<[1], [0], [0], [1], [0, 0, 1, 1], [], []>} : vector<2x1792xbf16>, vector<1792x128xbf16>, vector<2x128xf32> -> vector<2x128xf32>
    %c0_3 = arith.constant 0 : index
    %c0_4 = arith.constant 0 : index
    %3 = vector.load %arg8[%c0_3, %c0_4] : memref<1x128xf32, #tpu.memory_space<vmem>>, vector<1x128xf32>
    %4 = vector.broadcast %3 : vector<1x128xf32> to vector<2x128xf32>
    %5 = arith.addf %2, %4 : vector<2x128xf32>
    %cst_5 = arith.constant 0.000000e+00 : f32
    %6 = vector.broadcast %cst_5 : f32 to vector<2x128xf32>
    %7 = arith.maximumf %5, %6 : vector<2x128xf32>
    %c0_6 = arith.constant 0 : index
    %c0_7 = arith.constant 0 : index
    %8 = vector.load %arg2[%c0_6, %c0_7] : memref<2x2xf32, #tpu.memory_space<vmem>>, vector<2x2xf32>
    %c0_8 = arith.constant 0 : index
    %c0_9 = arith.constant 0 : index
    %9 = vector.load %arg9[%c0_8, %c0_9] : memref<2x128xf32, #tpu.memory_space<vmem>>, vector<2x128xf32>
    %cst_10 = arith.constant dense<0.000000e+00> : vector<2x128xf32>
    %10 = tpu.matmul %8, %9, %cst_10 {dimension_numbers = #tpu.dot_dimension_numbers<[1], [0], [0], [1], [0, 0, 1, 1], [], []>} : vector<2x2xf32>, vector<2x128xf32>, vector<2x128xf32> -> vector<2x128xf32>
    %c0_11 = arith.constant 0 : index
    %c0_12 = arith.constant 0 : index
    %11 = vector.load %arg10[%c0_11, %c0_12] : memref<1x128xf32, #tpu.memory_space<vmem>>, vector<1x128xf32>
    %12 = vector.broadcast %11 : vector<1x128xf32> to vector<2x128xf32>
    %13 = arith.addf %10, %12 : vector<2x128xf32>
    %cst_13 = arith.constant 0.000000e+00 : f32
    %14 = vector.broadcast %cst_13 : f32 to vector<2x128xf32>
    %15 = arith.maximumf %13, %14 : vector<2x128xf32>
    %16 = tpu.concatenate %7, %15 in 1 : vector<2x128xf32>, vector<2x128xf32> -> vector<2x256xf32>
    %17 = arith.truncf %16 : vector<2x256xf32> to vector<2x256xbf16>
    %c0_14 = arith.constant 0 : index
    %c0_15 = arith.constant 0 : index
    %18 = vector.load %arg11[%c0_14, %c0_15] : memref<256x128xbf16, #tpu.memory_space<vmem>>, vector<256x128xbf16>
    %cst_16 = arith.constant dense<0.000000e+00> : vector<2x128xf32>
    %19 = tpu.matmul %17, %18, %cst_16 {dimension_numbers = #tpu.dot_dimension_numbers<[1], [0], [0], [1], [0, 0, 1, 1], [], []>} : vector<2x256xbf16>, vector<256x128xbf16>, vector<2x128xf32> -> vector<2x128xf32>
    %c0_17 = arith.constant 0 : index
    %c0_18 = arith.constant 0 : index
    %20 = vector.load %arg12[%c0_17, %c0_18] : memref<1x128xf32, #tpu.memory_space<vmem>>, vector<1x128xf32>
    %21 = vector.broadcast %20 : vector<1x128xf32> to vector<2x128xf32>
    %22 = arith.addf %19, %21 : vector<2x128xf32>
    %cst_19 = arith.constant 0.000000e+00 : f32
    %23 = vector.broadcast %cst_19 : f32 to vector<2x128xf32>
    %24 = arith.maximumf %22, %23 : vector<2x128xf32>
    %c0_20 = arith.constant 0 : index
    %c0_21 = arith.constant 0 : index
    %25 = vector.load %arg3[%c0_20, %c0_21] : memref<2x128xf32, #tpu.memory_space<vmem>>, vector<2x128xf32>
    %c0_22 = arith.constant 0 : index
    %c0_23 = arith.constant 0 : index
    %26 = vector.load %arg4[%c0_22, %c0_23] : memref<2x128xf32, #tpu.memory_space<vmem>>, vector<2x128xf32>
    %27 = tpu.concatenate %24, %25 in 1 : vector<2x128xf32>, vector<2x128xf32> -> vector<2x256xf32>
    %28 = arith.truncf %27 : vector<2x256xf32> to vector<2x256xbf16>
    %c0_24 = arith.constant 0 : index
    %c0_25 = arith.constant 0 : index
    %29 = vector.load %arg13[%c0_24, %c0_25] : memref<256x512xbf16, #tpu.memory_space<vmem>>, vector<256x512xbf16>
    %cst_26 = arith.constant dense<0.000000e+00> : vector<2x512xf32>
    %30 = tpu.matmul %28, %29, %cst_26 {dimension_numbers = #tpu.dot_dimension_numbers<[1], [0], [0], [1], [0, 0, 1, 1], [], []>} : vector<2x256xbf16>, vector<256x512xbf16>, vector<2x512xf32> -> vector<2x512xf32>
    %c0_27 = arith.constant 0 : index
    %c0_28 = arith.constant 0 : index
    %31 = vector.load %arg14[%c0_27, %c0_28] : memref<1x512xf32, #tpu.memory_space<vmem>>, vector<1x512xf32>
    %32 = vector.broadcast %31 : vector<1x512xf32> to vector<2x512xf32>
    %33 = arith.addf %30, %32 : vector<2x512xf32>
    %34 = vector.extract_strided_slice %33 {offsets = [0, 0], sizes = [2, 128], strides = [1, 1]} : vector<2x512xf32> to vector<2x128xf32>
    %35 = arith.negf %34 : vector<2x128xf32>
    %36 = math.exp %35 : vector<2x128xf32>
    %cst_29 = arith.constant 1.000000e+00 : f32
    %37 = vector.broadcast %cst_29 : f32 to vector<2x128xf32>
    %38 = arith.addf %37, %36 : vector<2x128xf32>
    %39 = arith.divf %37, %38 : vector<2x128xf32>
    %40 = vector.extract_strided_slice %33 {offsets = [0, 128], sizes = [2, 128], strides = [1, 1]} : vector<2x512xf32> to vector<2x128xf32>
    %41 = arith.negf %40 : vector<2x128xf32>
    %42 = math.exp %41 : vector<2x128xf32>
    %cst_30 = arith.constant 1.000000e+00 : f32
    %43 = vector.broadcast %cst_30 : f32 to vector<2x128xf32>
    %44 = arith.addf %43, %42 : vector<2x128xf32>
    %45 = arith.divf %43, %44 : vector<2x128xf32>
    %46 = vector.extract_strided_slice %33 {offsets = [0, 256], sizes = [2, 128], strides = [1, 1]} : vector<2x512xf32> to vector<2x128xf32>
    %47 = math.tanh %46 : vector<2x128xf32>
    %48 = vector.extract_strided_slice %33 {offsets = [0, 384], sizes = [2, 128], strides = [1, 1]} : vector<2x512xf32> to vector<2x128xf32>
    %49 = arith.negf %48 : vector<2x128xf32>
    %50 = math.exp %49 : vector<2x128xf32>
    %cst_31 = arith.constant 1.000000e+00 : f32
    %51 = vector.broadcast %cst_31 : f32 to vector<2x128xf32>
    %52 = arith.addf %51, %50 : vector<2x128xf32>
    %53 = arith.divf %51, %52 : vector<2x128xf32>
    %54 = arith.mulf %45, %26 : vector<2x128xf32>
    %55 = arith.mulf %39, %47 : vector<2x128xf32>
    %56 = arith.addf %54, %55 : vector<2x128xf32>
    %57 = math.tanh %56 : vector<2x128xf32>
    %58 = arith.mulf %53, %57 : vector<2x128xf32>
    %c0_32 = arith.constant 0 : index
    %c0_33 = arith.constant 0 : index
    %59 = vector.load %arg5[%c0_32, %c0_33] : memref<2x128xf32, #tpu.memory_space<vmem>>, vector<2x128xf32>
    %c0_34 = arith.constant 0 : index
    %c0_35 = arith.constant 0 : index
    %60 = vector.load %arg6[%c0_34, %c0_35] : memref<2x128xf32, #tpu.memory_space<vmem>>, vector<2x128xf32>
    %61 = tpu.concatenate %58, %59 in 1 : vector<2x128xf32>, vector<2x128xf32> -> vector<2x256xf32>
    %62 = arith.truncf %61 : vector<2x256xf32> to vector<2x256xbf16>
    %c0_36 = arith.constant 0 : index
    %c0_37 = arith.constant 0 : index
    %63 = vector.load %arg15[%c0_36, %c0_37] : memref<256x512xbf16, #tpu.memory_space<vmem>>, vector<256x512xbf16>
    %cst_38 = arith.constant dense<0.000000e+00> : vector<2x512xf32>
    %64 = tpu.matmul %62, %63, %cst_38 {dimension_numbers = #tpu.dot_dimension_numbers<[1], [0], [0], [1], [0, 0, 1, 1], [], []>} : vector<2x256xbf16>, vector<256x512xbf16>, vector<2x512xf32> -> vector<2x512xf32>
    %c0_39 = arith.constant 0 : index
    %c0_40 = arith.constant 0 : index
    %65 = vector.load %arg16[%c0_39, %c0_40] : memref<1x512xf32, #tpu.memory_space<vmem>>, vector<1x512xf32>
    %66 = vector.broadcast %65 : vector<1x512xf32> to vector<2x512xf32>
    %67 = arith.addf %64, %66 : vector<2x512xf32>
    %68 = vector.extract_strided_slice %67 {offsets = [0, 0], sizes = [2, 128], strides = [1, 1]} : vector<2x512xf32> to vector<2x128xf32>
    %69 = arith.negf %68 : vector<2x128xf32>
    %70 = math.exp %69 : vector<2x128xf32>
    %cst_41 = arith.constant 1.000000e+00 : f32
    %71 = vector.broadcast %cst_41 : f32 to vector<2x128xf32>
    %72 = arith.addf %71, %70 : vector<2x128xf32>
    %73 = arith.divf %71, %72 : vector<2x128xf32>
    %74 = vector.extract_strided_slice %67 {offsets = [0, 128], sizes = [2, 128], strides = [1, 1]} : vector<2x512xf32> to vector<2x128xf32>
    %75 = arith.negf %74 : vector<2x128xf32>
    %76 = math.exp %75 : vector<2x128xf32>
    %cst_42 = arith.constant 1.000000e+00 : f32
    %77 = vector.broadcast %cst_42 : f32 to vector<2x128xf32>
    %78 = arith.addf %77, %76 : vector<2x128xf32>
    %79 = arith.divf %77, %78 : vector<2x128xf32>
    %80 = vector.extract_strided_slice %67 {offsets = [0, 256], sizes = [2, 128], strides = [1, 1]} : vector<2x512xf32> to vector<2x128xf32>
    %81 = math.tanh %80 : vector<2x128xf32>
    %82 = vector.extract_strided_slice %67 {offsets = [0, 384], sizes = [2, 128], strides = [1, 1]} : vector<2x512xf32> to vector<2x128xf32>
    %83 = arith.negf %82 : vector<2x128xf32>
    %84 = math.exp %83 : vector<2x128xf32>
    %cst_43 = arith.constant 1.000000e+00 : f32
    %85 = vector.broadcast %cst_43 : f32 to vector<2x128xf32>
    %86 = arith.addf %85, %84 : vector<2x128xf32>
    %87 = arith.divf %85, %86 : vector<2x128xf32>
    %88 = arith.mulf %79, %60 : vector<2x128xf32>
    %89 = arith.mulf %73, %81 : vector<2x128xf32>
    %90 = arith.addf %88, %89 : vector<2x128xf32>
    %91 = math.tanh %90 : vector<2x128xf32>
    %92 = arith.mulf %87, %91 : vector<2x128xf32>
    %93 = tpu.concatenate %58, %92 in 1 : vector<2x128xf32>, vector<2x128xf32> -> vector<2x256xf32>
    %94 = arith.truncf %93 : vector<2x256xf32> to vector<2x256xbf16>
    %c0_44 = arith.constant 0 : index
    %c0_45 = arith.constant 0 : index
    %95 = vector.load %arg17[%c0_44, %c0_45] : memref<256x128xbf16, #tpu.memory_space<vmem>>, vector<256x128xbf16>
    %cst_46 = arith.constant dense<0.000000e+00> : vector<2x128xf32>
    %96 = tpu.matmul %94, %95, %cst_46 {dimension_numbers = #tpu.dot_dimension_numbers<[1], [0], [0], [1], [0, 0, 1, 1], [], []>} : vector<2x256xbf16>, vector<256x128xbf16>, vector<2x128xf32> -> vector<2x128xf32>
    %c0_47 = arith.constant 0 : index
    %c0_48 = arith.constant 0 : index
    %97 = vector.load %arg18[%c0_47, %c0_48] : memref<1x128xf32, #tpu.memory_space<vmem>>, vector<1x128xf32>
    %98 = vector.broadcast %97 : vector<1x128xf32> to vector<2x128xf32>
    %99 = arith.addf %96, %98 : vector<2x128xf32>
    %c0_49 = arith.constant 0 : index
    %c0_50 = arith.constant 0 : index
    %100 = vector.load %arg19[%c0_49, %c0_50] : memref<2x128xf32, #tpu.memory_space<vmem>>, vector<2x128xf32>
    tpu.vector_store %arg19[%c0_49, %c0_50], %58 {strides = array<i32>} : memref<2x128xf32, #tpu.memory_space<vmem>>, vector<2x128xf32>,
    %c0_51 = arith.constant 0 : index
    %c0_52 = arith.constant 0 : index
    %101 = vector.load %arg20[%c0_51, %c0_52] : memref<2x128xf32, #tpu.memory_space<vmem>>, vector<2x128xf32>
    tpu.vector_store %arg20[%c0_51, %c0_52], %56 {strides = array<i32>} : memref<2x128xf32, #tpu.memory_space<vmem>>, vector<2x128xf32>,
    %c0_53 = arith.constant 0 : index
    %c0_54 = arith.constant 0 : index
    %102 = vector.load %arg21[%c0_53, %c0_54] : memref<2x128xf32, #tpu.memory_space<vmem>>, vector<2x128xf32>
    tpu.vector_store %arg21[%c0_53, %c0_54], %92 {strides = array<i32>} : memref<2x128xf32, #tpu.memory_space<vmem>>, vector<2x128xf32>,
    %c0_55 = arith.constant 0 : index
    %c0_56 = arith.constant 0 : index
    %103 = vector.load %arg22[%c0_55, %c0_56] : memref<2x128xf32, #tpu.memory_space<vmem>>, vector<2x128xf32>
    tpu.vector_store %arg22[%c0_55, %c0_56], %90 {strides = array<i32>} : memref<2x128xf32, #tpu.memory_space<vmem>>, vector<2x128xf32>,
    %c0_57 = arith.constant 0 : index
    %c0_58 = arith.constant 0 : index
    %104 = vector.load %arg23[%c0_57, %c0_58] : memref<2x128xf32, #tpu.memory_space<vmem>>, vector<2x128xf32>
    tpu.vector_store %arg23[%c0_57, %c0_58], %99 {strides = array<i32>} : memref<2x128xf32, #tpu.memory_space<vmem>>, vector<2x128xf32>,
    return
  }
  func.func @transform_0(%arg0: i32) -> (i32, i32) {
    %c0_i32 = arith.constant 0 : i32
    %c0_i32_0 = arith.constant 0 : i32
    %c0_i32_1 = arith.constant 0 : i32
    return %c0_i32, %c0_i32_0 : i32, i32
  }
  func.func @transform_1(%arg0: i32) -> (i32, i32) {
    %c0_i32 = arith.constant 0 : i32
    %c0_i32_0 = arith.constant 0 : i32
    %c0_i32_1 = arith.constant 0 : i32
    return %c0_i32, %c0_i32_0 : i32, i32
  }
  func.func @transform_2(%arg0: i32) -> (i32, i32) {
    %c0_i32 = arith.constant 0 : i32
    %c0_i32_0 = arith.constant 0 : i32
    %c0_i32_1 = arith.constant 0 : i32
    return %c0_i32, %c0_i32_0 : i32, i32
  }
  func.func @transform_3(%arg0: i32) -> (i32, i32) {
    %c0_i32 = arith.constant 0 : i32
    %c0_i32_0 = arith.constant 0 : i32
    %c0_i32_1 = arith.constant 0 : i32
    return %c0_i32, %c0_i32_0 : i32, i32
  }
  func.func @transform_4(%arg0: i32) -> (i32, i32) {
    %c0_i32 = arith.constant 0 : i32
    %c0_i32_0 = arith.constant 0 : i32
    %c0_i32_1 = arith.constant 0 : i32
    return %c0_i32, %c0_i32_0 : i32, i32
  }
  func.func @transform_5(%arg0: i32) -> (i32, i32) {
    %c0_i32 = arith.constant 0 : i32
    %c0_i32_0 = arith.constant 0 : i32
    %c0_i32_1 = arith.constant 0 : i32
    return %c0_i32, %c0_i32_0 : i32, i32
  }
  func.func @transform_6(%arg0: i32) -> (i32, i32) {
    %c0_i32 = arith.constant 0 : i32
    %c0_i32_0 = arith.constant 0 : i32
    %c0_i32_1 = arith.constant 0 : i32
    return %c0_i32, %c0_i32_0 : i32, i32
  }
  func.func @transform_7(%arg0: i32) -> (i32, i32) {
    %c0_i32 = arith.constant 0 : i32
    %c0_i32_0 = arith.constant 0 : i32
    %c0_i32_1 = arith.constant 0 : i32
    return %c0_i32, %c0_i32_0 : i32, i32
  }
  func.func @transform_8(%arg0: i32) -> (i32, i32) {
    %c0_i32 = arith.constant 0 : i32
    %c0_i32_0 = arith.constant 0 : i32
    %c0_i32_1 = arith.constant 0 : i32
    return %c0_i32, %c0_i32_0 : i32, i32
  }
  func.func @transform_9(%arg0: i32) -> (i32, i32) {
    %c0_i32 = arith.constant 0 : i32
    %c0_i32_0 = arith.constant 0 : i32
    %c0_i32_1 = arith.constant 0 : i32
    return %c0_i32, %c0_i32_0 : i32, i32
  }
  func.func @transform_10(%arg0: i32) -> (i32, i32) {
    %c0_i32 = arith.constant 0 : i32
    %c0_i32_0 = arith.constant 0 : i32
    %c0_i32_1 = arith.constant 0 : i32
    return %c0_i32, %c0_i32_0 : i32, i32
  }
  func.func @transform_11(%arg0: i32) -> (i32, i32) {
    %c0_i32 = arith.constant 0 : i32
    %c0_i32_0 = arith.constant 0 : i32
    %c0_i32_1 = arith.constant 0 : i32
    return %c0_i32, %c0_i32_0 : i32, i32
  }
  func.func @transform_12(%arg0: i32) -> (i32, i32) {
    %c0_i32 = arith.constant 0 : i32
    %c0_i32_0 = arith.constant 0 : i32
    %c0_i32_1 = arith.constant 0 : i32
    return %c0_i32, %c0_i32_0 : i32, i32
  }
  func.func @transform_13(%arg0: i32) -> (i32, i32) {
    %c0_i32 = arith.constant 0 : i32
    %c0_i32_0 = arith.constant 0 : i32
    %c0_i32_1 = arith.constant 0 : i32
    return %c0_i32, %c0_i32_0 : i32, i32
  }
  func.func @transform_14(%arg0: i32) -> (i32, i32) {
    %c0_i32 = arith.constant 0 : i32
    %c0_i32_0 = arith.constant 0 : i32
    %c0_i32_1 = arith.constant 0 : i32
    return %c0_i32, %c0_i32_0 : i32, i32
  }
  func.func @transform_15(%arg0: i32) -> (i32, i32) {
    %c0_i32 = arith.constant 0 : i32
    %c0_i32_0 = arith.constant 0 : i32
    %c0_i32_1 = arith.constant 0 : i32
    return %c0_i32, %c0_i32_0 : i32, i32
  }
  func.func @transform_16(%arg0: i32) -> (i32, i32) {
    %c0_i32 = arith.constant 0 : i32
    %c0_i32_0 = arith.constant 0 : i32
    %c0_i32_1 = arith.constant 0 : i32
    return %c0_i32, %c0_i32_0 : i32, i32
  }
  func.func @transform_17(%arg0: i32) -> (i32, i32) {
    %c0_i32 = arith.constant 0 : i32
    %c0_i32_0 = arith.constant 0 : i32
    %c0_i32_1 = arith.constant 0 : i32
    return %c0_i32, %c0_i32_0 : i32, i32
  }
  func.func @transform_18(%arg0: i32) -> (i32, i32) {
    %c0_i32 = arith.constant 0 : i32
    %c0_i32_0 = arith.constant 0 : i32
    %c0_i32_1 = arith.constant 0 : i32
    return %c0_i32, %c0_i32_0 : i32, i32
  }
  func.func @transform_19(%arg0: i32) -> (i32, i32) {
    %c0_i32 = arith.constant 0 : i32
    %c0_i32_0 = arith.constant 0 : i32
    %c0_i32_1 = arith.constant 0 : i32
    return %c0_i32, %c0_i32_0 : i32, i32
  }
  func.func @transform_20(%arg0: i32) -> (i32, i32) {
    %c0_i32 = arith.constant 0 : i32
    %c0_i32_0 = arith.constant 0 : i32
    %c0_i32_1 = arith.constant 0 : i32
    return %c0_i32, %c0_i32_0 : i32, i32
  }
  func.func @transform_21(%arg0: i32) -> (i32, i32) {
    %c0_i32 = arith.constant 0 : i32
    %c0_i32_0 = arith.constant 0 : i32
    %c0_i32_1 = arith.constant 0 : i32
    return %c0_i32, %c0_i32_0 : i32, i32
  }
  func.func @transform_22(%arg0: i32) -> (i32, i32) {
    %c0_i32 = arith.constant 0 : i32
    %c0_i32_0 = arith.constant 0 : i32
    %c0_i32_1 = arith.constant 0 : i32
    return %c0_i32, %c0_i32_0 : i32, i32
  }
}

module attributes {stable_mosaic.version = 11 : i64} {
  func.func @_step_kernel(%arg0: i32, %arg1: memref<2x1792xbf16, #tpu.memory_space<vmem>>, %arg2: memref<2x2xf32, #tpu.memory_space<vmem>>, %arg3: memref<2x128xf32, #tpu.memory_space<vmem>>, %arg4: memref<2x128xf32, #tpu.memory_space<vmem>>, %arg5: memref<2x128xf32, #tpu.memory_space<vmem>>, %arg6: memref<2x128xf32, #tpu.memory_space<vmem>>, %arg7: memref<1792x128xbf16, #tpu.memory_space<vmem>>, %arg8: memref<1x128xf32, #tpu.memory_space<vmem>>, %arg9: memref<2x128xf32, #tpu.memory_space<vmem>>, %arg10: memref<1x128xf32, #tpu.memory_space<vmem>>, %arg11: memref<256x128xbf16, #tpu.memory_space<vmem>>, %arg12: memref<1x128xf32, #tpu.memory_space<vmem>>, %arg13: memref<256x512xbf16, #tpu.memory_space<vmem>>, %arg14: memref<1x512xf32, #tpu.memory_space<vmem>>, %arg15: memref<256x512xbf16, #tpu.memory_space<vmem>>, %arg16: memref<1x512xf32, #tpu.memory_space<vmem>>, %arg17: memref<256x128xbf16, #tpu.memory_space<vmem>>, %arg18: memref<1x128xf32, #tpu.memory_space<vmem>>, %arg19: memref<2x128xf32, #tpu.memory_space<vmem>>, %arg20: memref<2x128xf32, #tpu.memory_space<vmem>>, %arg21: memref<2x128xf32, #tpu.memory_space<vmem>>, %arg22: memref<2x128xf32, #tpu.memory_space<vmem>>, %arg23: memref<2x128xf32, #tpu.memory_space<vmem>>) attributes {dimension_semantics = [#tpu.dimension_semantics<arbitrary>], iteration_bounds = array<i64: 1>, scalar_prefetch = 0 : i64, scratch_operands = 0 : i64, tpu.core_type = #tpu.core_type<tc>, window_params = [{pipeline_mode = #tpu.pipeline_mode<synchronous>, transform_indices = @transform_0, window_bounds = array<i64: 2, 1792>}, {pipeline_mode = #tpu.pipeline_mode<synchronous>, transform_indices = @transform_1, window_bounds = array<i64: 2, 2>}, {pipeline_mode = #tpu.pipeline_mode<synchronous>, transform_indices = @transform_2, window_bounds = array<i64: 2, 128>}, {pipeline_mode = #tpu.pipeline_mode<synchronous>, transform_indices = @transform_3, window_bounds = array<i64: 2, 128>}, {pipeline_mode = #tpu.pipeline_mode<synchronous>, transform_indices = @transform_4, window_bounds = array<i64: 2, 128>}, {pipeline_mode = #tpu.pipeline_mode<synchronous>, transform_indices = @transform_5, window_bounds = array<i64: 2, 128>}, {pipeline_mode = #tpu.pipeline_mode<synchronous>, transform_indices = @transform_6, window_bounds = array<i64: 1792, 128>}, {pipeline_mode = #tpu.pipeline_mode<synchronous>, transform_indices = @transform_7, window_bounds = array<i64: 1, 128>}, {pipeline_mode = #tpu.pipeline_mode<synchronous>, transform_indices = @transform_8, window_bounds = array<i64: 2, 128>}, {pipeline_mode = #tpu.pipeline_mode<synchronous>, transform_indices = @transform_9, window_bounds = array<i64: 1, 128>}, {pipeline_mode = #tpu.pipeline_mode<synchronous>, transform_indices = @transform_10, window_bounds = array<i64: 256, 128>}, {pipeline_mode = #tpu.pipeline_mode<synchronous>, transform_indices = @transform_11, window_bounds = array<i64: 1, 128>}, {pipeline_mode = #tpu.pipeline_mode<synchronous>, transform_indices = @transform_12, window_bounds = array<i64: 256, 512>}, {pipeline_mode = #tpu.pipeline_mode<synchronous>, transform_indices = @transform_13, window_bounds = array<i64: 1, 512>}, {pipeline_mode = #tpu.pipeline_mode<synchronous>, transform_indices = @transform_14, window_bounds = array<i64: 256, 512>}, {pipeline_mode = #tpu.pipeline_mode<synchronous>, transform_indices = @transform_15, window_bounds = array<i64: 1, 512>}, {pipeline_mode = #tpu.pipeline_mode<synchronous>, transform_indices = @transform_16, window_bounds = array<i64: 256, 128>}, {pipeline_mode = #tpu.pipeline_mode<synchronous>, transform_indices = @transform_17, window_bounds = array<i64: 1, 128>}, {pipeline_mode = #tpu.pipeline_mode<synchronous>, transform_indices = @transform_18, window_bounds = array<i64: 2, 128>}, {pipeline_mode = #tpu.pipeline_mode<synchronous>, transform_indices = @transform_19, window_bounds = array<i64: 2, 128>}, {pipeline_mode = #tpu.pipeline_mode<synchronous>, transform_indices = @transform_20, window_bounds = array<i64: 2, 128>}, {pipeline_mode = #tpu.pipeline_mode<synchronous>, transform_indices = @transform_21, window_bounds = array<i64: 2, 128>}, {pipeline_mode = #tpu.pipeline_mode<synchronous>, transform_indices = @transform_22, window_bounds = array<i64: 2, 128>}]} {
    %c0 = arith.constant 0 : index
    %c0_0 = arith.constant 0 : index
    %0 = vector.load %arg1[%c0, %c0_0] : memref<2x1792xbf16, #tpu.memory_space<vmem>>, vector<2x1792xbf16>
    %c0_1 = arith.constant 0 : index
    %c0_2 = arith.constant 0 : index
    %1 = vector.load %arg7[%c0_1, %c0_2] : memref<1792x128xbf16, #tpu.memory_space<vmem>>, vector<1792x128xbf16>
    %cst = arith.constant dense<0.000000e+00> : vector<2x128xf32>
    %2 = tpu.matmul %0, %1, %cst {dimension_numbers = #tpu.dot_dimension_numbers<[1], [0], [0], [1], [0, 0, 1, 1], [], []>} : vector<2x1792xbf16>, vector<1792x128xbf16>, vector<2x128xf32> -> vector<2x128xf32>
    %c0_3 = arith.constant 0 : index
    %c0_4 = arith.constant 0 : index
    %3 = vector.load %arg8[%c0_3, %c0_4] : memref<1x128xf32, #tpu.memory_space<vmem>>, vector<1x128xf32>
    %4 = vector.broadcast %3 : vector<1x128xf32> to vector<2x128xf32>
    %5 = arith.addf %2, %4 : vector<2x128xf32>
    %cst_5 = arith.constant 0.000000e+00 : f32
    %6 = vector.broadcast %cst_5 : f32 to vector<2x128xf32>
    %7 = arith.maximumf %5, %6 : vector<2x128xf32>
    %c0_6 = arith.constant 0 : index
    %c0_7 = arith.constant 0 : index
    %8 = vector.load %arg2[%c0_6, %c0_7] : memref<2x2xf32, #tpu.memory_space<vmem>>, vector<2x2xf32>
    %c0_8 = arith.constant 0 : index
    %c0_9 = arith.constant 0 : index
    %9 = vector.load %arg9[%c0_8, %c0_9] : memref<2x128xf32, #tpu.memory_space<vmem>>, vector<2x128xf32>
    %cst_10 = arith.constant dense<0.000000e+00> : vector<2x128xf32>
    %10 = tpu.matmul %8, %9, %cst_10 {dimension_numbers = #tpu.dot_dimension_numbers<[1], [0], [0], [1], [0, 0, 1, 1], [], []>} : vector<2x2xf32>, vector<2x128xf32>, vector<2x128xf32> -> vector<2x128xf32>
    %c0_11 = arith.constant 0 : index
    %c0_12 = arith.constant 0 : index
    %11 = vector.load %arg10[%c0_11, %c0_12] : memref<1x128xf32, #tpu.memory_space<vmem>>, vector<1x128xf32>
    %12 = vector.broadcast %11 : vector<1x128xf32> to vector<2x128xf32>
    %13 = arith.addf %10, %12 : vector<2x128xf32>
    %cst_13 = arith.constant 0.000000e+00 : f32
    %14 = vector.broadcast %cst_13 : f32 to vector<2x128xf32>
    %15 = arith.maximumf %13, %14 : vector<2x128xf32>
    %16 = tpu.concatenate %7, %15 in 1 : vector<2x128xf32>, vector<2x128xf32> -> vector<2x256xf32>
    %17 = arith.truncf %16 : vector<2x256xf32> to vector<2x256xbf16>
    %c0_14 = arith.constant 0 : index
    %c0_15 = arith.constant 0 : index
    %18 = vector.load %arg11[%c0_14, %c0_15] : memref<256x128xbf16, #tpu.memory_space<vmem>>, vector<256x128xbf16>
    %cst_16 = arith.constant dense<0.000000e+00> : vector<2x128xf32>
    %19 = tpu.matmul %17, %18, %cst_16 {dimension_numbers = #tpu.dot_dimension_numbers<[1], [0], [0], [1], [0, 0, 1, 1], [], []>} : vector<2x256xbf16>, vector<256x128xbf16>, vector<2x128xf32> -> vector<2x128xf32>
    %c0_17 = arith.constant 0 : index
    %c0_18 = arith.constant 0 : index
    %20 = vector.load %arg12[%c0_17, %c0_18] : memref<1x128xf32, #tpu.memory_space<vmem>>, vector<1x128xf32>
    %21 = vector.broadcast %20 : vector<1x128xf32> to vector<2x128xf32>
    %22 = arith.addf %19, %21 : vector<2x128xf32>
    %cst_19 = arith.constant 0.000000e+00 : f32
    %23 = vector.broadcast %cst_19 : f32 to vector<2x128xf32>
    %24 = arith.maximumf %22, %23 : vector<2x128xf32>
    %c0_20 = arith.constant 0 : index
    %c0_21 = arith.constant 0 : index
    %25 = vector.load %arg3[%c0_20, %c0_21] : memref<2x128xf32, #tpu.memory_space<vmem>>, vector<2x128xf32>
    %c0_22 = arith.constant 0 : index
    %c0_23 = arith.constant 0 : index
    %26 = vector.load %arg4[%c0_22, %c0_23] : memref<2x128xf32, #tpu.memory_space<vmem>>, vector<2x128xf32>
    %27 = tpu.concatenate %24, %25 in 1 : vector<2x128xf32>, vector<2x128xf32> -> vector<2x256xf32>
    %28 = arith.truncf %27 : vector<2x256xf32> to vector<2x256xbf16>
    %c0_24 = arith.constant 0 : index
    %c0_25 = arith.constant 0 : index
    %29 = vector.load %arg13[%c0_24, %c0_25] : memref<256x512xbf16, #tpu.memory_space<vmem>>, vector<256x512xbf16>
    %cst_26 = arith.constant dense<0.000000e+00> : vector<2x512xf32>
    %30 = tpu.matmul %28, %29, %cst_26 {dimension_numbers = #tpu.dot_dimension_numbers<[1], [0], [0], [1], [0, 0, 1, 1], [], []>} : vector<2x256xbf16>, vector<256x512xbf16>, vector<2x512xf32> -> vector<2x512xf32>
    %c0_27 = arith.constant 0 : index
    %c0_28 = arith.constant 0 : index
    %31 = vector.load %arg14[%c0_27, %c0_28] : memref<1x512xf32, #tpu.memory_space<vmem>>, vector<1x512xf32>
    %32 = vector.broadcast %31 : vector<1x512xf32> to vector<2x512xf32>
    %33 = arith.addf %30, %32 : vector<2x512xf32>
    %34 = vector.extract_strided_slice %33 {offsets = [0, 0], sizes = [2, 128], strides = [1, 1]} : vector<2x512xf32> to vector<2x128xf32>
    %35 = arith.negf %34 : vector<2x128xf32>
    %36 = math.exp %35 : vector<2x128xf32>
    %cst_29 = arith.constant 1.000000e+00 : f32
    %37 = vector.broadcast %cst_29 : f32 to vector<2x128xf32>
    %38 = arith.addf %37, %36 : vector<2x128xf32>
    %39 = arith.divf %37, %38 : vector<2x128xf32>
    %40 = vector.extract_strided_slice %33 {offsets = [0, 128], sizes = [2, 128], strides = [1, 1]} : vector<2x512xf32> to vector<2x128xf32>
    %41 = arith.negf %40 : vector<2x128xf32>
    %42 = math.exp %41 : vector<2x128xf32>
    %cst_30 = arith.constant 1.000000e+00 : f32
    %43 = vector.broadcast %cst_30 : f32 to vector<2x128xf32>
    %44 = arith.addf %43, %42 : vector<2x128xf32>
    %45 = arith.divf %43, %44 : vector<2x128xf32>
    %46 = vector.extract_strided_slice %33 {offsets = [0, 256], sizes = [2, 128], strides = [1, 1]} : vector<2x512xf32> to vector<2x128xf32>
    %47 = math.tanh %46 : vector<2x128xf32>
    %48 = vector.extract_strided_slice %33 {offsets = [0, 384], sizes = [2, 128], strides = [1, 1]} : vector<2x512xf32> to vector<2x128xf32>
    %49 = arith.negf %48 : vector<2x128xf32>
    %50 = math.exp %49 : vector<2x128xf32>
    %cst_31 = arith.constant 1.000000e+00 : f32
    %51 = vector.broadcast %cst_31 : f32 to vector<2x128xf32>
    %52 = arith.addf %51, %50 : vector<2x128xf32>
    %53 = arith.divf %51, %52 : vector<2x128xf32>
    %54 = arith.mulf %45, %26 : vector<2x128xf32>
    %55 = arith.mulf %39, %47 : vector<2x128xf32>
    %56 = arith.addf %54, %55 : vector<2x128xf32>
    %57 = math.tanh %56 : vector<2x128xf32>
    %58 = arith.mulf %53, %57 : vector<2x128xf32>
    %c0_32 = arith.constant 0 : index
    %c0_33 = arith.constant 0 : index
    %59 = vector.load %arg5[%c0_32, %c0_33] : memref<2x128xf32, #tpu.memory_space<vmem>>, vector<2x128xf32>
    %c0_34 = arith.constant 0 : index
    %c0_35 = arith.constant 0 : index
    %60 = vector.load %arg6[%c0_34, %c0_35] : memref<2x128xf32, #tpu.memory_space<vmem>>, vector<2x128xf32>
    %61 = tpu.concatenate %58, %59 in 1 : vector<2x128xf32>, vector<2x128xf32> -> vector<2x256xf32>
    %62 = arith.truncf %61 : vector<2x256xf32> to vector<2x256xbf16>
    %c0_36 = arith.constant 0 : index
    %c0_37 = arith.constant 0 : index
    %63 = vector.load %arg15[%c0_36, %c0_37] : memref<256x512xbf16, #tpu.memory_space<vmem>>, vector<256x512xbf16>
    %cst_38 = arith.constant dense<0.000000e+00> : vector<2x512xf32>
    %64 = tpu.matmul %62, %63, %cst_38 {dimension_numbers = #tpu.dot_dimension_numbers<[1], [0], [0], [1], [0, 0, 1, 1], [], []>} : vector<2x256xbf16>, vector<256x512xbf16>, vector<2x512xf32> -> vector<2x512xf32>
    %c0_39 = arith.constant 0 : index
    %c0_40 = arith.constant 0 : index
    %65 = vector.load %arg16[%c0_39, %c0_40] : memref<1x512xf32, #tpu.memory_space<vmem>>, vector<1x512xf32>
    %66 = vector.broadcast %65 : vector<1x512xf32> to vector<2x512xf32>
    %67 = arith.addf %64, %66 : vector<2x512xf32>
    %68 = vector.extract_strided_slice %67 {offsets = [0, 0], sizes = [2, 128], strides = [1, 1]} : vector<2x512xf32> to vector<2x128xf32>
    %69 = arith.negf %68 : vector<2x128xf32>
    %70 = math.exp %69 : vector<2x128xf32>
    %cst_41 = arith.constant 1.000000e+00 : f32
    %71 = vector.broadcast %cst_41 : f32 to vector<2x128xf32>
    %72 = arith.addf %71, %70 : vector<2x128xf32>
    %73 = arith.divf %71, %72 : vector<2x128xf32>
    %74 = vector.extract_strided_slice %67 {offsets = [0, 128], sizes = [2, 128], strides = [1, 1]} : vector<2x512xf32> to vector<2x128xf32>
    %75 = arith.negf %74 : vector<2x128xf32>
    %76 = math.exp %75 : vector<2x128xf32>
    %cst_42 = arith.constant 1.000000e+00 : f32
    %77 = vector.broadcast %cst_42 : f32 to vector<2x128xf32>
    %78 = arith.addf %77, %76 : vector<2x128xf32>
    %79 = arith.divf %77, %78 : vector<2x128xf32>
    %80 = vector.extract_strided_slice %67 {offsets = [0, 256], sizes = [2, 128], strides = [1, 1]} : vector<2x512xf32> to vector<2x128xf32>
    %81 = math.tanh %80 : vector<2x128xf32>
    %82 = vector.extract_strided_slice %67 {offsets = [0, 384], sizes = [2, 128], strides = [1, 1]} : vector<2x512xf32> to vector<2x128xf32>
    %83 = arith.negf %82 : vector<2x128xf32>
    %84 = math.exp %83 : vector<2x128xf32>
    %cst_43 = arith.constant 1.000000e+00 : f32
    %85 = vector.broadcast %cst_43 : f32 to vector<2x128xf32>
    %86 = arith.addf %85, %84 : vector<2x128xf32>
    %87 = arith.divf %85, %86 : vector<2x128xf32>
    %88 = arith.mulf %79, %60 : vector<2x128xf32>
    %89 = arith.mulf %73, %81 : vector<2x128xf32>
    %90 = arith.addf %88, %89 : vector<2x128xf32>
    %91 = math.tanh %90 : vector<2x128xf32>
    %92 = arith.mulf %87, %91 : vector<2x128xf32>
    %93 = tpu.concatenate %58, %92 in 1 : vector<2x128xf32>, vector<2x128xf32> -> vector<2x256xf32>
    %94 = arith.truncf %93 : vector<2x256xf32> to vector<2x256xbf16>
    %c0_44 = arith.constant 0 : index
    %c0_45 = arith.constant 0 : index
    %95 = vector.load %arg17[%c0_44, %c0_45] : memref<256x128xbf16, #tpu.memory_space<vmem>>, vector<256x128xbf16>
    %cst_46 = arith.constant dense<0.000000e+00> : vector<2x128xf32>
    %96 = tpu.matmul %94, %95, %cst_46 {dimension_numbers = #tpu.dot_dimension_numbers<[1], [0], [0], [1], [0, 0, 1, 1], [], []>} : vector<2x256xbf16>, vector<256x128xbf16>, vector<2x128xf32> -> vector<2x128xf32>
    %c0_47 = arith.constant 0 : index
    %c0_48 = arith.constant 0 : index
    %97 = vector.load %arg18[%c0_47, %c0_48] : memref<1x128xf32, #tpu.memory_space<vmem>>, vector<1x128xf32>
    %98 = vector.broadcast %97 : vector<1x128xf32> to vector<2x128xf32>
    %99 = arith.addf %96, %98 : vector<2x128xf32>
    %c0_49 = arith.constant 0 : index
    %c0_50 = arith.constant 0 : index
    %100 = vector.load %arg19[%c0_49, %c0_50] : memref<2x128xf32, #tpu.memory_space<vmem>>, vector<2x128xf32>
    tpu.vector_store %arg19[%c0_49, %c0_50], %58 {strides = array<i32>} : memref<2x128xf32, #tpu.memory_space<vmem>>, vector<2x128xf32>,
    %c0_51 = arith.constant 0 : index
    %c0_52 = arith.constant 0 : index
    %101 = vector.load %arg20[%c0_51, %c0_52] : memref<2x128xf32, #tpu.memory_space<vmem>>, vector<2x128xf32>
    tpu.vector_store %arg20[%c0_51, %c0_52], %56 {strides = array<i32>} : memref<2x128xf32, #tpu.memory_space<vmem>>, vector<2x128xf32>,
    %c0_53 = arith.constant 0 : index
    %c0_54 = arith.constant 0 : index
    %102 = vector.load %arg21[%c0_53, %c0_54] : memref<2x128xf32, #tpu.memory_space<vmem>>, vector<2x128xf32>
    tpu.vector_store %arg21[%c0_53, %c0_54], %92 {strides = array<i32>} : memref<2x128xf32, #tpu.memory_space<vmem>>, vector<2x128xf32>,
    %c0_55 = arith.constant 0 : index
    %c0_56 = arith.constant 0 : index
    %103 = vector.load %arg22[%c0_55, %c0_56] : memref<2x128xf32, #tpu.memory_space<vmem>>, vector<2x128xf32>
    tpu.vector_store %arg22[%c0_55, %c0_56], %90 {strides = array<i32>} : memref<2x128xf32, #tpu.memory_space<vmem>>, vector<2x128xf32>,
    %c0_57 = arith.constant 0 : index
    %c0_58 = arith.constant 0 : index
    %104 = vector.load %arg23[%c0_57, %c0_58] : memref<2x128xf32, #tpu.memory_space<vmem>>, vector<2x128xf32>
    tpu.vector_store %arg23[%c0_57, %c0_58], %99 {strides = array<i32>} : memref<2x128xf32, #tpu.memory_space<vmem>>, vector<2x128xf32>,
    return
  }
  func.func @transform_0(%arg0: i32) -> (i32, i32) {
    %c0_i32 = arith.constant 0 : i32
    %c0_i32_0 = arith.constant 0 : i32
    %c0_i32_1 = arith.constant 0 : i32
    return %c0_i32, %c0_i32_0 : i32, i32
  }
  func.func @transform_1(%arg0: i32) -> (i32, i32) {
    %c0_i32 = arith.constant 0 : i32
    %c0_i32_0 = arith.constant 0 : i32
    %c0_i32_1 = arith.constant 0 : i32
    return %c0_i32, %c0_i32_0 : i32, i32
  }
  func.func @transform_2(%arg0: i32) -> (i32, i32) {
    %c0_i32 = arith.constant 0 : i32
    %c0_i32_0 = arith.constant 0 : i32
    %c0_i32_1 = arith.constant 0 : i32
    return %c0_i32, %c0_i32_0 : i32, i32
  }
  func.func @transform_3(%arg0: i32) -> (i32, i32) {
    %c0_i32 = arith.constant 0 : i32
    %c0_i32_0 = arith.constant 0 : i32
    %c0_i32_1 = arith.constant 0 : i32
    return %c0_i32, %c0_i32_0 : i32, i32
  }
  func.func @transform_4(%arg0: i32) -> (i32, i32) {
    %c0_i32 = arith.constant 0 : i32
    %c0_i32_0 = arith.constant 0 : i32
    %c0_i32_1 = arith.constant 0 : i32
    return %c0_i32, %c0_i32_0 : i32, i32
  }
  func.func @transform_5(%arg0: i32) -> (i32, i32) {
    %c0_i32 = arith.constant 0 : i32
    %c0_i32_0 = arith.constant 0 : i32
    %c0_i32_1 = arith.constant 0 : i32
    return %c0_i32, %c0_i32_0 : i32, i32
  }
  func.func @transform_6(%arg0: i32) -> (i32, i32) {
    %c0_i32 = arith.constant 0 : i32
    %c0_i32_0 = arith.constant 0 : i32
    %c0_i32_1 = arith.constant 0 : i32
    return %c0_i32, %c0_i32_0 : i32, i32
  }
  func.func @transform_7(%arg0: i32) -> (i32, i32) {
    %c0_i32 = arith.constant 0 : i32
    %c0_i32_0 = arith.constant 0 : i32
    %c0_i32_1 = arith.constant 0 : i32
    return %c0_i32, %c0_i32_0 : i32, i32
  }
  func.func @transform_8(%arg0: i32) -> (i32, i32) {
    %c0_i32 = arith.constant 0 : i32
    %c0_i32_0 = arith.constant 0 : i32
    %c0_i32_1 = arith.constant 0 : i32
    return %c0_i32, %c0_i32_0 : i32, i32
  }
  func.func @transform_9(%arg0: i32) -> (i32, i32) {
    %c0_i32 = arith.constant 0 : i32
    %c0_i32_0 = arith.constant 0 : i32
    %c0_i32_1 = arith.constant 0 : i32
    return %c0_i32, %c0_i32_0 : i32, i32
  }
  func.func @transform_10(%arg0: i32) -> (i32, i32) {
    %c0_i32 = arith.constant 0 : i32
    %c0_i32_0 = arith.constant 0 : i32
    %c0_i32_1 = arith.constant 0 : i32
    return %c0_i32, %c0_i32_0 : i32, i32
  }
  func.func @transform_11(%arg0: i32) -> (i32, i32) {
    %c0_i32 = arith.constant 0 : i32
    %c0_i32_0 = arith.constant 0 : i32
    %c0_i32_1 = arith.constant 0 : i32
    return %c0_i32, %c0_i32_0 : i32, i32
  }
  func.func @transform_12(%arg0: i32) -> (i32, i32) {
    %c0_i32 = arith.constant 0 : i32
    %c0_i32_0 = arith.constant 0 : i32
    %c0_i32_1 = arith.constant 0 : i32
    return %c0_i32, %c0_i32_0 : i32, i32
  }
  func.func @transform_13(%arg0: i32) -> (i32, i32) {
    %c0_i32 = arith.constant 0 : i32
    %c0_i32_0 = arith.constant 0 : i32
    %c0_i32_1 = arith.constant 0 : i32
    return %c0_i32, %c0_i32_0 : i32, i32
  }
  func.func @transform_14(%arg0: i32) -> (i32, i32) {
    %c0_i32 = arith.constant 0 : i32
    %c0_i32_0 = arith.constant 0 : i32
    %c0_i32_1 = arith.constant 0 : i32
    return %c0_i32, %c0_i32_0 : i32, i32
  }
  func.func @transform_15(%arg0: i32) -> (i32, i32) {
    %c0_i32 = arith.constant 0 : i32
    %c0_i32_0 = arith.constant 0 : i32
    %c0_i32_1 = arith.constant 0 : i32
    return %c0_i32, %c0_i32_0 : i32, i32
  }
  func.func @transform_16(%arg0: i32) -> (i32, i32) {
    %c0_i32 = arith.constant 0 : i32
    %c0_i32_0 = arith.constant 0 : i32
    %c0_i32_1 = arith.constant 0 : i32
    return %c0_i32, %c0_i32_0 : i32, i32
  }
  func.func @transform_17(%arg0: i32) -> (i32, i32) {
    %c0_i32 = arith.constant 0 : i32
    %c0_i32_0 = arith.constant 0 : i32
    %c0_i32_1 = arith.constant 0 : i32
    return %c0_i32, %c0_i32_0 : i32, i32
  }
  func.func @transform_18(%arg0: i32) -> (i32, i32) {
    %c0_i32 = arith.constant 0 : i32
    %c0_i32_0 = arith.constant 0 : i32
    %c0_i32_1 = arith.constant 0 : i32
    return %c0_i32, %c0_i32_0 : i32, i32
  }
  func.func @transform_19(%arg0: i32) -> (i32, i32) {
    %c0_i32 = arith.constant 0 : i32
    %c0_i32_0 = arith.constant 0 : i32
    %c0_i32_1 = arith.constant 0 : i32
    return %c0_i32, %c0_i32_0 : i32, i32
  }
  func.func @transform_20(%arg0: i32) -> (i32, i32) {
    %c0_i32 = arith.constant 0 : i32
    %c0_i32_0 = arith.constant 0 : i32
    %c0_i32_1 = arith.constant 0 : i32
    return %c0_i32, %c0_i32_0 : i32, i32
  }
  func.func @transform_21(%arg0: i32) -> (i32, i32) {
    %c0_i32 = arith.constant 0 : i32
    %c0_i32_0 = arith.constant 0 : i32
    %c0_i32_1 = arith.constant 0 : i32
    return %c0_i32, %c0_i32_0 : i32, i32
  }
  func.func @transform_22(%arg0: i32) -> (i32, i32) {
    %c0_i32 = arith.constant 0 : i32
    %c0_i32_0 = arith.constant 0 : i32
    %c0_i32_1 = arith.constant 0 : i32
    return %c0_i32, %c0_i32_0 : i32, i32
  }
}

</mosaic_0001>

<llo_original>
// kernel: gdram_forward.9
$region0: #{gdram_forward.9}
  #allocation0 [shape = 'u32[]', space=smem, size = 0x4, offset = 0x4, fixed_abs, tag = 'smem constant byte address 0x4 - core index']
  #allocation1 [shape = 'u32[144,128]{1,0:T(1,128)}', space=vmem, size = 0x12000, scoped, tag = 'internal scratch']
  %s0 = inlined_call_operand.vmem [shape: bf16[2,512], index: 0, kind: input, shape index: {}]
  %s1 = inlined_call_operand.vmem [shape: bf16[512,128], index: 1, kind: input, shape index: {}]
  %s2 = inlined_call_operand.vmem [shape: f32[1,128], index: 2, kind: input, shape index: {}]
  %s3 = inlined_call_operand.vmem [shape: bf16[128,128], index: 3, kind: input, shape index: {}]
  %s4 = inlined_call_operand.vmem [shape: f32[1,128], index: 4, kind: input, shape index: {}]
  %s5 = inlined_call_operand.vmem [shape: f32[2,128], index: 5, kind: output, shape index: {0}]
  %s6 = inlined_call_operand.vmem [shape: f32[2,128], index: 6, kind: output, shape index: {1}]
  %7 = xla_tuple %s5, %s6
  %s8 = sld [smem:[#allocation0]]
  $region38: #{gdram_forward.9} parent=0
    _
  %s10 = ssub.s32 1, %s8
  %s11 = scalar_select 0, %s10, %s8
  // Predicated region
  $region2: #{gdram_forward.9} parent=0 // pred_check
    _
  $region3: #{gdram_forward.9} parent=0 // pred_check_branch
    %13 = sbr.rel (0) target = $region5
  $region4: #{gdram_forward.9} parent=0 // pred_region
    _
  $region5: #{gdram_forward.9} parent=0 // pred_fallthru
    _
  // Predicated region
  $region6: #{gdram_forward.9} parent=0 // pred_check
    _
  $region7: #{gdram_forward.9} parent=0 // pred_check_branch
    %15 = sbr.rel (0) target = $region9
  $region8: #{gdram_forward.9} parent=0 // pred_region
    _
  $region9: #{gdram_forward.9} parent=0 // pred_fallthru
    _
  // Predicated region
  $region10: #{gdram_forward.9} parent=0 // pred_check
    _
  $region11: #{gdram_forward.9} parent=0 // pred_check_branch
    %17 = sbr.rel (0) target = $region13
  $region12: #{gdram_forward.9} parent=0 // pred_region
    _
  $region13: #{gdram_forward.9} parent=0 // pred_fallthru
    _
  // Predicated region
  $region14: #{gdram_forward.9} parent=0 // pred_check
    _
  $region15: #{gdram_forward.9} parent=0 // pred_check_branch
    %19 = sbr.rel (0) target = $region17
  $region16: #{gdram_forward.9} parent=0 // pred_region
    _
  $region17: #{gdram_forward.9} parent=0 // pred_fallthru
    _
  // Predicated region
  $region18: #{gdram_forward.9} parent=0 // pred_check
    _
  $region19: #{gdram_forward.9} parent=0 // pred_check_branch
    %21 = sbr.rel (0) target = $region21
  $region20: #{gdram_forward.9} parent=0 // pred_region
    _
  $region21: #{gdram_forward.9} parent=0 // pred_fallthru
    _
  %v23 = vld [vmem:[%s0] sm:$0xf]
  %v24 = vld [vmem:[%s1] sm:$0xf]
  %v25 = vld [vmem:[%s1 + $0x4] sm:$0xf]
  %v26 = vld [vmem:[%s1 + $0x8] sm:$0xf]
  %v27 = vld [vmem:[%s1 + $0xc] sm:$0xf]
  %v28 = vld [vmem:[%s1 + $0x10] sm:$0xf]
  %v29 = vld [vmem:[%s1 + $0x14] sm:$0xf]
  %v30 = vld [vmem:[%s1 + $0x18] sm:$0xf]
  %v31 = vld [vmem:[%s1 + $0x1c] sm:$0xf]
  %v32 = vld [vmem:[%s1 + $0x20] sm:$0xf]
  %v33 = vld [vmem:[%s1 + $0x24] sm:$0xf]
  %v34 = vld [vmem:[%s1 + $0x28] sm:$0xf]
  %v35 = vld [vmem:[%s1 + $0x2c] sm:$0xf]
  %v36 = vld [vmem:[%s1 + $0x30] sm:$0xf]
  %v37 = vld [vmem:[%s1 + $0x34] sm:$0xf]
  %v38 = vld [vmem:[%s1 + $0x38] sm:$0xf]
  %v39 = vld [vmem:[%s1 + $0x3c] sm:$0xf]
  %v40 = vld [vmem:[%s1 + $0x40] sm:$0xf]
  %v41 = vld [vmem:[%s1 + $0x44] sm:$0xf]
  %v42 = vld [vmem:[%s1 + $0x48] sm:$0xf]
  %v43 = vld [vmem:[%s1 + $0x4c] sm:$0xf]
  %v44 = vld [vmem:[%s1 + $0x50] sm:$0xf]
  %v45 = vld [vmem:[%s1 + $0x54] sm:$0xf]
  %v46 = vld [vmem:[%s1 + $0x58] sm:$0xf]
  %v47 = vld [vmem:[%s1 + $0x5c] sm:$0xf]
  %v48 = vld [vmem:[%s1 + $0x60] sm:$0xf]
  %v49 = vld [vmem:[%s1 + $0x64] sm:$0xf]
  %v50 = vld [vmem:[%s1 + $0x68] sm:$0xf]
  %v51 = vld [vmem:[%s1 + $0x6c] sm:$0xf]
  %v52 = vld [vmem:[%s1 + $0x70] sm:$0xf]
  %v53 = vld [vmem:[%s1 + $0x74] sm:$0xf]
  %v54 = vld [vmem:[%s1 + $0x78] sm:$0xf]
  %v55 = vld [vmem:[%s1 + $0x7c] sm:$0xf]
  %v56 = vld [vmem:[%s1 + $0x80] sm:$0xf]
  %v57 = vld [vmem:[%s1 + $0x84] sm:$0xf]
  %v58 = vld [vmem:[%s1 + $0x88] sm:$0xf]
  %v59 = vld [vmem:[%s1 + $0x8c] sm:$0xf]
  %v60 = vld [vmem:[%s1 + $0x90] sm:$0xf]
  %v61 = vld [vmem:[%s1 + $0x94] sm:$0xf]
  %v62 = vld [vmem:[%s1 + $0x98] sm:$0xf]
  %v63 = vld [vmem:[%s1 + $0x9c] sm:$0xf]
  %v64 = vld [vmem:[%s1 + $0xa0] sm:$0xf]
  %v65 = vld [vmem:[%s1 + $0xa4] sm:$0xf]
  %v66 = vld [vmem:[%s1 + $0xa8] sm:$0xf]
  %v67 = vld [vmem:[%s1 + $0xac] sm:$0xf]
  %v68 = vld [vmem:[%s1 + $0xb0] sm:$0xf]
  %v69 = vld [vmem:[%s1 + $0xb4] sm:$0xf]
  %v70 = vld [vmem:[%s1 + $0xb8] sm:$0xf]
  %v71 = vld [vmem:[%s1 + $0xbc] sm:$0xf]
  %v72 = vld [vmem:[%s1 + $0xc0] sm:$0xf]
  %v73 = vld [vmem:[%s1 + $0xc4] sm:$0xf]
  %v74 = vld [vmem:[%s1 + $0xc8] sm:$0xf]
  %v75 = vld [vmem:[%s1 + $0xcc] sm:$0xf]
  %v76 = vld [vmem:[%s1 + $0xd0] sm:$0xf]
  %v77 = vld [vmem:[%s1 + $0xd4] sm:$0xf]
  %v78 = vld [vmem:[%s1 + $0xd8] sm:$0xf]
  %v79 = vld [vmem:[%s1 + $0xdc] sm:$0xf]
  %v80 = vld [vmem:[%s1 + $0xe0] sm:$0xf]
  %v81 = vld [vmem:[%s1 + $0xe4] sm:$0xf]
  %v82 = vld [vmem:[%s1 + $0xe8] sm:$0xf]
  %v83 = vld [vmem:[%s1 + $0xec] sm:$0xf]
  %v84 = vld [vmem:[%s1 + $0xf0] sm:$0xf]
  %v85 = vld [vmem:[%s1 + $0xf4] sm:$0xf]
  %v86 = vld [vmem:[%s1 + $0xf8] sm:$0xf]
  %v87 = vld [vmem:[%s1 + $0xfc] sm:$0xf]
  %v88 = vld [vmem:[%s2] sm:$0x1]
  %v90 = vlaneseq
  %v91 = vshrl.u32 %v90, 7
  %v92 = vsub.s32 0, %v91
  %v93 = vrot.slane %v88, %v92
  %v97 = vunpack.c.l.s4 1966171168
  %v98 = vunpack.c.0.s8 %v97
  %v99 = vlaneseq
  %v100 = vshrl.u32 %v99, 7
  %v101 = vsub.s32 %v98, %v100
  %v102 = vrot.slane %v23, %v101
  %v103 = vcombine.high %v102, %v102
  %v105 = vunpack.c.l.s4 1966171168
  %v106 = vunpack.c.0.s8 %v105
  %v107 = vlaneseq
  %v108 = vshrl.u32 %v107, 7
  %v109 = vsub.s32 %v106, %v108
  %v110 = vrot.slane %v102, %v109
  %v112 = vunpack.c.l.s4 1966171168
  %v113 = vunpack.c.0.s8 %v112
  %v114 = vlaneseq
  %v115 = vshrl.u32 %v114, 7
  %v116 = vsub.s32 %v113, %v115
  %v117 = vrot.slane %v103, %v116
  %v118 = vcombine.high %v110, %v110
  %v119 = vcombine.high %v117, %v117
  %v188 = vunpack.c.l.b16 %v24
  %v189 = vunpack.c.l.b16 %v25
  %v190 = vunpack.c.l.b16 %v26
  %v191 = vunpack.c.l.b16 %v27
  %v192 = vunpack.c.l.b16 %v28
  %v193 = vunpack.c.l.b16 %v29
  %v194 = vunpack.c.l.b16 %v30
  %v195 = vunpack.c.l.b16 %v31
  %v196 = vunpack.c.l.b16 %v32
  %v197 = vunpack.c.l.b16 %v33
  %v198 = vunpack.c.l.b16 %v34
  %v199 = vunpack.c.l.b16 %v35
  %v200 = vunpack.c.l.b16 %v36
  %v201 = vunpack.c.l.b16 %v37
  %v202 = vunpack.c.l.b16 %v38
  %v203 = vunpack.c.l.b16 %v39
  %v204 = vunpack.c.l.b16 %v40
  %v205 = vunpack.c.l.b16 %v41
  %v206 = vunpack.c.l.b16 %v42
  %v207 = vunpack.c.l.b16 %v43
  %v208 = vunpack.c.l.b16 %v44
  %v209 = vunpack.c.l.b16 %v45
  %v210 = vunpack.c.l.b16 %v46
  %v211 = vunpack.c.l.b16 %v47
  %v212 = vunpack.c.l.b16 %v48
  %v213 = vunpack.c.l.b16 %v49
  %v214 = vunpack.c.l.b16 %v50
  %v215 = vunpack.c.l.b16 %v51
  %v216 = vunpack.c.l.b16 %v52
  %v217 = vunpack.c.l.b16 %v53
  %v218 = vunpack.c.l.b16 %v54
  %v219 = vunpack.c.l.b16 %v55
  %v220 = vunpack.c.l.b16 %v56
  %v221 = vunpack.c.l.b16 %v57
  %v222 = vunpack.c.l.b16 %v58
  %v223 = vunpack.c.l.b16 %v59
  %v224 = vunpack.c.l.b16 %v60
  %v225 = vunpack.c.l.b16 %v61
  %v226 = vunpack.c.l.b16 %v62
  %v227 = vunpack.c.l.b16 %v63
  %v228 = vunpack.c.l.b16 %v64
  %v229 = vunpack.c.l.b16 %v65
  %v230 = vunpack.c.l.b16 %v66
  %v231 = vunpack.c.l.b16 %v67
  %v232 = vunpack.c.l.b16 %v68
  %v233 = vunpack.c.l.b16 %v69
  %v234 = vunpack.c.l.b16 %v70
  %v235 = vunpack.c.l.b16 %v71
  %v236 = vunpack.c.l.b16 %v72
  %v237 = vunpack.c.l.b16 %v73
  %v238 = vunpack.c.l.b16 %v74
  %v239 = vunpack.c.l.b16 %v75
  %v240 = vunpack.c.l.b16 %v76
  %v241 = vunpack.c.l.b16 %v77
  %v242 = vunpack.c.l.b16 %v78
  %v243 = vunpack.c.l.b16 %v79
  %v244 = vunpack.c.l.b16 %v80
  %v245 = vunpack.c.l.b16 %v81
  %v246 = vunpack.c.l.b16 %v82
  %v247 = vunpack.c.l.b16 %v83
  %v248 = vunpack.c.l.b16 %v84
  %v249 = vunpack.c.l.b16 %v85
  %v250 = vunpack.c.l.b16 %v86
  %v251 = vunpack.c.l.b16 %v87
  %v252 = vpack.c.b16 %v189, %v188
  %v253 = vpack.c.b16 %v191, %v190
  %v254 = vpack.c.b16 %v193, %v192
  %v255 = vpack.c.b16 %v195, %v194
  %v256 = vpack.c.b16 %v197, %v196
  %v257 = vpack.c.b16 %v199, %v198
  %v258 = vpack.c.b16 %v201, %v200
  %v259 = vpack.c.b16 %v203, %v202
  %v260 = vpack.c.b16 %v205, %v204
  %v261 = vpack.c.b16 %v207, %v206
  %v262 = vpack.c.b16 %v209, %v208
  %v263 = vpack.c.b16 %v211, %v210
  %v264 = vpack.c.b16 %v213, %v212
  %v265 = vpack.c.b16 %v215, %v214
  %v266 = vpack.c.b16 %v217, %v216
  %v267 = vpack.c.b16 %v219, %v218
  %v268 = vpack.c.b16 %v221, %v220
  %v269 = vpack.c.b16 %v223, %v222
  %v270 = vpack.c.b16 %v225, %v224
  %v271 = vpack.c.b16 %v227, %v226
  %v272 = vpack.c.b16 %v229, %v228
  %v273 = vpack.c.b16 %v231, %v230
  %v274 = vpack.c.b16 %v233, %v232
  %v275 = vpack.c.b16 %v235, %v234
  %v276 = vpack.c.b16 %v237, %v236
  %v277 = vpack.c.b16 %v239, %v238
  %v278 = vpack.c.b16 %v241, %v240
  %v279 = vpack.c.b16 %v243, %v242
  %v280 = vpack.c.b16 %v245, %v244
  %v281 = vpack.c.b16 %v247, %v246
  %v282 = vpack.c.b16 %v249, %v248
  %v283 = vpack.c.b16 %v251, %v250
  %316 = vmatprep.subr.bf16.mxu0 0
  %317 = vmatpush1.bf16.msra.mxu0 %v252
  %318 = vmatprep.subr.bf16.mxu0 0
  %319 = vmatpush1.bf16.msra.mxu0 %v253
  %320 = vmatprep.subr.bf16.mxu0 0
  %321 = vmatpush1.bf16.msra.mxu0 %v254
  %322 = vmatprep.subr.bf16.mxu0 0
  %323 = vmatpush1.bf16.msra.mxu0 %v255
  %324 = vmatprep.subr.bf16.mxu0 0
  %325 = vmatpush1.bf16.msra.mxu0 %v256
  %326 = vmatprep.subr.bf16.mxu0 0
  %327 = vmatpush1.bf16.msra.mxu0 %v257
  %328 = vmatprep.subr.bf16.mxu0 0
  %329 = vmatpush1.bf16.msra.mxu0 %v258
  %330 = vmatprep.subr.bf16.mxu0 0
  %331 = vmatpush1.bf16.msra.mxu0 %v259
  %332 = vmatprep.subr.bf16.mxu0 0
  %333 = vmatpush1.bf16.msra.mxu0 %v260
  %334 = vmatprep.subr.bf16.mxu0 0
  %335 = vmatpush1.bf16.msra.mxu0 %v261
  %336 = vmatprep.subr.bf16.mxu0 0
  %337 = vmatpush1.bf16.msra.mxu0 %v262
  %338 = vmatprep.subr.bf16.mxu0 0
  %339 = vmatpush1.bf16.msra.mxu0 %v263
  %340 = vmatprep.subr.bf16.mxu0 0
  %341 = vmatpush1.bf16.msra.mxu0 %v264
  %342 = vmatprep.subr.bf16.mxu0 0
  %343 = vmatpush1.bf16.msra.mxu0 %v265
  %344 = vmatprep.subr.bf16.mxu0 0
  %345 = vmatpush1.bf16.msra.mxu0 %v266
  %346 = vmatprep.subr.bf16.mxu0 0
  %347 = vmatpush1.bf16.msra.mxu0 %v267
  %348 = vmatprep.mubr.bf16.mxu0 %v117
  %349 = vmatmul.mubr.bf16.gmra.mrb[0].mxu0 %v110
  %v350 = vpop.f32.mrb[0].mxu0
  %v351 = vadd.f32 %v93, %v350
  %v352 = vpop.f32.mrb[0].mxu0
  %v353 = vpop.f32.mrb[0].mxu0
  %v354 = vpop.f32.mrb[0].mxu0
  %355 = vdwg.mxu0
  %356 = vmatprep.subr.bf16.mxu0 0
  %357 = vmatpush1.bf16.msra.mxu0 %v268
  %358 = vmatprep.subr.bf16.mxu0 0
  %359 = vmatpush1.bf16.msra.mxu0 %v269
  %360 = vmatprep.subr.bf16.mxu0 0
  %361 = vmatpush1.bf16.msra.mxu0 %v270
  %362 = vmatprep.subr.bf16.mxu0 0
  %363 = vmatpush1.bf16.msra.mxu0 %v271
  %364 = vmatprep.subr.bf16.mxu0 0
  %365 = vmatpush1.bf16.msra.mxu0 %v272
  %366 = vmatprep.subr.bf16.mxu0 0
  %367 = vmatpush1.bf16.msra.mxu0 %v273
  %368 = vmatprep.subr.bf16.mxu0 0
  %369 = vmatpush1.bf16.msra.mxu0 %v274
  %370 = vmatprep.subr.bf16.mxu0 0
  %371 = vmatpush1.bf16.msra.mxu0 %v275
  %372 = vmatprep.subr.bf16.mxu0 0
  %373 = vmatpush1.bf16.msra.mxu0 %v276
  %374 = vmatprep.subr.bf16.mxu0 0
  %375 = vmatpush1.bf16.msra.mxu0 %v277
  %376 = vmatprep.subr.bf16.mxu0 0
  %377 = vmatpush1.bf16.msra.mxu0 %v278
  %378 = vmatprep.subr.bf16.mxu0 0
  %379 = vmatpush1.bf16.msra.mxu0 %v279
  %380 = vmatprep.subr.bf16.mxu0 0
  %381 = vmatpush1.bf16.msra.mxu0 %v280
  %382 = vmatprep.subr.bf16.mxu0 0
  %383 = vmatpush1.bf16.msra.mxu0 %v281
  %384 = vmatprep.subr.bf16.mxu0 0
  %385 = vmatpush1.bf16.msra.mxu0 %v282
  %386 = vmatprep.subr.bf16.mxu0 0
  %387 = vmatpush1.bf16.msra.mxu0 %v283
  %388 = vmatprep.mubr.bf16.mxu0 %v119
  %389 = vmatmul.mubr.bf16.gmra.mrb[0].mxu0 %v118
  %v390 = vpop.f32.mrb[0].mxu0
  %v391 = vadd.f32 %v351, %v390
  %v392 = vpop.f32.mrb[0].mxu0
  %v393 = vpop.f32.mrb[0].mxu0
  %v394 = vpop.f32.mrb[0].mxu0
  %395 = vdwg.mxu0
  %v396 = vtanh.pop %v391
  %v397 = vpack.c.bf16 %v396, %v396
  %v398 = vld [vmem:[%s3] sm:$0xf]
  %v399 = vld [vmem:[%s3 + $0x4] sm:$0xf]
  %v400 = vld [vmem:[%s3 + $0x8] sm:$0xf]
  %v401 = vld [vmem:[%s3 + $0xc] sm:$0xf]
  %v402 = vld [vmem:[%s3 + $0x10] sm:$0xf]
  %v403 = vld [vmem:[%s3 + $0x14] sm:$0xf]
  %v404 = vld [vmem:[%s3 + $0x18] sm:$0xf]
  %v405 = vld [vmem:[%s3 + $0x1c] sm:$0xf]
  %v406 = vld [vmem:[%s3 + $0x20] sm:$0xf]
  %v407 = vld [vmem:[%s3 + $0x24] sm:$0xf]
  %v408 = vld [vmem:[%s3 + $0x28] sm:$0xf]
  %v409 = vld [vmem:[%s3 + $0x2c] sm:$0xf]
  %v410 = vld [vmem:[%s3 + $0x30] sm:$0xf]
  %v411 = vld [vmem:[%s3 + $0x34] sm:$0xf]
  %v412 = vld [vmem:[%s3 + $0x38] sm:$0xf]
  %v413 = vld [vmem:[%s3 + $0x3c] sm:$0xf]
  %v414 = vld [vmem:[%s4] sm:$0x1]
  %v416 = vlaneseq
  %v417 = vshrl.u32 %v416, 7
  %v418 = vsub.s32 0, %v417
  %v419 = vrot.slane %v414, %v418
  %v437 = vunpack.c.l.b16 %v398
  %v438 = vunpack.c.l.b16 %v399
  %v439 = vunpack.c.l.b16 %v400
  %v440 = vunpack.c.l.b16 %v401
  %v441 = vunpack.c.l.b16 %v402
  %v442 = vunpack.c.l.b16 %v403
  %v443 = vunpack.c.l.b16 %v404
  %v444 = vunpack.c.l.b16 %v405
  %v445 = vunpack.c.l.b16 %v406
  %v446 = vunpack.c.l.b16 %v407
  %v447 = vunpack.c.l.b16 %v408
  %v448 = vunpack.c.l.b16 %v409
  %v449 = vunpack.c.l.b16 %v410
  %v450 = vunpack.c.l.b16 %v411
  %v451 = vunpack.c.l.b16 %v412
  %v452 = vunpack.c.l.b16 %v413
  %v453 = vpack.c.b16 %v438, %v437
  %v454 = vpack.c.b16 %v440, %v439
  %v455 = vpack.c.b16 %v442, %v441
  %v456 = vpack.c.b16 %v444, %v443
  %v457 = vpack.c.b16 %v446, %v445
  %v458 = vpack.c.b16 %v448, %v447
  %v459 = vpack.c.b16 %v450, %v449
  %v460 = vpack.c.b16 %v452, %v451
  %469 = vmatprep.subr.bf16.mxu0 0
  %470 = vmatpush1.bf16.msra.mxu0 %v453
  %471 = vmatprep.subr.bf16.mxu0 0
  %472 = vmatpush1.bf16.msra.mxu0 %v454
  %473 = vmatprep.subr.bf16.mxu0 0
  %474 = vmatpush1.bf16.msra.mxu0 %v455
  %475 = vmatprep.subr.bf16.mxu0 0
  %476 = vmatpush1.bf16.msra.mxu0 %v456
  %477 = vmatprep.subr.bf16.mxu0 0
  %478 = vmatpush1.bf16.msra.mxu0 %v457
  %479 = vmatprep.subr.bf16.mxu0 0
  %480 = vmatpush1.bf16.msra.mxu0 %v458
  %481 = vmatprep.subr.bf16.mxu0 0
  %482 = vmatpush1.bf16.msra.mxu0 %v459
  %483 = vmatprep.subr.bf16.mxu0 0
  %484 = vmatpush1.bf16.msra.mxu0 %v460
  %485 = vmatprep.subr.bf16.mxu0 0
  %486 = vmatpush1.bf16.msra.mxu0 0
  %487 = vmatprep.subr.bf16.mxu0 0
  %488 = vmatpush1.bf16.msra.mxu0 0
  %489 = vmatprep.subr.bf16.mxu0 0
  %490 = vmatpush1.bf16.msra.mxu0 0
  %491 = vmatprep.subr.bf16.mxu0 0
  %492 = vmatpush1.bf16.msra.mxu0 0
  %493 = vmatprep.subr.bf16.mxu0 0
  %494 = vmatpush1.bf16.msra.mxu0 0
  %495 = vmatprep.subr.bf16.mxu0 0
  %496 = vmatpush1.bf16.msra.mxu0 0
  %497 = vmatprep.subr.bf16.mxu0 0
  %498 = vmatpush1.bf16.msra.mxu0 0
  %499 = vmatprep.subr.bf16.mxu0 0
  %500 = vmatpush1.bf16.msra.mxu0 0
  %501 = vmatprep.mubr.bf16.mxu0 0
  %502 = vmatmul.mubr.bf16.gmra.mrb[0].mxu0 %v397
  %v503 = vpop.f32.mrb[0].mxu0
  %v504 = vadd.f32 %v419, %v503
  %v505 = vpop.f32.mrb[0].mxu0
  %v506 = vpop.f32.mrb[0].mxu0
  %v507 = vpop.f32.mrb[0].mxu0
  %508 = vdwg.mxu0
  %509 = vst [vmem:[%s5] sm:$0x3] %v396
  %510 = vst [vmem:[%s6] sm:$0x3] %v504
  // Predicated region
  $region22: #{gdram_forward.9} parent=0 // pred_check
    _
  $region23: #{gdram_forward.9} parent=0 // pred_check_branch
    %512 = sbr.rel (0) target = $region25
  $region24: #{gdram_forward.9} parent=0 // pred_region
    _
  $region25: #{gdram_forward.9} parent=0 // pred_fallthru
    _
  // Predicated region
  $region26: #{gdram_forward.9} parent=0 // pred_check
    _
  $region27: #{gdram_forward.9} parent=0 // pred_check_branch
    %514 = sbr.rel (0) target = $region29
  $region28: #{gdram_forward.9} parent=0 // pred_region
    _
  $region29: #{gdram_forward.9} parent=0 // pred_fallthru
    _
  // Predicated region
  $region30: #{gdram_forward.9} parent=0 // pred_check
    _
  $region31: #{gdram_forward.9} parent=0 // pred_check_branch
    %516 = sbr.rel (0) target = $region33
  $region32: #{gdram_forward.9} parent=0 // pred_region
    _
  $region33: #{gdram_forward.9} parent=0 // pred_fallthru
    _
  // Predicated region
  $region34: #{gdram_forward.9} parent=0 // pred_check
    _
  $region35: #{gdram_forward.9} parent=0 // pred_check_branch
    %518 = sbr.rel (0) target = $region37
  $region36: #{gdram_forward.9} parent=0 // pred_region
    _
  $region37: #{gdram_forward.9} parent=0 // pred_fallthru
    _

// kernel: gdram_forward.17
$region0: #{gdram_forward.17}
  #allocation0 [shape = 'u32[]', space=smem, size = 0x4, offset = 0x4, fixed_abs, tag = 'smem constant byte address 0x4 - core index']
  #allocation1 [shape = 'u32[144,128]{1,0:T(1,128)}', space=vmem, size = 0x12000, scoped, tag = 'internal scratch']
  %s0 = inlined_call_operand.vmem [shape: bf16[2,1792], index: 0, kind: input, shape index: {}]
  %s1 = inlined_call_operand.vmem [shape: f32[2,2], index: 1, kind: input, shape index: {}]
  %s2 = inlined_call_operand.vmem [shape: f32[2,128], index: 2, kind: input, shape index: {}]
  %s3 = inlined_call_operand.vmem [shape: f32[2,128], index: 3, kind: input, shape index: {}]
  %s4 = inlined_call_operand.vmem [shape: f32[2,128], index: 4, kind: input, shape index: {}]
  %s5 = inlined_call_operand.vmem [shape: f32[2,128], index: 5, kind: input, shape index: {}]
  %s6 = inlined_call_operand.vmem [shape: bf16[1792,128], index: 6, kind: input, shape index: {}]
  %s7 = inlined_call_operand.vmem [shape: f32[1,128], index: 7, kind: input, shape index: {}]
  %s8 = inlined_call_operand.vmem [shape: f32[2,128], index: 8, kind: input, shape index: {}]
  %s9 = inlined_call_operand.vmem [shape: f32[1,128], index: 9, kind: input, shape index: {}]
  %s10 = inlined_call_operand.vmem [shape: bf16[256,128], index: 10, kind: input, shape index: {}]
  %s11 = inlined_call_operand.vmem [shape: f32[1,128], index: 11, kind: input, shape index: {}]
  %s12 = inlined_call_operand.vmem [shape: bf16[256,512], index: 12, kind: input, shape index: {}]
  %s13 = inlined_call_operand.vmem [shape: f32[1,512], index: 13, kind: input, shape index: {}]
  %s14 = inlined_call_operand.vmem [shape: bf16[256,512], index: 14, kind: input, shape index: {}]
  %s15 = inlined_call_operand.vmem [shape: f32[1,512], index: 15, kind: input, shape index: {}]
  %s16 = inlined_call_operand.vmem [shape: bf16[256,128], index: 16, kind: input, shape index: {}]
  %s17 = inlined_call_operand.vmem [shape: f32[1,128], index: 17, kind: input, shape index: {}]
  %s18 = inlined_call_operand.hbm [shape: f32[2,128], index: 18, kind: output, shape index: {0}]
  %s19 = inlined_call_operand.hbm [shape: f32[2,128], index: 19, kind: output, shape index: {1}]
  %s20 = inlined_call_operand.hbm [shape: f32[2,128], index: 20, kind: output, shape index: {2}]
  %s21 = inlined_call_operand.hbm [shape: f32[2,128], index: 21, kind: output, shape index: {3}]
  %s22 = inlined_call_operand.vmem [shape: f32[2,128], index: 22, kind: output, shape index: {4}]
  %23 = xla_tuple %s18, %s19, %s20, %s21, %s22
  %s24 = sld [smem:[#allocation0]]
  $region114: #{gdram_forward.17} parent=0
    _
  %s26 = ssub.s32 1, %s24
  %s27 = scalar_select 0, %s26, %s24
  $region1: #{gdram_forward.17} parent=0
    #allocation2 [shape = 'u8[1024]{0}', space=vmem, size = 0x400, scoped, tag = 'output window, operand 0, single buffered']
    #allocation3 [shape = 's32[1]{0}', space=sflag, size = 0x4, scoped, tag = 'scoped memory for gdram_forward.17']
    #allocation4 [shape = 'u8[1024]{0}', space=vmem, size = 0x400, scoped, tag = 'output window, operand 1, single buffered']
    #allocation5 [shape = 's32[1]{0}', space=sflag, size = 0x4, scoped, tag = 'scoped memory for gdram_forward.17']
    #allocation6 [shape = 'u8[1024]{0}', space=vmem, size = 0x400, scoped, tag = 'output window, operand 2, single buffered']
    #allocation7 [shape = 'u8[1024]{0}', space=vmem, size = 0x400, scoped, tag = 'output window, operand 3, single buffered']
    #allocation8 [shape = 's32[1]{0}', space=sflag, size = 0x4, scoped, tag = 'scoped memory for gdram_forward.17']
    %28 = vsyncpa [#allocation3], 0
    %29 = vsyncpa [#allocation5], 0
    %30 = vsyncpa [#allocation8], 0
    // Predicated region
    $region2: #{gdram_forward.17} parent=1 // pred_check
      _
    $region3: #{gdram_forward.17} parent=1 // pred_check_branch
      %32 = sbr.rel (0) target = $region5
    $region4: #{gdram_forward.17} parent=1 // pred_region
      _
    $region5: #{gdram_forward.17} parent=1 // pred_fallthru
      _
    // Predicated region
    $region6: #{gdram_forward.17} parent=1 // pred_check
      _
    $region7: #{gdram_forward.17} parent=1 // pred_check_branch
      %34 = sbr.rel (0) target = $region9
    $region8: #{gdram_forward.17} parent=1 // pred_region
      _
    $region9: #{gdram_forward.17} parent=1 // pred_fallthru
      _
    // Predicated region
    $region10: #{gdram_forward.17} parent=1 // pred_check
      _
    $region11: #{gdram_forward.17} parent=1 // pred_check_branch
      %36 = sbr.rel (0) target = $region13
    $region12: #{gdram_forward.17} parent=1 // pred_region
      _
    $region13: #{gdram_forward.17} parent=1 // pred_fallthru
      _
    // Predicated region
    $region14: #{gdram_forward.17} parent=1 // pred_check
      _
    $region15: #{gdram_forward.17} parent=1 // pred_check_branch
      %38 = sbr.rel (0) target = $region17
    $region16: #{gdram_forward.17} parent=1 // pred_region
      _
    $region17: #{gdram_forward.17} parent=1 // pred_fallthru
      _
    // Predicated region
    $region18: #{gdram_forward.17} parent=1 // pred_check
      _
    $region19: #{gdram_forward.17} parent=1 // pred_check_branch
      %40 = sbr.rel (0) target = $region21
    $region20: #{gdram_forward.17} parent=1 // pred_region
      _
    $region21: #{gdram_forward.17} parent=1 // pred_fallthru
      _
    // Predicated region
    $region22: #{gdram_forward.17} parent=1 // pred_check
      _
    $region23: #{gdram_forward.17} parent=1 // pred_check_branch
      %42 = sbr.rel (0) target = $region25
    $region24: #{gdram_forward.17} parent=1 // pred_region
      _
    $region25: #{gdram_forward.17} parent=1 // pred_fallthru
      _
    // Predicated region
    $region26: #{gdram_forward.17} parent=1 // pred_check
      _
    $region27: #{gdram_forward.17} parent=1 // pred_check_branch
      %44 = sbr.rel (0) target = $region29
    $region28: #{gdram_forward.17} parent=1 // pred_region
      _
    $region29: #{gdram_forward.17} parent=1 // pred_fallthru
      _
    // Predicated region
    $region30: #{gdram_forward.17} parent=1 // pred_check
      _
    $region31: #{gdram_forward.17} parent=1 // pred_check_branch
      %46 = sbr.rel (0) target = $region33
    $region32: #{gdram_forward.17} parent=1 // pred_region
      _
    $region33: #{gdram_forward.17} parent=1 // pred_fallthru
      _
    // Predicated region
    $region34: #{gdram_forward.17} parent=1 // pred_check
      _
    $region35: #{gdram_forward.17} parent=1 // pred_check_branch
      %48 = sbr.rel (0) target = $region37
    $region36: #{gdram_forward.17} parent=1 // pred_region
      _
    $region37: #{gdram_forward.17} parent=1 // pred_fallthru
      _
    // Predicated region
    $region38: #{gdram_forward.17} parent=1 // pred_check
      _
    $region39: #{gdram_forward.17} parent=1 // pred_check_branch
      %50 = sbr.rel (0) target = $region41
    $region40: #{gdram_forward.17} parent=1 // pred_region
      _
    $region41: #{gdram_forward.17} parent=1 // pred_fallthru
      _
    // Predicated region
    $region42: #{gdram_forward.17} parent=1 // pred_check
      _
    $region43: #{gdram_forward.17} parent=1 // pred_check_branch
      %52 = sbr.rel (0) target = $region45
    $region44: #{gdram_forward.17} parent=1 // pred_region
      _
    $region45: #{gdram_forward.17} parent=1 // pred_fallthru
      _
    // Predicated region
    $region46: #{gdram_forward.17} parent=1 // pred_check
      _
    $region47: #{gdram_forward.17} parent=1 // pred_check_branch
      %54 = sbr.rel (0) target = $region49
    $region48: #{gdram_forward.17} parent=1 // pred_region
      _
    $region49: #{gdram_forward.17} parent=1 // pred_fallthru
      _
    // Predicated region
    $region50: #{gdram_forward.17} parent=1 // pred_check
      _
    $region51: #{gdram_forward.17} parent=1 // pred_check_branch
      %56 = sbr.rel (0) target = $region53
    $region52: #{gdram_forward.17} parent=1 // pred_region
      _
    $region53: #{gdram_forward.17} parent=1 // pred_fallthru
      _
    // Predicated region
    $region54: #{gdram_forward.17} parent=1 // pred_check
      _
    $region55: #{gdram_forward.17} parent=1 // pred_check_branch
      %58 = sbr.rel (0) target = $region57
    $region56: #{gdram_forward.17} parent=1 // pred_region
      _
    $region57: #{gdram_forward.17} parent=1 // pred_fallthru
      _
    // Predicated region
    $region58: #{gdram_forward.17} parent=1 // pred_check
      _
    $region59: #{gdram_forward.17} parent=1 // pred_check_branch
      %60 = sbr.rel (0) target = $region61
    $region60: #{gdram_forward.17} parent=1 // pred_region
      _
    $region61: #{gdram_forward.17} parent=1 // pred_fallthru
      _
    // Predicated region
    $region62: #{gdram_forward.17} parent=1 // pred_check
      _
    $region63: #{gdram_forward.17} parent=1 // pred_check_branch
      %62 = sbr.rel (0) target = $region65
    $region64: #{gdram_forward.17} parent=1 // pred_region
      _
    $region65: #{gdram_forward.17} parent=1 // pred_fallthru
      _
    // Predicated region
    $region66: #{gdram_forward.17} parent=1 // pred_check
      _
    $region67: #{gdram_forward.17} parent=1 // pred_check_branch
      %64 = sbr.rel (0) target = $region69
    $region68: #{gdram_forward.17} parent=1 // pred_region
      _
    $region69: #{gdram_forward.17} parent=1 // pred_fallthru
      _
    // Predicated region
    $region70: #{gdram_forward.17} parent=1 // pred_check
      _
    $region71: #{gdram_forward.17} parent=1 // pred_check_branch
      %66 = sbr.rel (0) target = $region73
    $region72: #{gdram_forward.17} parent=1 // pred_region
      _
    $region73: #{gdram_forward.17} parent=1 // pred_fallthru
      _
    %v68 = vld [vmem:[%s0] sm:$0xff]
    %v69 = vld [vmem:[%s0 + $0x8] sm:$0x3f]
    %v70 = vld [vmem:[%s6] sm:$0xf]
    %v71 = vld [vmem:[%s6 + $0x4] sm:$0xf]
    %v72 = vld [vmem:[%s6 + $0x8] sm:$0xf]
    %v73 = vld [vmem:[%s6 + $0xc] sm:$0xf]
    %v74 = vld [vmem:[%s6 + $0x10] sm:$0xf]
    %v75 = vld [vmem:[%s6 + $0x14] sm:$0xf]
    %v76 = vld [vmem:[%s6 + $0x18] sm:$0xf]
    %v77 = vld [vmem:[%s6 + $0x1c] sm:$0xf]
    %v78 = vld [vmem:[%s6 + $0x20] sm:$0xf]
    %v79 = vld [vmem:[%s6 + $0x24] sm:$0xf]
    %v80 = vld [vmem:[%s6 + $0x28] sm:$0xf]
    %v81 = vld [vmem:[%s6 + $0x2c] sm:$0xf]
    %v82 = vld [vmem:[%s6 + $0x30] sm:$0xf]
    %v83 = vld [vmem:[%s6 + $0x34] sm:$0xf]
    %v84 = vld [vmem:[%s6 + $0x38] sm:$0xf]
    %v85 = vld [vmem:[%s6 + $0x3c] sm:$0xf]
    %v86 = vld [vmem:[%s6 + $0x40] sm:$0xf]
    %v87 = vld [vmem:[%s6 + $0x44] sm:$0xf]
    %v88 = vld [vmem:[%s6 + $0x48] sm:$0xf]
    %v89 = vld [vmem:[%s6 + $0x4c] sm:$0xf]
    %v90 = vld [vmem:[%s6 + $0x50] sm:$0xf]
    %v91 = vld [vmem:[%s6 + $0x54] sm:$0xf]
    %v92 = vld [vmem:[%s6 + $0x58] sm:$0xf]
    %v93 = vld [vmem:[%s6 + $0x5c] sm:$0xf]
    %v94 = vld [vmem:[%s6 + $0x60] sm:$0xf]
    %v95 = vld [vmem:[%s6 + $0x64] sm:$0xf]
    %v96 = vld [vmem:[%s6 + $0x68] sm:$0xf]
    %v97 = vld [vmem:[%s6 + $0x6c] sm:$0xf]
    %v98 = vld [vmem:[%s6 + $0x70] sm:$0xf]
    %v99 = vld [vmem:[%s6 + $0x74] sm:$0xf]
    %v100 = vld [vmem:[%s6 + $0x78] sm:$0xf]
    %v101 = vld [vmem:[%s6 + $0x7c] sm:$0xf]
    %v102 = vld [vmem:[%s6 + $0x80] sm:$0xf]
    %v103 = vld [vmem:[%s6 + $0x84] sm:$0xf]
    %v104 = vld [vmem:[%s6 + $0x88] sm:$0xf]
    %v105 = vld [vmem:[%s6 + $0x8c] sm:$0xf]
    %v106 = vld [vmem:[%s6 + $0x90] sm:$0xf]
    %v107 = vld [vmem:[%s6 + $0x94] sm:$0xf]
    %v108 = vld [vmem:[%s6 + $0x98] sm:$0xf]
    %v109 = vld [vmem:[%s6 + $0x9c] sm:$0xf]
    %v110 = vld [vmem:[%s6 + $0xa0] sm:$0xf]
    %v111 = vld [vmem:[%s6 + $0xa4] sm:$0xf]
    %v112 = vld [vmem:[%s6 + $0xa8] sm:$0xf]
    %v113 = vld [vmem:[%s6 + $0xac] sm:$0xf]
    %v114 = vld [vmem:[%s6 + $0xb0] sm:$0xf]
    %v115 = vld [vmem:[%s6 + $0xb4] sm:$0xf]
    %v116 = vld [vmem:[%s6 + $0xb8] sm:$0xf]
    %v117 = vld [vmem:[%s6 + $0xbc] sm:$0xf]
    %v118 = vld [vmem:[%s6 + $0xc0] sm:$0xf]
    %v119 = vld [vmem:[%s6 + $0xc4] sm:$0xf]
    %v120 = vld [vmem:[%s6 + $0xc8] sm:$0xf]
    %v121 = vld [vmem:[%s6 + $0xcc] sm:$0xf]
    %v122 = vld [vmem:[%s6 + $0xd0] sm:$0xf]
    %v123 = vld [vmem:[%s6 + $0xd4] sm:$0xf]
    %v124 = vld [vmem:[%s6 + $0xd8] sm:$0xf]
    %v125 = vld [vmem:[%s6 + $0xdc] sm:$0xf]
    %v126 = vld [vmem:[%s6 + $0xe0] sm:$0xf]
    %v127 = vld [vmem:[%s6 + $0xe4] sm:$0xf]
    %v128 = vld [vmem:[%s6 + $0xe8] sm:$0xf]
    %v129 = vld [vmem:[%s6 + $0xec] sm:$0xf]
    %v130 = vld [vmem:[%s6 + $0xf0] sm:$0xf]
    %v131 = vld [vmem:[%s6 + $0xf4] sm:$0xf]
    %v132 = vld [vmem:[%s6 + $0xf8] sm:$0xf]
    %v133 = vld [vmem:[%s6 + $0xfc] sm:$0xf]
    %v134 = vld [vmem:[%s6 + $0x100] sm:$0xf]
    %v135 = vld [vmem:[%s6 + $0x104] sm:$0xf]
    %v136 = vld [vmem:[%s6 + $0x108] sm:$0xf]
    %v137 = vld [vmem:[%s6 + $0x10c] sm:$0xf]
    %v138 = vld [vmem:[%s6 + $0x110] sm:$0xf]
    %v139 = vld [vmem:[%s6 + $0x114] sm:$0xf]
    %v140 = vld [vmem:[%s6 + $0x118] sm:$0xf]
    %v141 = vld [vmem:[%s6 + $0x11c] sm:$0xf]
    %v142 = vld [vmem:[%s6 + $0x120] sm:$0xf]
    %v143 = vld [vmem:[%s6 + $0x124] sm:$0xf]
    %v144 = vld [vmem:[%s6 + $0x128] sm:$0xf]
    %v145 = vld [vmem:[%s6 + $0x12c] sm:$0xf]
    %v146 = vld [vmem:[%s6 + $0x130] sm:$0xf]
    %v147 = vld [vmem:[%s6 + $0x134] sm:$0xf]
    %v148 = vld [vmem:[%s6 + $0x138] sm:$0xf]
    %v149 = vld [vmem:[%s6 + $0x13c] sm:$0xf]
    %v150 = vld [vmem:[%s6 + $0x140] sm:$0xf]
    %v151 = vld [vmem:[%s6 + $0x144] sm:$0xf]
    %v152 = vld [vmem:[%s6 + $0x148] sm:$0xf]
    %v153 = vld [vmem:[%s6 + $0x14c] sm:$0xf]
    %v154 = vld [vmem:[%s6 + $0x150] sm:$0xf]
    %v155 = vld [vmem:[%s6 + $0x154] sm:$0xf]
    %v156 = vld [vmem:[%s6 + $0x158] sm:$0xf]
    %v157 = vld [vmem:[%s6 + $0x15c] sm:$0xf]
    %v158 = vld [vmem:[%s6 + $0x160] sm:$0xf]
    %v159 = vld [vmem:[%s6 + $0x164] sm:$0xf]
    %v160 = vld [vmem:[%s6 + $0x168] sm:$0xf]
    %v161 = vld [vmem:[%s6 + $0x16c] sm:$0xf]
    %v162 = vld [vmem:[%s6 + $0x170] sm:$0xf]
    %v163 = vld [vmem:[%s6 + $0x174] sm:$0xf]
    %v164 = vld [vmem:[%s6 + $0x178] sm:$0xf]
    %v165 = vld [vmem:[%s6 + $0x17c] sm:$0xf]
    %v166 = vld [vmem:[%s6 + $0x180] sm:$0xf]
    %v167 = vld [vmem:[%s6 + $0x184] sm:$0xf]
    %v168 = vld [vmem:[%s6 + $0x188] sm:$0xf]
    %v169 = vld [vmem:[%s6 + $0x18c] sm:$0xf]
    %v170 = vld [vmem:[%s6 + $0x190] sm:$0xf]
    %v171 = vld [vmem:[%s6 + $0x194] sm:$0xf]
    %v172 = vld [vmem:[%s6 + $0x198] sm:$0xf]
    %v173 = vld [vmem:[%s6 + $0x19c] sm:$0xf]
    %v174 = vld [vmem:[%s6 + $0x1a0] sm:$0xf]
    %v175 = vld [vmem:[%s6 + $0x1a4] sm:$0xf]
    %v176 = vld [vmem:[%s6 + $0x1a8] sm:$0xf]
    %v177 = vld [vmem:[%s6 + $0x1ac] sm:$0xf]
    %v178 = vld [vmem:[%s6 + $0x1b0] sm:$0xf]
    %v179 = vld [vmem:[%s6 + $0x1b4] sm:$0xf]
    %v180 = vld [vmem:[%s6 + $0x1b8] sm:$0xf]
    %v181 = vld [vmem:[%s6 + $0x1bc] sm:$0xf]
    %v182 = vld [vmem:[%s6 + $0x1c0] sm:$0xf]
    %v183 = vld [vmem:[%s6 + $0x1c4] sm:$0xf]
    %v184 = vld [vmem:[%s6 + $0x1c8] sm:$0xf]
    %v185 = vld [vmem:[%s6 + $0x1cc] sm:$0xf]
    %v186 = vld [vmem:[%s6 + $0x1d0] sm:$0xf]
    %v187 = vld [vmem:[%s6 + $0x1d4] sm:$0xf]
    %v188 = vld [vmem:[%s6 + $0x1d8] sm:$0xf]
    %v189 = vld [vmem:[%s6 + $0x1dc] sm:$0xf]
    %v190 = vld [vmem:[%s6 + $0x1e0] sm:$0xf]
    %v191 = vld [vmem:[%s6 + $0x1e4] sm:$0xf]
    %v192 = vld [vmem:[%s6 + $0x1e8] sm:$0xf]
    %v193 = vld [vmem:[%s6 + $0x1ec] sm:$0xf]
    %v194 = vld [vmem:[%s6 + $0x1f0] sm:$0xf]
    %v195 = vld [vmem:[%s6 + $0x1f4] sm:$0xf]
    %v196 = vld [vmem:[%s6 + $0x1f8] sm:$0xf]
    %v197 = vld [vmem:[%s6 + $0x1fc] sm:$0xf]
    %v198 = vld [vmem:[%s6 + $0x200] sm:$0xf]
    %v199 = vld [vmem:[%s6 + $0x204] sm:$0xf]
    %v200 = vld [vmem:[%s6 + $0x208] sm:$0xf]
    %v201 = vld [vmem:[%s6 + $0x20c] sm:$0xf]
    %v202 = vld [vmem:[%s6 + $0x210] sm:$0xf]
    %v203 = vld [vmem:[%s6 + $0x214] sm:$0xf]
    %v204 = vld [vmem:[%s6 + $0x218] sm:$0xf]
    %v205 = vld [vmem:[%s6 + $0x21c] sm:$0xf]
    %v206 = vld [vmem:[%s6 + $0x220] sm:$0xf]
    %v207 = vld [vmem:[%s6 + $0x224] sm:$0xf]
    %v208 = vld [vmem:[%s6 + $0x228] sm:$0xf]
    %v209 = vld [vmem:[%s6 + $0x22c] sm:$0xf]
    %v210 = vld [vmem:[%s6 + $0x230] sm:$0xf]
    %v211 = vld [vmem:[%s6 + $0x234] sm:$0xf]
    %v212 = vld [vmem:[%s6 + $0x238] sm:$0xf]
    %v213 = vld [vmem:[%s6 + $0x23c] sm:$0xf]
    %v214 = vld [vmem:[%s6 + $0x240] sm:$0xf]
    %v215 = vld [vmem:[%s6 + $0x244] sm:$0xf]
    %v216 = vld [vmem:[%s6 + $0x248] sm:$0xf]
    %v217 = vld [vmem:[%s6 + $0x24c] sm:$0xf]
    %v218 = vld [vmem:[%s6 + $0x250] sm:$0xf]
    %v219 = vld [vmem:[%s6 + $0x254] sm:$0xf]
    %v220 = vld [vmem:[%s6 + $0x258] sm:$0xf]
    %v221 = vld [vmem:[%s6 + $0x25c] sm:$0xf]
    %v222 = vld [vmem:[%s6 + $0x260] sm:$0xf]
    %v223 = vld [vmem:[%s6 + $0x264] sm:$0xf]
    %v224 = vld [vmem:[%s6 + $0x268] sm:$0xf]
    %v225 = vld [vmem:[%s6 + $0x26c] sm:$0xf]
    %v226 = vld [vmem:[%s6 + $0x270] sm:$0xf]
    %v227 = vld [vmem:[%s6 + $0x274] sm:$0xf]
    %v228 = vld [vmem:[%s6 + $0x278] sm:$0xf]
    %v229 = vld [vmem:[%s6 + $0x27c] sm:$0xf]
    %v230 = vld [vmem:[%s6 + $0x280] sm:$0xf]
    %v231 = vld [vmem:[%s6 + $0x284] sm:$0xf]
    %v232 = vld [vmem:[%s6 + $0x288] sm:$0xf]
    %v233 = vld [vmem:[%s6 + $0x28c] sm:$0xf]
    %v234 = vld [vmem:[%s6 + $0x290] sm:$0xf]
    %v235 = vld [vmem:[%s6 + $0x294] sm:$0xf]
    %v236 = vld [vmem:[%s6 + $0x298] sm:$0xf]
    %v237 = vld [vmem:[%s6 + $0x29c] sm:$0xf]
    %v238 = vld [vmem:[%s6 + $0x2a0] sm:$0xf]
    %v239 = vld [vmem:[%s6 + $0x2a4] sm:$0xf]
    %v240 = vld [vmem:[%s6 + $0x2a8] sm:$0xf]
    %v241 = vld [vmem:[%s6 + $0x2ac] sm:$0xf]
    %v242 = vld [vmem:[%s6 + $0x2b0] sm:$0xf]
    %v243 = vld [vmem:[%s6 + $0x2b4] sm:$0xf]
    %v244 = vld [vmem:[%s6 + $0x2b8] sm:$0xf]
    %v245 = vld [vmem:[%s6 + $0x2bc] sm:$0xf]
    %v246 = vld [vmem:[%s6 + $0x2c0] sm:$0xf]
    %v247 = vld [vmem:[%s6 + $0x2c4] sm:$0xf]
    %v248 = vld [vmem:[%s6 + $0x2c8] sm:$0xf]
    %v249 = vld [vmem:[%s6 + $0x2cc] sm:$0xf]
    %v250 = vld [vmem:[%s6 + $0x2d0] sm:$0xf]
    %v251 = vld [vmem:[%s6 + $0x2d4] sm:$0xf]
    %v252 = vld [vmem:[%s6 + $0x2d8] sm:$0xf]
    %v253 = vld [vmem:[%s6 + $0x2dc] sm:$0xf]
    %v254 = vld [vmem:[%s6 + $0x2e0] sm:$0xf]
    %v255 = vld [vmem:[%s6 + $0x2e4] sm:$0xf]
    %v256 = vld [vmem:[%s6 + $0x2e8] sm:$0xf]
    %v257 = vld [vmem:[%s6 + $0x2ec] sm:$0xf]
    %v258 = vld [vmem:[%s6 + $0x2f0] sm:$0xf]
    %v259 = vld [vmem:[%s6 + $0x2f4] sm:$0xf]
    %v260 = vld [vmem:[%s6 + $0x2f8] sm:$0xf]
    %v261 = vld [vmem:[%s6 + $0x2fc] sm:$0xf]
    %v262 = vld [vmem:[%s6 + $0x300] sm:$0xf]
    %v263 = vld [vmem:[%s6 + $0x304] sm:$0xf]
    %v264 = vld [vmem:[%s6 + $0x308] sm:$0xf]
    %v265 = vld [vmem:[%s6 + $0x30c] sm:$0xf]
    %v266 = vld [vmem:[%s6 + $0x310] sm:$0xf]
    %v267 = vld [vmem:[%s6 + $0x314] sm:$0xf]
    %v268 = vld [vmem:[%s6 + $0x318] sm:$0xf]
    %v269 = vld [vmem:[%s6 + $0x31c] sm:$0xf]
    %v270 = vld [vmem:[%s6 + $0x320] sm:$0xf]
    %v271 = vld [vmem:[%s6 + $0x324] sm:$0xf]
    %v272 = vld [vmem:[%s6 + $0x328] sm:$0xf]
    %v273 = vld [vmem:[%s6 + $0x32c] sm:$0xf]
    %v274 = vld [vmem:[%s6 + $0x330] sm:$0xf]
    %v275 = vld [vmem:[%s6 + $0x334] sm:$0xf]
    %v276 = vld [vmem:[%s6 + $0x338] sm:$0xf]
    %v277 = vld [vmem:[%s6 + $0x33c] sm:$0xf]
    %v278 = vld [vmem:[%s6 + $0x340] sm:$0xf]
    %v279 = vld [vmem:[%s6 + $0x344] sm:$0xf]
    %v280 = vld [vmem:[%s6 + $0x348] sm:$0xf]
    %v281 = vld [vmem:[%s6 + $0x34c] sm:$0xf]
    %v282 = vld [vmem:[%s6 + $0x350] sm:$0xf]
    %v283 = vld [vmem:[%s6 + $0x354] sm:$0xf]
    %v284 = vld [vmem:[%s6 + $0x358] sm:$0xf]
    %v285 = vld [vmem:[%s6 + $0x35c] sm:$0xf]
    %v286 = vld [vmem:[%s6 + $0x360] sm:$0xf]
    %v287 = vld [vmem:[%s6 + $0x364] sm:$0xf]
    %v288 = vld [vmem:[%s6 + $0x368] sm:$0xf]
    %v289 = vld [vmem:[%s6 + $0x36c] sm:$0xf]
    %v290 = vld [vmem:[%s6 + $0x370] sm:$0xf]
    %v291 = vld [vmem:[%s6 + $0x374] sm:$0xf]
    %v292 = vld [vmem:[%s6 + $0x378] sm:$0xf]
    %v293 = vld [vmem:[%s6 + $0x37c] sm:$0xf]
    %v294 = vld [vmem:[%s7] sm:$0x1]
    %v296 = vlaneseq
    %v297 = vshrl.u32 %v296, 7
    %v298 = vsub.s32 0, %v297
    %v299 = vrot.slane %v294, %v298
    %v303 = vcombine.high %v68, %v68
    %v305 = vunpack.c.l.s4 1966171168
    %v306 = vunpack.c.0.s8 %v305
    %v307 = vlaneseq
    %v308 = vshrl.u32 %v307, 7
    %v309 = vsub.s32 %v306, %v308
    %v310 = vrot.slane %v68, %v309
    %v312 = vunpack.c.l.s4 1966171168
    %v313 = vunpack.c.0.s8 %v312
    %v314 = vlaneseq
    %v315 = vshrl.u32 %v314, 7
    %v316 = vsub.s32 %v313, %v315
    %v317 = vrot.slane %v303, %v316
    %v318 = vcombine.high %v310, %v310
    %v319 = vcombine.high %v317, %v317
    %v321 = vunpack.c.l.s4 1966171168
    %v322 = vunpack.c.0.s8 %v321
    %v323 = vlaneseq
    %v324 = vshrl.u32 %v323, 7
    %v325 = vsub.s32 %v322, %v324
    %v326 = vrot.slane %v310, %v325
    %v328 = vunpack.c.l.s4 1966171168
    %v329 = vunpack.c.0.s8 %v328
    %v330 = vlaneseq
    %v331 = vshrl.u32 %v330, 7
    %v332 = vsub.s32 %v329, %v331
    %v333 = vrot.slane %v317, %v332
    %v335 = vunpack.c.l.s4 1966171168
    %v336 = vunpack.c.0.s8 %v335
    %v337 = vlaneseq
    %v338 = vshrl.u32 %v337, 7
    %v339 = vsub.s32 %v336, %v338
    %v340 = vrot.slane %v318, %v339
    %v342 = vunpack.c.l.s4 1966171168
    %v343 = vunpack.c.0.s8 %v342
    %v344 = vlaneseq
    %v345 = vshrl.u32 %v344, 7
    %v346 = vsub.s32 %v343, %v345
    %v347 = vrot.slane %v319, %v346
    %v348 = vcombine.high %v326, %v326
    %v349 = vcombine.high %v333, %v333
    %v350 = vcombine.high %v340, %v340
    %v351 = vcombine.high %v347, %v347
    %v352 = vcombine.high %v69, %v69
    %v354 = vunpack.c.l.s4 1966171168
    %v355 = vunpack.c.0.s8 %v354
    %v356 = vlaneseq
    %v357 = vshrl.u32 %v356, 7
    %v358 = vsub.s32 %v355, %v357
    %v359 = vrot.slane %v69, %v358
    %v361 = vunpack.c.l.s4 1966171168
    %v362 = vunpack.c.0.s8 %v361
    %v363 = vlaneseq
    %v364 = vshrl.u32 %v363, 7
    %v365 = vsub.s32 %v362, %v364
    %v366 = vrot.slane %v352, %v365
    %v367 = vcombine.high %v359, %v359
    %v368 = vcombine.high %v366, %v366
    %v370 = vunpack.c.l.s4 1966171168
    %v371 = vunpack.c.0.s8 %v370
    %v372 = vlaneseq
    %v373 = vshrl.u32 %v372, 7
    %v374 = vsub.s32 %v371, %v373
    %v375 = vrot.slane %v359, %v374
    %v377 = vunpack.c.l.s4 1966171168
    %v378 = vunpack.c.0.s8 %v377
    %v379 = vlaneseq
    %v380 = vshrl.u32 %v379, 7
    %v381 = vsub.s32 %v378, %v380
    %v382 = vrot.slane %v366, %v381
    %v384 = vunpack.c.l.s4 1966171168
    %v385 = vunpack.c.0.s8 %v384
    %v386 = vlaneseq
    %v387 = vshrl.u32 %v386, 7
    %v388 = vsub.s32 %v385, %v387
    %v389 = vrot.slane %v367, %v388
    %v391 = vunpack.c.l.s4 1966171168
    %v392 = vunpack.c.0.s8 %v391
    %v393 = vlaneseq
    %v394 = vshrl.u32 %v393, 7
    %v395 = vsub.s32 %v392, %v394
    %v396 = vrot.slane %v368, %v395
    %v397 = vcombine.high %v375, %v375
    %v398 = vcombine.high %v389, %v389
    %v637 = vunpack.c.l.b16 %v70
    %v638 = vunpack.c.l.b16 %v71
    %v639 = vunpack.c.l.b16 %v72
    %v640 = vunpack.c.l.b16 %v73
    %v641 = vunpack.c.l.b16 %v74
    %v642 = vunpack.c.l.b16 %v75
    %v643 = vunpack.c.l.b16 %v76
    %v644 = vunpack.c.l.b16 %v77
    %v645 = vunpack.c.l.b16 %v78
    %v646 = vunpack.c.l.b16 %v79
    %v647 = vunpack.c.l.b16 %v80
    %v648 = vunpack.c.l.b16 %v81
    %v649 = vunpack.c.l.b16 %v82
    %v650 = vunpack.c.l.b16 %v83
    %v651 = vunpack.c.l.b16 %v84
    %v652 = vunpack.c.l.b16 %v85
    %v653 = vunpack.c.l.b16 %v86
    %v654 = vunpack.c.l.b16 %v87
    %v655 = vunpack.c.l.b16 %v88
    %v656 = vunpack.c.l.b16 %v89
    %v657 = vunpack.c.l.b16 %v90
    %v658 = vunpack.c.l.b16 %v91
    %v659 = vunpack.c.l.b16 %v92
    %v660 = vunpack.c.l.b16 %v93
    %v661 = vunpack.c.l.b16 %v94
    %v662 = vunpack.c.l.b16 %v95
    %v663 = vunpack.c.l.b16 %v96
    %v664 = vunpack.c.l.b16 %v97
    %v665 = vunpack.c.l.b16 %v98
    %v666 = vunpack.c.l.b16 %v99
    %v667 = vunpack.c.l.b16 %v100
    %v668 = vunpack.c.l.b16 %v101
    %v669 = vunpack.c.l.b16 %v102
    %v670 = vunpack.c.l.b16 %v103
    %v671 = vunpack.c.l.b16 %v104
    %v672 = vunpack.c.l.b16 %v105
    %v673 = vunpack.c.l.b16 %v106
    %v674 = vunpack.c.l.b16 %v107
    %v675 = vunpack.c.l.b16 %v108
    %v676 = vunpack.c.l.b16 %v109
    %v677 = vunpack.c.l.b16 %v110
    %v678 = vunpack.c.l.b16 %v111
    %v679 = vunpack.c.l.b16 %v112
    %v680 = vunpack.c.l.b16 %v113
    %v681 = vunpack.c.l.b16 %v114
    %v682 = vunpack.c.l.b16 %v115
    %v683 = vunpack.c.l.b16 %v116
    %v684 = vunpack.c.l.b16 %v117
    %v685 = vunpack.c.l.b16 %v118
    %v686 = vunpack.c.l.b16 %v119
    %v687 = vunpack.c.l.b16 %v120
    %v688 = vunpack.c.l.b16 %v121
    %v689 = vunpack.c.l.b16 %v122
    %v690 = vunpack.c.l.b16 %v123
    %v691 = vunpack.c.l.b16 %v124
    %v692 = vunpack.c.l.b16 %v125
    %v693 = vunpack.c.l.b16 %v126
    %v694 = vunpack.c.l.b16 %v127
    %v695 = vunpack.c.l.b16 %v128
    %v696 = vunpack.c.l.b16 %v129
    %v697 = vunpack.c.l.b16 %v130
    %v698 = vunpack.c.l.b16 %v131
    %v699 = vunpack.c.l.b16 %v132
    %v700 = vunpack.c.l.b16 %v133
    %v701 = vunpack.c.l.b16 %v134
    %v702 = vunpack.c.l.b16 %v135
    %v703 = vunpack.c.l.b16 %v136
    %v704 = vunpack.c.l.b16 %v137
    %v705 = vunpack.c.l.b16 %v138
    %v706 = vunpack.c.l.b16 %v139
    %v707 = vunpack.c.l.b16 %v140
    %v708 = vunpack.c.l.b16 %v141
    %v709 = vunpack.c.l.b16 %v142
    %v710 = vunpack.c.l.b16 %v143
    %v711 = vunpack.c.l.b16 %v144
    %v712 = vunpack.c.l.b16 %v145
    %v713 = vunpack.c.l.b16 %v146
    %v714 = vunpack.c.l.b16 %v147
    %v715 = vunpack.c.l.b16 %v148
    %v716 = vunpack.c.l.b16 %v149
    %v717 = vunpack.c.l.b16 %v150
    %v718 = vunpack.c.l.b16 %v151
    %v719 = vunpack.c.l.b16 %v152
    %v720 = vunpack.c.l.b16 %v153
    %v721 = vunpack.c.l.b16 %v154
    %v722 = vunpack.c.l.b16 %v155
    %v723 = vunpack.c.l.b16 %v156
    %v724 = vunpack.c.l.b16 %v157
    %v725 = vunpack.c.l.b16 %v158
    %v726 = vunpack.c.l.b16 %v159
    %v727 = vunpack.c.l.b16 %v160
    %v728 = vunpack.c.l.b16 %v161
    %v729 = vunpack.c.l.b16 %v162
    %v730 = vunpack.c.l.b16 %v163
    %v731 = vunpack.c.l.b16 %v164
    %v732 = vunpack.c.l.b16 %v165
    %v733 = vunpack.c.l.b16 %v166
    %v734 = vunpack.c.l.b16 %v167
    %v735 = vunpack.c.l.b16 %v168
    %v736 = vunpack.c.l.b16 %v169
    %v737 = vunpack.c.l.b16 %v170
    %v738 = vunpack.c.l.b16 %v171
    %v739 = vunpack.c.l.b16 %v172
    %v740 = vunpack.c.l.b16 %v173
    %v741 = vunpack.c.l.b16 %v174
    %v742 = vunpack.c.l.b16 %v175
    %v743 = vunpack.c.l.b16 %v176
    %v744 = vunpack.c.l.b16 %v177
    %v745 = vunpack.c.l.b16 %v178
    %v746 = vunpack.c.l.b16 %v179
    %v747 = vunpack.c.l.b16 %v180
    %v748 = vunpack.c.l.b16 %v181
    %v749 = vunpack.c.l.b16 %v182
    %v750 = vunpack.c.l.b16 %v183
    %v751 = vunpack.c.l.b16 %v184
    %v752 = vunpack.c.l.b16 %v185
    %v753 = vunpack.c.l.b16 %v186
    %v754 = vunpack.c.l.b16 %v187
    %v755 = vunpack.c.l.b16 %v188
    %v756 = vunpack.c.l.b16 %v189
    %v757 = vunpack.c.l.b16 %v190
    %v758 = vunpack.c.l.b16 %v191
    %v759 = vunpack.c.l.b16 %v192
    %v760 = vunpack.c.l.b16 %v193
    %v761 = vunpack.c.l.b16 %v194
    %v762 = vunpack.c.l.b16 %v195
    %v763 = vunpack.c.l.b16 %v196
    %v764 = vunpack.c.l.b16 %v197
    %v765 = vunpack.c.l.b16 %v198
    %v766 = vunpack.c.l.b16 %v199
    %v767 = vunpack.c.l.b16 %v200
    %v768 = vunpack.c.l.b16 %v201
    %v769 = vunpack.c.l.b16 %v202
    %v770 = vunpack.c.l.b16 %v203
    %v771 = vunpack.c.l.b16 %v204
    %v772 = vunpack.c.l.b16 %v205
    %v773 = vunpack.c.l.b16 %v206
    %v774 = vunpack.c.l.b16 %v207
    %v775 = vunpack.c.l.b16 %v208
    %v776 = vunpack.c.l.b16 %v209
    %v777 = vunpack.c.l.b16 %v210
    %v778 = vunpack.c.l.b16 %v211
    %v779 = vunpack.c.l.b16 %v212
    %v780 = vunpack.c.l.b16 %v213
    %v781 = vunpack.c.l.b16 %v214
    %v782 = vunpack.c.l.b16 %v215
    %v783 = vunpack.c.l.b16 %v216
    %v784 = vunpack.c.l.b16 %v217
    %v785 = vunpack.c.l.b16 %v218
    %v786 = vunpack.c.l.b16 %v219
    %v787 = vunpack.c.l.b16 %v220
    %v788 = vunpack.c.l.b16 %v221
    %v789 = vunpack.c.l.b16 %v222
    %v790 = vunpack.c.l.b16 %v223
    %v791 = vunpack.c.l.b16 %v224
    %v792 = vunpack.c.l.b16 %v225
    %v793 = vunpack.c.l.b16 %v226
    %v794 = vunpack.c.l.b16 %v227
    %v795 = vunpack.c.l.b16 %v228
    %v796 = vunpack.c.l.b16 %v229
    %v797 = vunpack.c.l.b16 %v230
    %v798 = vunpack.c.l.b16 %v231
    %v799 = vunpack.c.l.b16 %v232
    %v800 = vunpack.c.l.b16 %v233
    %v801 = vunpack.c.l.b16 %v234
    %v802 = vunpack.c.l.b16 %v235
    %v803 = vunpack.c.l.b16 %v236
    %v804 = vunpack.c.l.b16 %v237
    %v805 = vunpack.c.l.b16 %v238
    %v806 = vunpack.c.l.b16 %v239
    %v807 = vunpack.c.l.b16 %v240
    %v808 = vunpack.c.l.b16 %v241
    %v809 = vunpack.c.l.b16 %v242
    %v810 = vunpack.c.l.b16 %v243
    %v811 = vunpack.c.l.b16 %v244
    %v812 = vunpack.c.l.b16 %v245
    %v813 = vunpack.c.l.b16 %v246
    %v814 = vunpack.c.l.b16 %v247
    %v815 = vunpack.c.l.b16 %v248
    %v816 = vunpack.c.l.b16 %v249
    %v817 = vunpack.c.l.b16 %v250
    %v818 = vunpack.c.l.b16 %v251
    %v819 = vunpack.c.l.b16 %v252
    %v820 = vunpack.c.l.b16 %v253
    %v821 = vunpack.c.l.b16 %v254
    %v822 = vunpack.c.l.b16 %v255
    %v823 = vunpack.c.l.b16 %v256
    %v824 = vunpack.c.l.b16 %v257
    %v825 = vunpack.c.l.b16 %v258
    %v826 = vunpack.c.l.b16 %v259
    %v827 = vunpack.c.l.b16 %v260
    %v828 = vunpack.c.l.b16 %v261
    %v829 = vunpack.c.l.b16 %v262
    %v830 = vunpack.c.l.b16 %v263
    %v831 = vunpack.c.l.b16 %v264
    %v832 = vunpack.c.l.b16 %v265
    %v833 = vunpack.c.l.b16 %v266
    %v834 = vunpack.c.l.b16 %v267
    %v835 = vunpack.c.l.b16 %v268
    %v836 = vunpack.c.l.b16 %v269
    %v837 = vunpack.c.l.b16 %v270
    %v838 = vunpack.c.l.b16 %v271
    %v839 = vunpack.c.l.b16 %v272
    %v840 = vunpack.c.l.b16 %v273
    %v841 = vunpack.c.l.b16 %v274
    %v842 = vunpack.c.l.b16 %v275
    %v843 = vunpack.c.l.b16 %v276
    %v844 = vunpack.c.l.b16 %v277
    %v845 = vunpack.c.l.b16 %v278
    %v846 = vunpack.c.l.b16 %v279
    %v847 = vunpack.c.l.b16 %v280
    %v848 = vunpack.c.l.b16 %v281
    %v849 = vunpack.c.l.b16 %v282
    %v850 = vunpack.c.l.b16 %v283
    %v851 = vunpack.c.l.b16 %v284
    %v852 = vunpack.c.l.b16 %v285
    %v853 = vunpack.c.l.b16 %v286
    %v854 = vunpack.c.l.b16 %v287
    %v855 = vunpack.c.l.b16 %v288
    %v856 = vunpack.c.l.b16 %v289
    %v857 = vunpack.c.l.b16 %v290
    %v858 = vunpack.c.l.b16 %v291
    %v859 = vunpack.c.l.b16 %v292
    %v860 = vunpack.c.l.b16 %v293
    %v861 = vpack.c.b16 %v638, %v637
    %v862 = vpack.c.b16 %v640, %v639
    %v863 = vpack.c.b16 %v642, %v641
    %v864 = vpack.c.b16 %v644, %v643
    %v865 = vpack.c.b16 %v646, %v645
    %v866 = vpack.c.b16 %v648, %v647
    %v867 = vpack.c.b16 %v650, %v649
    %v868 = vpack.c.b16 %v652, %v651
    %v869 = vpack.c.b16 %v654, %v653
    %v870 = vpack.c.b16 %v656, %v655
    %v871 = vpack.c.b16 %v658, %v657
    %v872 = vpack.c.b16 %v660, %v659
    %v873 = vpack.c.b16 %v662, %v661
    %v874 = vpack.c.b16 %v664, %v663
    %v875 = vpack.c.b16 %v666, %v665
    %v876 = vpack.c.b16 %v668, %v667
    %v877 = vpack.c.b16 %v670, %v669
    %v878 = vpack.c.b16 %v672, %v671
    %v879 = vpack.c.b16 %v674, %v673
    %v880 = vpack.c.b16 %v676, %v675
    %v881 = vpack.c.b16 %v678, %v677
    %v882 = vpack.c.b16 %v680, %v679
    %v883 = vpack.c.b16 %v682, %v681
    %v884 = vpack.c.b16 %v684, %v683
    %v885 = vpack.c.b16 %v686, %v685
    %v886 = vpack.c.b16 %v688, %v687
    %v887 = vpack.c.b16 %v690, %v689
    %v888 = vpack.c.b16 %v692, %v691
    %v889 = vpack.c.b16 %v694, %v693
    %v890 = vpack.c.b16 %v696, %v695
    %v891 = vpack.c.b16 %v698, %v697
    %v892 = vpack.c.b16 %v700, %v699
    %v893 = vpack.c.b16 %v702, %v701
    %v894 = vpack.c.b16 %v704, %v703
    %v895 = vpack.c.b16 %v706, %v705
    %v896 = vpack.c.b16 %v708, %v707
    %v897 = vpack.c.b16 %v710, %v709
    %v898 = vpack.c.b16 %v712, %v711
    %v899 = vpack.c.b16 %v714, %v713
    %v900 = vpack.c.b16 %v716, %v715
    %v901 = vpack.c.b16 %v718, %v717
    %v902 = vpack.c.b16 %v720, %v719
    %v903 = vpack.c.b16 %v722, %v721
    %v904 = vpack.c.b16 %v724, %v723
    %v905 = vpack.c.b16 %v726, %v725
    %v906 = vpack.c.b16 %v728, %v727
    %v907 = vpack.c.b16 %v730, %v729
    %v908 = vpack.c.b16 %v732, %v731
    %v909 = vpack.c.b16 %v734, %v733
    %v910 = vpack.c.b16 %v736, %v735
    %v911 = vpack.c.b16 %v738, %v737
    %v912 = vpack.c.b16 %v740, %v739
    %v913 = vpack.c.b16 %v742, %v741
    %v914 = vpack.c.b16 %v744, %v743
    %v915 = vpack.c.b16 %v746, %v745
    %v916 = vpack.c.b16 %v748, %v747
    %v917 = vpack.c.b16 %v750, %v749
    %v918 = vpack.c.b16 %v752, %v751
    %v919 = vpack.c.b16 %v754, %v753
    %v920 = vpack.c.b16 %v756, %v755
    %v921 = vpack.c.b16 %v758, %v757
    %v922 = vpack.c.b16 %v760, %v759
    %v923 = vpack.c.b16 %v762, %v761
    %v924 = vpack.c.b16 %v764, %v763
    %v925 = vpack.c.b16 %v766, %v765
    %v926 = vpack.c.b16 %v768, %v767
    %v927 = vpack.c.b16 %v770, %v769
    %v928 = vpack.c.b16 %v772, %v771
    %v929 = vpack.c.b16 %v774, %v773
    %v930 = vpack.c.b16 %v776, %v775
    %v931 = vpack.c.b16 %v778, %v777
    %v932 = vpack.c.b16 %v780, %v779
    %v933 = vpack.c.b16 %v782, %v781
    %v934 = vpack.c.b16 %v784, %v783
    %v935 = vpack.c.b16 %v786, %v785
    %v936 = vpack.c.b16 %v788, %v787
    %v937 = vpack.c.b16 %v790, %v789
    %v938 = vpack.c.b16 %v792, %v791
    %v939 = vpack.c.b16 %v794, %v793
    %v940 = vpack.c.b16 %v796, %v795
    %v941 = vpack.c.b16 %v798, %v797
    %v942 = vpack.c.b16 %v800, %v799
    %v943 = vpack.c.b16 %v802, %v801
    %v944 = vpack.c.b16 %v804, %v803
    %v945 = vpack.c.b16 %v806, %v805
    %v946 = vpack.c.b16 %v808, %v807
    %v947 = vpack.c.b16 %v810, %v809
    %v948 = vpack.c.b16 %v812, %v811
    %v949 = vpack.c.b16 %v814, %v813
    %v950 = vpack.c.b16 %v816, %v815
    %v951 = vpack.c.b16 %v818, %v817
    %v952 = vpack.c.b16 %v820, %v819
    %v953 = vpack.c.b16 %v822, %v821
    %v954 = vpack.c.b16 %v824, %v823
    %v955 = vpack.c.b16 %v826, %v825
    %v956 = vpack.c.b16 %v828, %v827
    %v957 = vpack.c.b16 %v830, %v829
    %v958 = vpack.c.b16 %v832, %v831
    %v959 = vpack.c.b16 %v834, %v833
    %v960 = vpack.c.b16 %v836, %v835
    %v961 = vpack.c.b16 %v838, %v837
    %v962 = vpack.c.b16 %v840, %v839
    %v963 = vpack.c.b16 %v842, %v841
    %v964 = vpack.c.b16 %v844, %v843
    %v965 = vpack.c.b16 %v846, %v845
    %v966 = vpack.c.b16 %v848, %v847
    %v967 = vpack.c.b16 %v850, %v849
    %v968 = vpack.c.b16 %v852, %v851
    %v969 = vpack.c.b16 %v854, %v853
    %v970 = vpack.c.b16 %v856, %v855
    %v971 = vpack.c.b16 %v858, %v857
    %v972 = vpack.c.b16 %v860, %v859
    %1085 = vmatprep.subr.bf16.mxu0 0
    %1086 = vmatpush1.bf16.msra.mxu0 %v861
    %1087 = vmatprep.subr.bf16.mxu0 0
    %1088 = vmatpush1.bf16.msra.mxu0 %v862
    %1089 = vmatprep.subr.bf16.mxu0 0
    %1090 = vmatpush1.bf16.msra.mxu0 %v863
    %1091 = vmatprep.subr.bf16.mxu0 0
    %1092 = vmatpush1.bf16.msra.mxu0 %v864
    %1093 = vmatprep.subr.bf16.mxu0 0
    %1094 = vmatpush1.bf16.msra.mxu0 %v865
    %1095 = vmatprep.subr.bf16.mxu0 0
    %1096 = vmatpush1.bf16.msra.mxu0 %v866
    %1097 = vmatprep.subr.bf16.mxu0 0
    %1098 = vmatpush1.bf16.msra.mxu0 %v867
    %1099 = vmatprep.subr.bf16.mxu0 0
    %1100 = vmatpush1.bf16.msra.mxu0 %v868
    %1101 = vmatprep.subr.bf16.mxu0 0
    %1102 = vmatpush1.bf16.msra.mxu0 %v869
    %1103 = vmatprep.subr.bf16.mxu0 0
    %1104 = vmatpush1.bf16.msra.mxu0 %v870
    %1105 = vmatprep.subr.bf16.mxu0 0
    %1106 = vmatpush1.bf16.msra.mxu0 %v871
    %1107 = vmatprep.subr.bf16.mxu0 0
    %1108 = vmatpush1.bf16.msra.mxu0 %v872
    %1109 = vmatprep.subr.bf16.mxu0 0
    %1110 = vmatpush1.bf16.msra.mxu0 %v873
    %1111 = vmatprep.subr.bf16.mxu0 0
    %1112 = vmatpush1.bf16.msra.mxu0 %v874
    %1113 = vmatprep.subr.bf16.mxu0 0
    %1114 = vmatpush1.bf16.msra.mxu0 %v875
    %1115 = vmatprep.subr.bf16.mxu0 0
    %1116 = vmatpush1.bf16.msra.mxu0 %v876
    %1117 = vmatprep.mubr.bf16.mxu0 %v340
    %1118 = vmatmul.mubr.bf16.gmra.mrb[0].mxu0 %v326
    %v1119 = vpop.f32.mrb[0].mxu0
    %v1120 = vadd.f32 %v299, %v1119
    %v1121 = vpop.f32.mrb[0].mxu0
    %v1122 = vpop.f32.mrb[0].mxu0
    %v1123 = vpop.f32.mrb[0].mxu0
    %1124 = vdwg.mxu0
    %1125 = vmatprep.subr.bf16.mxu0 0
    %1126 = vmatpush1.bf16.msra.mxu0 %v877
    %1127 = vmatprep.subr.bf16.mxu0 0
    %1128 = vmatpush1.bf16.msra.mxu0 %v878
    %1129 = vmatprep.subr.bf16.mxu0 0
    %1130 = vmatpush1.bf16.msra.mxu0 %v879
    %1131 = vmatprep.subr.bf16.mxu0 0
    %1132 = vmatpush1.bf16.msra.mxu0 %v880
    %1133 = vmatprep.subr.bf16.mxu0 0
    %1134 = vmatpush1.bf16.msra.mxu0 %v881
    %1135 = vmatprep.subr.bf16.mxu0 0
    %1136 = vmatpush1.bf16.msra.mxu0 %v882
    %1137 = vmatprep.subr.bf16.mxu0 0
    %1138 = vmatpush1.bf16.msra.mxu0 %v883
    %1139 = vmatprep.subr.bf16.mxu0 0
    %1140 = vmatpush1.bf16.msra.mxu0 %v884
    %1141 = vmatprep.subr.bf16.mxu0 0
    %1142 = vmatpush1.bf16.msra.mxu0 %v885
    %1143 = vmatprep.subr.bf16.mxu0 0
    %1144 = vmatpush1.bf16.msra.mxu0 %v886
    %1145 = vmatprep.subr.bf16.mxu0 0
    %1146 = vmatpush1.bf16.msra.mxu0 %v887
    %1147 = vmatprep.subr.bf16.mxu0 0
    %1148 = vmatpush1.bf16.msra.mxu0 %v888
    %1149 = vmatprep.subr.bf16.mxu0 0
    %1150 = vmatpush1.bf16.msra.mxu0 %v889
    %1151 = vmatprep.subr.bf16.mxu0 0
    %1152 = vmatpush1.bf16.msra.mxu0 %v890
    %1153 = vmatprep.subr.bf16.mxu0 0
    %1154 = vmatpush1.bf16.msra.mxu0 %v891
    %1155 = vmatprep.subr.bf16.mxu0 0
    %1156 = vmatpush1.bf16.msra.mxu0 %v892
    %1157 = vmatprep.mubr.bf16.mxu0 %v350
    %1158 = vmatmul.mubr.bf16.gmra.mrb[0].mxu0 %v348
    %v1159 = vpop.f32.mrb[0].mxu0
    %v1160 = vadd.f32 %v1120, %v1159
    %v1161 = vpop.f32.mrb[0].mxu0
    %v1162 = vpop.f32.mrb[0].mxu0
    %v1163 = vpop.f32.mrb[0].mxu0
    %1164 = vdwg.mxu0
    %1165 = vmatprep.subr.bf16.mxu0 0
    %1166 = vmatpush1.bf16.msra.mxu0 %v893
    %1167 = vmatprep.subr.bf16.mxu0 0
    %1168 = vmatpush1.bf16.msra.mxu0 %v894
    %1169 = vmatprep.subr.bf16.mxu0 0
    %1170 = vmatpush1.bf16.msra.mxu0 %v895
    %1171 = vmatprep.subr.bf16.mxu0 0
    %1172 = vmatpush1.bf16.msra.mxu0 %v896
    %1173 = vmatprep.subr.bf16.mxu0 0
    %1174 = vmatpush1.bf16.msra.mxu0 %v897
    %1175 = vmatprep.subr.bf16.mxu0 0
    %1176 = vmatpush1.bf16.msra.mxu0 %v898
    %1177 = vmatprep.subr.bf16.mxu0 0
    %1178 = vmatpush1.bf16.msra.mxu0 %v899
    %1179 = vmatprep.subr.bf16.mxu0 0
    %1180 = vmatpush1.bf16.msra.mxu0 %v900
    %1181 = vmatprep.subr.bf16.mxu0 0
    %1182 = vmatpush1.bf16.msra.mxu0 %v901
    %1183 = vmatprep.subr.bf16.mxu0 0
    %1184 = vmatpush1.bf16.msra.mxu0 %v902
    %1185 = vmatprep.subr.bf16.mxu0 0
    %1186 = vmatpush1.bf16.msra.mxu0 %v903
    %1187 = vmatprep.subr.bf16.mxu0 0
    %1188 = vmatpush1.bf16.msra.mxu0 %v904
    %1189 = vmatprep.subr.bf16.mxu0 0
    %1190 = vmatpush1.bf16.msra.mxu0 %v905
    %1191 = vmatprep.subr.bf16.mxu0 0
    %1192 = vmatpush1.bf16.msra.mxu0 %v906
    %1193 = vmatprep.subr.bf16.mxu0 0
    %1194 = vmatpush1.bf16.msra.mxu0 %v907
    %1195 = vmatprep.subr.bf16.mxu0 0
    %1196 = vmatpush1.bf16.msra.mxu0 %v908
    %1197 = vmatprep.mubr.bf16.mxu0 %v347
    %1198 = vmatmul.mubr.bf16.gmra.mrb[0].mxu0 %v333
    %v1199 = vpop.f32.mrb[0].mxu0
    %v1200 = vadd.f32 %v1160, %v1199
    %v1201 = vpop.f32.mrb[0].mxu0
    %v1202 = vpop.f32.mrb[0].mxu0
    %v1203 = vpop.f32.mrb[0].mxu0
    %1204 = vdwg.mxu0
    %1205 = vmatprep.subr.bf16.mxu0 0
    %1206 = vmatpush1.bf16.msra.mxu0 %v909
    %1207 = vmatprep.subr.bf16.mxu0 0
    %1208 = vmatpush1.bf16.msra.mxu0 %v910
    %1209 = vmatprep.subr.bf16.mxu0 0
    %1210 = vmatpush1.bf16.msra.mxu0 %v911
    %1211 = vmatprep.subr.bf16.mxu0 0
    %1212 = vmatpush1.bf16.msra.mxu0 %v912
    %1213 = vmatprep.subr.bf16.mxu0 0
    %1214 = vmatpush1.bf16.msra.mxu0 %v913
    %1215 = vmatprep.subr.bf16.mxu0 0
    %1216 = vmatpush1.bf16.msra.mxu0 %v914
    %1217 = vmatprep.subr.bf16.mxu0 0
    %1218 = vmatpush1.bf16.msra.mxu0 %v915
    %1219 = vmatprep.subr.bf16.mxu0 0
    %1220 = vmatpush1.bf16.msra.mxu0 %v916
    %1221 = vmatprep.subr.bf16.mxu0 0
    %1222 = vmatpush1.bf16.msra.mxu0 %v917
    %1223 = vmatprep.subr.bf16.mxu0 0
    %1224 = vmatpush1.bf16.msra.mxu0 %v918
    %1225 = vmatprep.subr.bf16.mxu0 0
    %1226 = vmatpush1.bf16.msra.mxu0 %v919
    %1227 = vmatprep.subr.bf16.mxu0 0
    %1228 = vmatpush1.bf16.msra.mxu0 %v920
    %1229 = vmatprep.subr.bf16.mxu0 0
    %1230 = vmatpush1.bf16.msra.mxu0 %v921
    %1231 = vmatprep.subr.bf16.mxu0 0
    %1232 = vmatpush1.bf16.msra.mxu0 %v922
    %1233 = vmatprep.subr.bf16.mxu0 0
    %1234 = vmatpush1.bf16.msra.mxu0 %v923
    %1235 = vmatprep.subr.bf16.mxu0 0
    %1236 = vmatpush1.bf16.msra.mxu0 %v924
    %1237 = vmatprep.mubr.bf16.mxu0 %v351
    %1238 = vmatmul.mubr.bf16.gmra.mrb[0].mxu0 %v349
    %v1239 = vpop.f32.mrb[0].mxu0
    %v1240 = vadd.f32 %v1200, %v1239
    %v1241 = vpop.f32.mrb[0].mxu0
    %v1242 = vpop.f32.mrb[0].mxu0
    %v1243 = vpop.f32.mrb[0].mxu0
    %1244 = vdwg.mxu0
    %1245 = vmatprep.subr.bf16.mxu0 0
    %1246 = vmatpush1.bf16.msra.mxu0 %v925
    %1247 = vmatprep.subr.bf16.mxu0 0
    %1248 = vmatpush1.bf16.msra.mxu0 %v926
    %1249 = vmatprep.subr.bf16.mxu0 0
    %1250 = vmatpush1.bf16.msra.mxu0 %v927
    %1251 = vmatprep.subr.bf16.mxu0 0
    %1252 = vmatpush1.bf16.msra.mxu0 %v928
    %1253 = vmatprep.subr.bf16.mxu0 0
    %1254 = vmatpush1.bf16.msra.mxu0 %v929
    %1255 = vmatprep.subr.bf16.mxu0 0
    %1256 = vmatpush1.bf16.msra.mxu0 %v930
    %1257 = vmatprep.subr.bf16.mxu0 0
    %1258 = vmatpush1.bf16.msra.mxu0 %v931
    %1259 = vmatprep.subr.bf16.mxu0 0
    %1260 = vmatpush1.bf16.msra.mxu0 %v932
    %1261 = vmatprep.subr.bf16.mxu0 0
    %1262 = vmatpush1.bf16.msra.mxu0 %v933
    %1263 = vmatprep.subr.bf16.mxu0 0
    %1264 = vmatpush1.bf16.msra.mxu0 %v934
    %1265 = vmatprep.subr.bf16.mxu0 0
    %1266 = vmatpush1.bf16.msra.mxu0 %v935
    %1267 = vmatprep.subr.bf16.mxu0 0
    %1268 = vmatpush1.bf16.msra.mxu0 %v936
    %1269 = vmatprep.subr.bf16.mxu0 0
    %1270 = vmatpush1.bf16.msra.mxu0 %v937
    %1271 = vmatprep.subr.bf16.mxu0 0
    %1272 = vmatpush1.bf16.msra.mxu0 %v938
    %1273 = vmatprep.subr.bf16.mxu0 0
    %1274 = vmatpush1.bf16.msra.mxu0 %v939
    %1275 = vmatprep.subr.bf16.mxu0 0
    %1276 = vmatpush1.bf16.msra.mxu0 %v940
    %1277 = vmatprep.mubr.bf16.mxu0 %v389
    %1278 = vmatmul.mubr.bf16.gmra.mrb[0].mxu0 %v375
    %v1279 = vpop.f32.mrb[0].mxu0
    %v1280 = vadd.f32 %v1240, %v1279
    %v1281 = vpop.f32.mrb[0].mxu0
    %v1282 = vpop.f32.mrb[0].mxu0
    %v1283 = vpop.f32.mrb[0].mxu0
    %1284 = vdwg.mxu0
    %1285 = vmatprep.subr.bf16.mxu0 0
    %1286 = vmatpush1.bf16.msra.mxu0 %v941
    %1287 = vmatprep.subr.bf16.mxu0 0
    %1288 = vmatpush1.bf16.msra.mxu0 %v942
    %1289 = vmatprep.subr.bf16.mxu0 0
    %1290 = vmatpush1.bf16.msra.mxu0 %v943
    %1291 = vmatprep.subr.bf16.mxu0 0
    %1292 = vmatpush1.bf16.msra.mxu0 %v944
    %1293 = vmatprep.subr.bf16.mxu0 0
    %1294 = vmatpush1.bf16.msra.mxu0 %v945
    %1295 = vmatprep.subr.bf16.mxu0 0
    %1296 = vmatpush1.bf16.msra.mxu0 %v946
    %1297 = vmatprep.subr.bf16.mxu0 0
    %1298 = vmatpush1.bf16.msra.mxu0 %v947
    %1299 = vmatprep.subr.bf16.mxu0 0
    %1300 = vmatpush1.bf16.msra.mxu0 %v948
    %1301 = vmatprep.subr.bf16.mxu0 0
    %1302 = vmatpush1.bf16.msra.mxu0 %v949
    %1303 = vmatprep.subr.bf16.mxu0 0
    %1304 = vmatpush1.bf16.msra.mxu0 %v950
    %1305 = vmatprep.subr.bf16.mxu0 0
    %1306 = vmatpush1.bf16.msra.mxu0 %v951
    %1307 = vmatprep.subr.bf16.mxu0 0
    %1308 = vmatpush1.bf16.msra.mxu0 %v952
    %1309 = vmatprep.subr.bf16.mxu0 0
    %1310 = vmatpush1.bf16.msra.mxu0 %v953
    %1311 = vmatprep.subr.bf16.mxu0 0
    %1312 = vmatpush1.bf16.msra.mxu0 %v954
    %1313 = vmatprep.subr.bf16.mxu0 0
    %1314 = vmatpush1.bf16.msra.mxu0 %v955
    %1315 = vmatprep.subr.bf16.mxu0 0
    %1316 = vmatpush1.bf16.msra.mxu0 %v956
    %1317 = vmatprep.mubr.bf16.mxu0 %v398
    %1318 = vmatmul.mubr.bf16.gmra.mrb[0].mxu0 %v397
    %v1319 = vpop.f32.mrb[0].mxu0
    %v1320 = vadd.f32 %v1280, %v1319
    %v1321 = vpop.f32.mrb[0].mxu0
    %v1322 = vpop.f32.mrb[0].mxu0
    %v1323 = vpop.f32.mrb[0].mxu0
    %1324 = vdwg.mxu0
    %1325 = vmatprep.subr.bf16.mxu0 0
    %1326 = vmatpush1.bf16.msra.mxu0 %v957
    %1327 = vmatprep.subr.bf16.mxu0 0
    %1328 = vmatpush1.bf16.msra.mxu0 %v958
    %1329 = vmatprep.subr.bf16.mxu0 0
    %1330 = vmatpush1.bf16.msra.mxu0 %v959
    %1331 = vmatprep.subr.bf16.mxu0 0
    %1332 = vmatpush1.bf16.msra.mxu0 %v960
    %1333 = vmatprep.subr.bf16.mxu0 0
    %1334 = vmatpush1.bf16.msra.mxu0 %v961
    %1335 = vmatprep.subr.bf16.mxu0 0
    %1336 = vmatpush1.bf16.msra.mxu0 %v962
    %1337 = vmatprep.subr.bf16.mxu0 0
    %1338 = vmatpush1.bf16.msra.mxu0 %v963
    %1339 = vmatprep.subr.bf16.mxu0 0
    %1340 = vmatpush1.bf16.msra.mxu0 %v964
    %1341 = vmatprep.subr.bf16.mxu0 0
    %1342 = vmatpush1.bf16.msra.mxu0 %v965
    %1343 = vmatprep.subr.bf16.mxu0 0
    %1344 = vmatpush1.bf16.msra.mxu0 %v966
    %1345 = vmatprep.subr.bf16.mxu0 0
    %1346 = vmatpush1.bf16.msra.mxu0 %v967
    %1347 = vmatprep.subr.bf16.mxu0 0
    %1348 = vmatpush1.bf16.msra.mxu0 %v968
    %1349 = vmatprep.subr.bf16.mxu0 0
    %1350 = vmatpush1.bf16.msra.mxu0 %v969
    %1351 = vmatprep.subr.bf16.mxu0 0
    %1352 = vmatpush1.bf16.msra.mxu0 %v970
    %1353 = vmatprep.subr.bf16.mxu0 0
    %1354 = vmatpush1.bf16.msra.mxu0 %v971
    %1355 = vmatprep.subr.bf16.mxu0 0
    %1356 = vmatpush1.bf16.msra.mxu0 %v972
    %1357 = vmatprep.mubr.bf16.mxu0 %v396
    %1358 = vmatmul.mubr.bf16.gmra.mrb[0].mxu0 %v382
    %v1359 = vpop.f32.mrb[0].mxu0
    %v1360 = vadd.f32 %v1320, %v1359
    %v1361 = vpop.f32.mrb[0].mxu0
    %v1362 = vpop.f32.mrb[0].mxu0
    %v1363 = vpop.f32.mrb[0].mxu0
    %1364 = vdwg.mxu0
    %v1365 = vmax.f32 %v1360, 0.0
    %v1366 = vld [vmem:[%s1] sm:$0x3]
    %v1367 = vld [vmem:[%s8] sm:$0x3]
    %v1368 = vld [vmem:[%s9] sm:$0x1]
    %v1370 = vlaneseq
    %v1371 = vshrl.u32 %v1370, 7
    %v1372 = vsub.s32 0, %v1371
    %v1373 = vrot.slane %v1368, %v1372
    %vm1375 = vcmask 15360
    %v1377 = vsel %vm1375, %v1366, 0
    %vm1379 = vcmask 1041408
    %v1381 = vsel %vm1379, %v1367, 0
    %1383 = vmatprep.subr.mxu0 0.0
    %1384 = vmatpush1.msra.mxu0 %v1381
    %1385 = vmatprep.subr.mxu0 0.0
    %1386 = vmatpush1.msra.mxu0 0.0
    %1387 = vmatprep.subr.mxu0 0.0
    %1388 = vmatpush1.msra.mxu0 0.0
    %1389 = vmatprep.subr.mxu0 0.0
    %1390 = vmatpush1.msra.mxu0 0.0
    %1391 = vmatprep.subr.mxu0 0.0
    %1392 = vmatpush1.msra.mxu0 0.0
    %1393 = vmatprep.subr.mxu0 0.0
    %1394 = vmatpush1.msra.mxu0 0.0
    %1395 = vmatprep.subr.mxu0 0.0
    %1396 = vmatpush1.msra.mxu0 0.0
    %1397 = vmatprep.subr.mxu0 0.0
    %1398 = vmatpush1.msra.mxu0 0.0
    %1399 = vmatprep.subr.mxu0 0.0
    %1400 = vmatpush1.msra.mxu0 0.0
    %1401 = vmatprep.subr.mxu0 0.0
    %1402 = vmatpush1.msra.mxu0 0.0
    %1403 = vmatprep.subr.mxu0 0.0
    %1404 = vmatpush1.msra.mxu0 0.0
    %1405 = vmatprep.subr.mxu0 0.0
    %1406 = vmatpush1.msra.mxu0 0.0
    %1407 = vmatprep.subr.mxu0 0.0
    %1408 = vmatpush1.msra.mxu0 0.0
    %1409 = vmatprep.subr.mxu0 0.0
    %1410 = vmatpush1.msra.mxu0 0.0
    %1411 = vmatprep.subr.mxu0 0.0
    %1412 = vmatpush1.msra.mxu0 0.0
    %1413 = vmatprep.subr.mxu0 0.0
    %1414 = vmatpush1.msra.mxu0 0.0
    %1415 = vmatprep.subr.mxu0 0.0
    %1416 = vmatpush1.msra.mxu0 0.0
    %1417 = vmatprep.subr.mxu0 0.0
    %1418 = vmatpush1.msra.mxu0 0.0
    %1419 = vmatprep.subr.mxu0 0.0
    %1420 = vmatpush1.msra.mxu0 0.0
    %1421 = vmatprep.subr.mxu0 0.0
    %1422 = vmatpush1.msra.mxu0 0.0
    %1423 = vmatprep.subr.mxu0 0.0
    %1424 = vmatpush1.msra.mxu0 0.0
    %1425 = vmatprep.subr.mxu0 0.0
    %1426 = vmatpush1.msra.mxu0 0.0
    %1427 = vmatprep.subr.mxu0 0.0
    %1428 = vmatpush1.msra.mxu0 0.0
    %1429 = vmatprep.subr.mxu0 0.0
    %1430 = vmatpush1.msra.mxu0 0.0
    %1431 = vmatprep.subr.mxu0 0.0
    %1432 = vmatpush1.msra.mxu0 0.0
    %1433 = vmatprep.subr.mxu0 0.0
    %1434 = vmatpush1.msra.mxu0 0.0
    %1435 = vmatprep.subr.mxu0 0.0
    %1436 = vmatpush1.msra.mxu0 0.0
    %1437 = vmatprep.subr.mxu0 0.0
    %1438 = vmatpush1.msra.mxu0 0.0
    %1439 = vmatprep.subr.mxu0 0.0
    %1440 = vmatpush1.msra.mxu0 0.0
    %1441 = vmatprep.subr.mxu0 0.0
    %1442 = vmatpush1.msra.mxu0 0.0
    %1443 = vmatprep.subr.mxu0 0.0
    %1444 = vmatpush1.msra.mxu0 0.0
    %1445 = vmatprep.subr.mxu0 0.0
    %1446 = vmatpush1.msra.mxu0 0.0
    %1447 = vmatprep.mubr.f32.mxu0 0.0
    %1448 = vmatmul.mubr.f32.gmra.mrb[0].mxu0 %v1377
    %v1449 = vpop.f32.mrb[0].mxu0
    %v1450 = vadd.f32 %v1373, %v1449
    %v1451 = vpop.f32.mrb[0].mxu0
    %1452 = vdwg.mxu0
    %v1453 = vmax.f32 %v1450, 0.0
    %v1454 = vpack.c.bf16 %v1365, %v1365
    %v1455 = vpack.c.bf16 %v1453, %v1453
    %v1456 = vld [vmem:[%s10] sm:$0xf]
    %v1457 = vld [vmem:[%s10 + $0x4] sm:$0xf]
    %v1458 = vld [vmem:[%s10 + $0x8] sm:$0xf]
    %v1459 = vld [vmem:[%s10 + $0xc] sm:$0xf]
    %v1460 = vld [vmem:[%s10 + $0x10] sm:$0xf]
    %v1461 = vld [vmem:[%s10 + $0x14] sm:$0xf]
    %v1462 = vld [vmem:[%s10 + $0x18] sm:$0xf]
    %v1463 = vld [vmem:[%s10 + $0x1c] sm:$0xf]
    %v1464 = vld [vmem:[%s10 + $0x20] sm:$0xf]
    %v1465 = vld [vmem:[%s10 + $0x24] sm:$0xf]
    %v1466 = vld [vmem:[%s10 + $0x28] sm:$0xf]
    %v1467 = vld [vmem:[%s10 + $0x2c] sm:$0xf]
    %v1468 = vld [vmem:[%s10 + $0x30] sm:$0xf]
    %v1469 = vld [vmem:[%s10 + $0x34] sm:$0xf]
    %v1470 = vld [vmem:[%s10 + $0x38] sm:$0xf]
    %v1471 = vld [vmem:[%s10 + $0x3c] sm:$0xf]
    %v1472 = vld [vmem:[%s10 + $0x40] sm:$0xf]
    %v1473 = vld [vmem:[%s10 + $0x44] sm:$0xf]
    %v1474 = vld [vmem:[%s10 + $0x48] sm:$0xf]
    %v1475 = vld [vmem:[%s10 + $0x4c] sm:$0xf]
    %v1476 = vld [vmem:[%s10 + $0x50] sm:$0xf]
    %v1477 = vld [vmem:[%s10 + $0x54] sm:$0xf]
    %v1478 = vld [vmem:[%s10 + $0x58] sm:$0xf]
    %v1479 = vld [vmem:[%s10 + $0x5c] sm:$0xf]
    %v1480 = vld [vmem:[%s10 + $0x60] sm:$0xf]
    %v1481 = vld [vmem:[%s10 + $0x64] sm:$0xf]
    %v1482 = vld [vmem:[%s10 + $0x68] sm:$0xf]
    %v1483 = vld [vmem:[%s10 + $0x6c] sm:$0xf]
    %v1484 = vld [vmem:[%s10 + $0x70] sm:$0xf]
    %v1485 = vld [vmem:[%s10 + $0x74] sm:$0xf]
    %v1486 = vld [vmem:[%s10 + $0x78] sm:$0xf]
    %v1487 = vld [vmem:[%s10 + $0x7c] sm:$0xf]
    %v1488 = vld [vmem:[%s11] sm:$0x1]
    %v1490 = vlaneseq
    %v1491 = vshrl.u32 %v1490, 7
    %v1492 = vsub.s32 0, %v1491
    %v1493 = vrot.slane %v1488, %v1492
    %v1527 = vunpack.c.l.b16 %v1456
    %v1528 = vunpack.c.l.b16 %v1457
    %v1529 = vunpack.c.l.b16 %v1458
    %v1530 = vunpack.c.l.b16 %v1459
    %v1531 = vunpack.c.l.b16 %v1460
    %v1532 = vunpack.c.l.b16 %v1461
    %v1533 = vunpack.c.l.b16 %v1462
    %v1534 = vunpack.c.l.b16 %v1463
    %v1535 = vunpack.c.l.b16 %v1464
    %v1536 = vunpack.c.l.b16 %v1465
    %v1537 = vunpack.c.l.b16 %v1466
    %v1538 = vunpack.c.l.b16 %v1467
    %v1539 = vunpack.c.l.b16 %v1468
    %v1540 = vunpack.c.l.b16 %v1469
    %v1541 = vunpack.c.l.b16 %v1470
    %v1542 = vunpack.c.l.b16 %v1471
    %v1543 = vunpack.c.l.b16 %v1472
    %v1544 = vunpack.c.l.b16 %v1473
    %v1545 = vunpack.c.l.b16 %v1474
    %v1546 = vunpack.c.l.b16 %v1475
    %v1547 = vunpack.c.l.b16 %v1476
    %v1548 = vunpack.c.l.b16 %v1477
    %v1549 = vunpack.c.l.b16 %v1478
    %v1550 = vunpack.c.l.b16 %v1479
    %v1551 = vunpack.c.l.b16 %v1480
    %v1552 = vunpack.c.l.b16 %v1481
    %v1553 = vunpack.c.l.b16 %v1482
    %v1554 = vunpack.c.l.b16 %v1483
    %v1555 = vunpack.c.l.b16 %v1484
    %v1556 = vunpack.c.l.b16 %v1485
    %v1557 = vunpack.c.l.b16 %v1486
    %v1558 = vunpack.c.l.b16 %v1487
    %v1559 = vpack.c.b16 %v1528, %v1527
    %v1560 = vpack.c.b16 %v1530, %v1529
    %v1561 = vpack.c.b16 %v1532, %v1531
    %v1562 = vpack.c.b16 %v1534, %v1533
    %v1563 = vpack.c.b16 %v1536, %v1535
    %v1564 = vpack.c.b16 %v1538, %v1537
    %v1565 = vpack.c.b16 %v1540, %v1539
    %v1566 = vpack.c.b16 %v1542, %v1541
    %v1567 = vpack.c.b16 %v1544, %v1543
    %v1568 = vpack.c.b16 %v1546, %v1545
    %v1569 = vpack.c.b16 %v1548, %v1547
    %v1570 = vpack.c.b16 %v1550, %v1549
    %v1571 = vpack.c.b16 %v1552, %v1551
    %v1572 = vpack.c.b16 %v1554, %v1553
    %v1573 = vpack.c.b16 %v1556, %v1555
    %v1574 = vpack.c.b16 %v1558, %v1557
    %1591 = vmatprep.subr.bf16.mxu0 0
    %1592 = vmatpush1.bf16.msra.mxu0 %v1559
    %1593 = vmatprep.subr.bf16.mxu0 0
    %1594 = vmatpush1.bf16.msra.mxu0 %v1560
    %1595 = vmatprep.subr.bf16.mxu0 0
    %1596 = vmatpush1.bf16.msra.mxu0 %v1561
    %1597 = vmatprep.subr.bf16.mxu0 0
    %1598 = vmatpush1.bf16.msra.mxu0 %v1562
    %1599 = vmatprep.subr.bf16.mxu0 0
    %1600 = vmatpush1.bf16.msra.mxu0 %v1563
    %1601 = vmatprep.subr.bf16.mxu0 0
    %1602 = vmatpush1.bf16.msra.mxu0 %v1564
    %1603 = vmatprep.subr.bf16.mxu0 0
    %1604 = vmatpush1.bf16.msra.mxu0 %v1565
    %1605 = vmatprep.subr.bf16.mxu0 0
    %1606 = vmatpush1.bf16.msra.mxu0 %v1566
    %1607 = vmatprep.subr.bf16.mxu0 0
    %1608 = vmatpush1.bf16.msra.mxu0 %v1567
    %1609 = vmatprep.subr.bf16.mxu0 0
    %1610 = vmatpush1.bf16.msra.mxu0 %v1568
    %1611 = vmatprep.subr.bf16.mxu0 0
    %1612 = vmatpush1.bf16.msra.mxu0 %v1569
    %1613 = vmatprep.subr.bf16.mxu0 0
    %1614 = vmatpush1.bf16.msra.mxu0 %v1570
    %1615 = vmatprep.subr.bf16.mxu0 0
    %1616 = vmatpush1.bf16.msra.mxu0 %v1571
    %1617 = vmatprep.subr.bf16.mxu0 0
    %1618 = vmatpush1.bf16.msra.mxu0 %v1572
    %1619 = vmatprep.subr.bf16.mxu0 0
    %1620 = vmatpush1.bf16.msra.mxu0 %v1573
    %1621 = vmatprep.subr.bf16.mxu0 0
    %1622 = vmatpush1.bf16.msra.mxu0 %v1574
    %1623 = vmatprep.mubr.bf16.mxu0 %v1455
    %1624 = vmatmul.mubr.bf16.gmra.mrb[0].mxu0 %v1454
    %v1625 = vpop.f32.mrb[0].mxu0
    %v1626 = vadd.f32 %v1493, %v1625
    %v1627 = vpop.f32.mrb[0].mxu0
    %v1628 = vpop.f32.mrb[0].mxu0
    %v1629 = vpop.f32.mrb[0].mxu0
    %1630 = vdwg.mxu0
    %v1631 = vmax.f32 %v1626, 0.0
    %v1632 = vld [vmem:[%s2] sm:$0x3]
    %v1633 = vld [vmem:[%s3] sm:$0x3]
    %v1634 = vpack.c.bf16 %v1631, %v1631
    %v1635 = vpack.c.bf16 %v1632, %v1632
    %v1636 = vld [vmem:[%s12] sm:$0xff]
    %v1637 = vld [vmem:[%s12 + $0x8] sm:$0xff]
    %v1638 = vld [vmem:[%s12 + $0x10] sm:$0xff]
    %v1639 = vld [vmem:[%s12 + $0x18] sm:$0xff]
    %v1640 = vld [vmem:[%s12 + $0x20] sm:$0xff]
    %v1641 = vld [vmem:[%s12 + $0x28] sm:$0xff]
    %v1642 = vld [vmem:[%s12 + $0x30] sm:$0xff]
    %v1643 = vld [vmem:[%s12 + $0x38] sm:$0xff]
    %v1644 = vld [vmem:[%s12 + $0x40] sm:$0xff]
    %v1645 = vld [vmem:[%s12 + $0x48] sm:$0xff]
    %v1646 = vld [vmem:[%s12 + $0x50] sm:$0xff]
    %v1647 = vld [vmem:[%s12 + $0x58] sm:$0xff]
    %v1648 = vld [vmem:[%s12 + $0x60] sm:$0xff]
    %v1649 = vld [vmem:[%s12 + $0x68] sm:$0xff]
    %v1650 = vld [vmem:[%s12 + $0x70] sm:$0xff]
    %v1651 = vld [vmem:[%s12 + $0x78] sm:$0xff]
    %v1652 = vld [vmem:[%s12 + $0x80] sm:$0xff]
    %v1653 = vld [vmem:[%s12 + $0x88] sm:$0xff]
    %v1654 = vld [vmem:[%s12 + $0x90] sm:$0xff]
    %v1655 = vld [vmem:[%s12 + $0x98] sm:$0xff]
    %v1656 = vld [vmem:[%s12 + $0xa0] sm:$0xff]
    %v1657 = vld [vmem:[%s12 + $0xa8] sm:$0xff]
    %v1658 = vld [vmem:[%s12 + $0xb0] sm:$0xff]
    %v1659 = vld [vmem:[%s12 + $0xb8] sm:$0xff]
    %v1660 = vld [vmem:[%s12 + $0xc0] sm:$0xff]
    %v1661 = vld [vmem:[%s12 + $0xc8] sm:$0xff]
    %v1662 = vld [vmem:[%s12 + $0xd0] sm:$0xff]
    %v1663 = vld [vmem:[%s12 + $0xd8] sm:$0xff]
    %v1664 = vld [vmem:[%s12 + $0xe0] sm:$0xff]
    %v1665 = vld [vmem:[%s12 + $0xe8] sm:$0xff]
    %v1666 = vld [vmem:[%s12 + $0xf0] sm:$0xff]
    %v1667 = vld [vmem:[%s12 + $0xf8] sm:$0xff]
    %v1668 = vld [vmem:[%s12 + $0x100] sm:$0xff]
    %v1669 = vld [vmem:[%s12 + $0x108] sm:$0xff]
    %v1670 = vld [vmem:[%s12 + $0x110] sm:$0xff]
    %v1671 = vld [vmem:[%s12 + $0x118] sm:$0xff]
    %v1672 = vld [vmem:[%s12 + $0x120] sm:$0xff]
    %v1673 = vld [vmem:[%s12 + $0x128] sm:$0xff]
    %v1674 = vld [vmem:[%s12 + $0x130] sm:$0xff]
    %v1675 = vld [vmem:[%s12 + $0x138] sm:$0xff]
    %v1676 = vld [vmem:[%s12 + $0x140] sm:$0xff]
    %v1677 = vld [vmem:[%s12 + $0x148] sm:$0xff]
    %v1678 = vld [vmem:[%s12 + $0x150] sm:$0xff]
    %v1679 = vld [vmem:[%s12 + $0x158] sm:$0xff]
    %v1680 = vld [vmem:[%s12 + $0x160] sm:$0xff]
    %v1681 = vld [vmem:[%s12 + $0x168] sm:$0xff]
    %v1682 = vld [vmem:[%s12 + $0x170] sm:$0xff]
    %v1683 = vld [vmem:[%s12 + $0x178] sm:$0xff]
    %v1684 = vld [vmem:[%s12 + $0x180] sm:$0xff]
    %v1685 = vld [vmem:[%s12 + $0x188] sm:$0xff]
    %v1686 = vld [vmem:[%s12 + $0x190] sm:$0xff]
    %v1687 = vld [vmem:[%s12 + $0x198] sm:$0xff]
    %v1688 = vld [vmem:[%s12 + $0x1a0] sm:$0xff]
    %v1689 = vld [vmem:[%s12 + $0x1a8] sm:$0xff]
    %v1690 = vld [vmem:[%s12 + $0x1b0] sm:$0xff]
    %v1691 = vld [vmem:[%s12 + $0x1b8] sm:$0xff]
    %v1692 = vld [vmem:[%s12 + $0x1c0] sm:$0xff]
    %v1693 = vld [vmem:[%s12 + $0x1c8] sm:$0xff]
    %v1694 = vld [vmem:[%s12 + $0x1d0] sm:$0xff]
    %v1695 = vld [vmem:[%s12 + $0x1d8] sm:$0xff]
    %v1696 = vld [vmem:[%s12 + $0x1e0] sm:$0xff]
    %v1697 = vld [vmem:[%s12 + $0x1e8] sm:$0xff]
    %v1698 = vld [vmem:[%s12 + $0x1f0] sm:$0xff]
    %v1699 = vld [vmem:[%s12 + $0x1f8] sm:$0xff]
    %v1700 = vld [vmem:[%s13] sm:$0xf]
    %v1702 = vlaneseq
    %v1703 = vshrl.u32 %v1702, 7
    %v1704 = vsub.s32 0, %v1703
    %v1705 = vrot.slane %v1700, %v1704
    %v1706 = vlaneseq
    %v1707 = vshrl.u32 %v1706, 7
    %v1708 = vsub.s32 1, %v1707
    %v1709 = vrot.slane %v1700, %v1708
    %v1710 = vlaneseq
    %v1711 = vshrl.u32 %v1710, 7
    %v1712 = vsub.s32 2, %v1711
    %v1713 = vrot.slane %v1700, %v1712
    %v1714 = vlaneseq
    %v1715 = vshrl.u32 %v1714, 7
    %v1716 = vsub.s32 3, %v1715
    %v1717 = vrot.slane %v1700, %v1716
    %v1786 = vunpack.c.l.b16 %v1636
    %v1787 = vunpack.c.h.b16 %v1636
    %v1788 = vunpack.c.l.b16 %v1637
    %v1789 = vunpack.c.h.b16 %v1637
    %v1790 = vunpack.c.l.b16 %v1638
    %v1791 = vunpack.c.h.b16 %v1638
    %v1792 = vunpack.c.l.b16 %v1639
    %v1793 = vunpack.c.h.b16 %v1639
    %v1794 = vunpack.c.l.b16 %v1640
    %v1795 = vunpack.c.h.b16 %v1640
    %v1796 = vunpack.c.l.b16 %v1641
    %v1797 = vunpack.c.h.b16 %v1641
    %v1798 = vunpack.c.l.b16 %v1642
    %v1799 = vunpack.c.h.b16 %v1642
    %v1800 = vunpack.c.l.b16 %v1643
    %v1801 = vunpack.c.h.b16 %v1643
    %v1802 = vunpack.c.l.b16 %v1644
    %v1803 = vunpack.c.h.b16 %v1644
    %v1804 = vunpack.c.l.b16 %v1645
    %v1805 = vunpack.c.h.b16 %v1645
    %v1806 = vunpack.c.l.b16 %v1646
    %v1807 = vunpack.c.h.b16 %v1646
    %v1808 = vunpack.c.l.b16 %v1647
    %v1809 = vunpack.c.h.b16 %v1647
    %v1810 = vunpack.c.l.b16 %v1648
    %v1811 = vunpack.c.h.b16 %v1648
    %v1812 = vunpack.c.l.b16 %v1649
    %v1813 = vunpack.c.h.b16 %v1649
    %v1814 = vunpack.c.l.b16 %v1650
    %v1815 = vunpack.c.h.b16 %v1650
    %v1816 = vunpack.c.l.b16 %v1651
    %v1817 = vunpack.c.h.b16 %v1651
    %v1818 = vunpack.c.l.b16 %v1652
    %v1819 = vunpack.c.h.b16 %v1652
    %v1820 = vunpack.c.l.b16 %v1653
    %v1821 = vunpack.c.h.b16 %v1653
    %v1822 = vunpack.c.l.b16 %v1654
    %v1823 = vunpack.c.h.b16 %v1654
    %v1824 = vunpack.c.l.b16 %v1655
    %v1825 = vunpack.c.h.b16 %v1655
    %v1826 = vunpack.c.l.b16 %v1656
    %v1827 = vunpack.c.h.b16 %v1656
    %v1828 = vunpack.c.l.b16 %v1657
    %v1829 = vunpack.c.h.b16 %v1657
    %v1830 = vunpack.c.l.b16 %v1658
    %v1831 = vunpack.c.h.b16 %v1658
    %v1832 = vunpack.c.l.b16 %v1659
    %v1833 = vunpack.c.h.b16 %v1659
    %v1834 = vunpack.c.l.b16 %v1660
    %v1835 = vunpack.c.h.b16 %v1660
    %v1836 = vunpack.c.l.b16 %v1661
    %v1837 = vunpack.c.h.b16 %v1661
    %v1838 = vunpack.c.l.b16 %v1662
    %v1839 = vunpack.c.h.b16 %v1662
    %v1840 = vunpack.c.l.b16 %v1663
    %v1841 = vunpack.c.h.b16 %v1663
    %v1842 = vunpack.c.l.b16 %v1664
    %v1843 = vunpack.c.h.b16 %v1664
    %v1844 = vunpack.c.l.b16 %v1665
    %v1845 = vunpack.c.h.b16 %v1665
    %v1846 = vunpack.c.l.b16 %v1666
    %v1847 = vunpack.c.h.b16 %v1666
    %v1848 = vunpack.c.l.b16 %v1667
    %v1849 = vunpack.c.h.b16 %v1667
    %v1850 = vunpack.c.l.b16 %v1668
    %v1851 = vunpack.c.h.b16 %v1668
    %v1852 = vunpack.c.l.b16 %v1669
    %v1853 = vunpack.c.h.b16 %v1669
    %v1854 = vunpack.c.l.b16 %v1670
    %v1855 = vunpack.c.h.b16 %v1670
    %v1856 = vunpack.c.l.b16 %v1671
    %v1857 = vunpack.c.h.b16 %v1671
    %v1858 = vunpack.c.l.b16 %v1672
    %v1859 = vunpack.c.h.b16 %v1672
    %v1860 = vunpack.c.l.b16 %v1673
    %v1861 = vunpack.c.h.b16 %v1673
    %v1862 = vunpack.c.l.b16 %v1674
    %v1863 = vunpack.c.h.b16 %v1674
    %v1864 = vunpack.c.l.b16 %v1675
    %v1865 = vunpack.c.h.b16 %v1675
    %v1866 = vunpack.c.l.b16 %v1676
    %v1867 = vunpack.c.h.b16 %v1676
    %v1868 = vunpack.c.l.b16 %v1677
    %v1869 = vunpack.c.h.b16 %v1677
    %v1870 = vunpack.c.l.b16 %v1678
    %v1871 = vunpack.c.h.b16 %v1678
    %v1872 = vunpack.c.l.b16 %v1679
    %v1873 = vunpack.c.h.b16 %v1679
    %v1874 = vunpack.c.l.b16 %v1680
    %v1875 = vunpack.c.h.b16 %v1680
    %v1876 = vunpack.c.l.b16 %v1681
    %v1877 = vunpack.c.h.b16 %v1681
    %v1878 = vunpack.c.l.b16 %v1682
    %v1879 = vunpack.c.h.b16 %v1682
    %v1880 = vunpack.c.l.b16 %v1683
    %v1881 = vunpack.c.h.b16 %v1683
    %v1882 = vunpack.c.l.b16 %v1684
    %v1883 = vunpack.c.h.b16 %v1684
    %v1884 = vunpack.c.l.b16 %v1685
    %v1885 = vunpack.c.h.b16 %v1685
    %v1886 = vunpack.c.l.b16 %v1686
    %v1887 = vunpack.c.h.b16 %v1686
    %v1888 = vunpack.c.l.b16 %v1687
    %v1889 = vunpack.c.h.b16 %v1687
    %v1890 = vunpack.c.l.b16 %v1688
    %v1891 = vunpack.c.h.b16 %v1688
    %v1892 = vunpack.c.l.b16 %v1689
    %v1893 = vunpack.c.h.b16 %v1689
    %v1894 = vunpack.c.l.b16 %v1690
    %v1895 = vunpack.c.h.b16 %v1690
    %v1896 = vunpack.c.l.b16 %v1691
    %v1897 = vunpack.c.h.b16 %v1691
    %v1898 = vunpack.c.l.b16 %v1692
    %v1899 = vunpack.c.h.b16 %v1692
    %v1900 = vunpack.c.l.b16 %v1693
    %v1901 = vunpack.c.h.b16 %v1693
    %v1902 = vunpack.c.l.b16 %v1694
    %v1903 = vunpack.c.h.b16 %v1694
    %v1904 = vunpack.c.l.b16 %v1695
    %v1905 = vunpack.c.h.b16 %v1695
    %v1906 = vunpack.c.l.b16 %v1696
    %v1907 = vunpack.c.h.b16 %v1696
    %v1908 = vunpack.c.l.b16 %v1697
    %v1909 = vunpack.c.h.b16 %v1697
    %v1910 = vunpack.c.l.b16 %v1698
    %v1911 = vunpack.c.h.b16 %v1698
    %v1912 = vunpack.c.l.b16 %v1699
    %v1913 = vunpack.c.h.b16 %v1699
    %v1914 = vpack.c.b16 %v1790, %v1786
    %v1915 = vpack.c.b16 %v1791, %v1787
    %v1916 = vpack.c.b16 %v1792, %v1788
    %v1917 = vpack.c.b16 %v1793, %v1789
    %v1918 = vpack.c.b16 %v1798, %v1794
    %v1919 = vpack.c.b16 %v1799, %v1795
    %v1920 = vpack.c.b16 %v1800, %v1796
    %v1921 = vpack.c.b16 %v1801, %v1797
    %v1922 = vpack.c.b16 %v1806, %v1802
    %v1923 = vpack.c.b16 %v1807, %v1803
    %v1924 = vpack.c.b16 %v1808, %v1804
    %v1925 = vpack.c.b16 %v1809, %v1805
    %v1926 = vpack.c.b16 %v1814, %v1810
    %v1927 = vpack.c.b16 %v1815, %v1811
    %v1928 = vpack.c.b16 %v1816, %v1812
    %v1929 = vpack.c.b16 %v1817, %v1813
    %v1930 = vpack.c.b16 %v1822, %v1818
    %v1931 = vpack.c.b16 %v1823, %v1819
    %v1932 = vpack.c.b16 %v1824, %v1820
    %v1933 = vpack.c.b16 %v1825, %v1821
    %v1934 = vpack.c.b16 %v1830, %v1826
    %v1935 = vpack.c.b16 %v1831, %v1827
    %v1936 = vpack.c.b16 %v1832, %v1828
    %v1937 = vpack.c.b16 %v1833, %v1829
    %v1938 = vpack.c.b16 %v1838, %v1834
    %v1939 = vpack.c.b16 %v1839, %v1835
    %v1940 = vpack.c.b16 %v1840, %v1836
    %v1941 = vpack.c.b16 %v1841, %v1837
    %v1942 = vpack.c.b16 %v1846, %v1842
    %v1943 = vpack.c.b16 %v1847, %v1843
    %v1944 = vpack.c.b16 %v1848, %v1844
    %v1945 = vpack.c.b16 %v1849, %v1845
    %v1946 = vpack.c.b16 %v1854, %v1850
    %v1947 = vpack.c.b16 %v1855, %v1851
    %v1948 = vpack.c.b16 %v1856, %v1852
    %v1949 = vpack.c.b16 %v1857, %v1853
    %v1950 = vpack.c.b16 %v1862, %v1858
    %v1951 = vpack.c.b16 %v1863, %v1859
    %v1952 = vpack.c.b16 %v1864, %v1860
    %v1953 = vpack.c.b16 %v1865, %v1861
    %v1954 = vpack.c.b16 %v1870, %v1866
    %v1955 = vpack.c.b16 %v1871, %v1867
    %v1956 = vpack.c.b16 %v1872, %v1868
    %v1957 = vpack.c.b16 %v1873, %v1869
    %v1958 = vpack.c.b16 %v1878, %v1874
    %v1959 = vpack.c.b16 %v1879, %v1875
    %v1960 = vpack.c.b16 %v1880, %v1876
    %v1961 = vpack.c.b16 %v1881, %v1877
    %v1962 = vpack.c.b16 %v1886, %v1882
    %v1963 = vpack.c.b16 %v1887, %v1883
    %v1964 = vpack.c.b16 %v1888, %v1884
    %v1965 = vpack.c.b16 %v1889, %v1885
    %v1966 = vpack.c.b16 %v1894, %v1890
    %v1967 = vpack.c.b16 %v1895, %v1891
    %v1968 = vpack.c.b16 %v1896, %v1892
    %v1969 = vpack.c.b16 %v1897, %v1893
    %v1970 = vpack.c.b16 %v1902, %v1898
    %v1971 = vpack.c.b16 %v1903, %v1899
    %v1972 = vpack.c.b16 %v1904, %v1900
    %v1973 = vpack.c.b16 %v1905, %v1901
    %v1974 = vpack.c.b16 %v1910, %v1906
    %v1975 = vpack.c.b16 %v1911, %v1907
    %v1976 = vpack.c.b16 %v1912, %v1908
    %v1977 = vpack.c.b16 %v1913, %v1909
    %2042 = vmatprep.subr.bf16.mxu0 %v1915
    %2043 = vmatpush1.bf16.msra.mxu0 %v1914
    %2044 = vmatprep.subr.bf16.mxu0 %v1919
    %2045 = vmatpush1.bf16.msra.mxu0 %v1918
    %2046 = vmatprep.subr.bf16.mxu0 %v1923
    %2047 = vmatpush1.bf16.msra.mxu0 %v1922
    %2048 = vmatprep.subr.bf16.mxu0 %v1927
    %2049 = vmatpush1.bf16.msra.mxu0 %v1926
    %2050 = vmatprep.subr.bf16.mxu0 %v1931
    %2051 = vmatpush1.bf16.msra.mxu0 %v1930
    %2052 = vmatprep.subr.bf16.mxu0 %v1935
    %2053 = vmatpush1.bf16.msra.mxu0 %v1934
    %2054 = vmatprep.subr.bf16.mxu0 %v1939
    %2055 = vmatpush1.bf16.msra.mxu0 %v1938
    %2056 = vmatprep.subr.bf16.mxu0 %v1943
    %2057 = vmatpush1.bf16.msra.mxu0 %v1942
    %2058 = vmatprep.subr.bf16.mxu0 %v1947
    %2059 = vmatpush1.bf16.msra.mxu0 %v1946
    %2060 = vmatprep.subr.bf16.mxu0 %v1951
    %2061 = vmatpush1.bf16.msra.mxu0 %v1950
    %2062 = vmatprep.subr.bf16.mxu0 %v1955
    %2063 = vmatpush1.bf16.msra.mxu0 %v1954
    %2064 = vmatprep.subr.bf16.mxu0 %v1959
    %2065 = vmatpush1.bf16.msra.mxu0 %v1958
    %2066 = vmatprep.subr.bf16.mxu0 %v1963
    %2067 = vmatpush1.bf16.msra.mxu0 %v1962
    %2068 = vmatprep.subr.bf16.mxu0 %v1967
    %2069 = vmatpush1.bf16.msra.mxu0 %v1966
    %2070 = vmatprep.subr.bf16.mxu0 %v1971
    %2071 = vmatpush1.bf16.msra.mxu0 %v1970
    %2072 = vmatprep.subr.bf16.mxu0 %v1975
    %2073 = vmatpush1.bf16.msra.mxu0 %v1974
    %2074 = vmatprep.mubr.bf16.mxu0 %v1635
    %2075 = vmatmul.mubr.bf16.gmra.mrb[0].mxu0 %v1634
    %v2076 = vpop.f32.mrb[0].mxu0
    %v2077 = vadd.f32 %v1705, %v2076
    %v2078 = vpop.f32.mrb[0].mxu0
    %v2079 = vadd.f32 %v1709, %v2078
    %v2080 = vpop.f32.mrb[0].mxu0
    %v2081 = vpop.f32.mrb[0].mxu0
    %2082 = vdwg.mxu0
    %2083 = vmatprep.subr.bf16.mxu0 %v1917
    %2084 = vmatpush1.bf16.msra.mxu0 %v1916
    %2085 = vmatprep.subr.bf16.mxu0 %v1921
    %2086 = vmatpush1.bf16.msra.mxu0 %v1920
    %2087 = vmatprep.subr.bf16.mxu0 %v1925
    %2088 = vmatpush1.bf16.msra.mxu0 %v1924
    %2089 = vmatprep.subr.bf16.mxu0 %v1929
    %2090 = vmatpush1.bf16.msra.mxu0 %v1928
    %2091 = vmatprep.subr.bf16.mxu0 %v1933
    %2092 = vmatpush1.bf16.msra.mxu0 %v1932
    %2093 = vmatprep.subr.bf16.mxu0 %v1937
    %2094 = vmatpush1.bf16.msra.mxu0 %v1936
    %2095 = vmatprep.subr.bf16.mxu0 %v1941
    %2096 = vmatpush1.bf16.msra.mxu0 %v1940
    %2097 = vmatprep.subr.bf16.mxu0 %v1945
    %2098 = vmatpush1.bf16.msra.mxu0 %v1944
    %2099 = vmatprep.subr.bf16.mxu0 %v1949
    %2100 = vmatpush1.bf16.msra.mxu0 %v1948
    %2101 = vmatprep.subr.bf16.mxu0 %v1953
    %2102 = vmatpush1.bf16.msra.mxu0 %v1952
    %2103 = vmatprep.subr.bf16.mxu0 %v1957
    %2104 = vmatpush1.bf16.msra.mxu0 %v1956
    %2105 = vmatprep.subr.bf16.mxu0 %v1961
    %2106 = vmatpush1.bf16.msra.mxu0 %v1960
    %2107 = vmatprep.subr.bf16.mxu0 %v1965
    %2108 = vmatpush1.bf16.msra.mxu0 %v1964
    %2109 = vmatprep.subr.bf16.mxu0 %v1969
    %2110 = vmatpush1.bf16.msra.mxu0 %v1968
    %2111 = vmatprep.subr.bf16.mxu0 %v1973
    %2112 = vmatpush1.bf16.msra.mxu0 %v1972
    %2113 = vmatprep.subr.bf16.mxu0 %v1977
    %2114 = vmatpush1.bf16.msra.mxu0 %v1976
    %2115 = vmatprep.mubr.bf16.mxu0 %v1635
    %2116 = vmatmul.mubr.bf16.gmra.mrb[0].mxu0 %v1634
    %v2117 = vpop.f32.mrb[0].mxu0
    %v2118 = vadd.f32 %v1713, %v2117
    %v2119 = vpop.f32.mrb[0].mxu0
    %v2120 = vadd.f32 %v1717, %v2119
    %v2121 = vpop.f32.mrb[0].mxu0
    %v2122 = vpop.f32.mrb[0].mxu0
    %2123 = vdwg.mxu0
    %v2124 = vxor.u32 %v2077, 2147483648
    %v2125 = vmul.f32 %v2124, 1.442695
    %v2126 = vpow.pop %v2125
    %v2127 = vadd.f32 %v2126, 1.0
    %v2128 = vrcp.pop %v2127
    %v2129 = vmul.f32 1.0, %v2128
    %v2130 = vxor.u32 %v2079, 2147483648
    %v2131 = vmul.f32 %v2130, 1.442695
    %v2132 = vpow.pop %v2131
    %v2133 = vadd.f32 %v2132, 1.0
    %v2134 = vrcp.pop %v2133
    %v2135 = vmul.f32 1.0, %v2134
    %v2136 = vtanh.pop %v2118
    %v2137 = vxor.u32 %v2120, 2147483648
    %v2138 = vmul.f32 %v2137, 1.442695
    %v2139 = vpow.pop %v2138
    %v2140 = vadd.f32 %v2139, 1.0
    %v2141 = vrcp.pop %v2140
    %v2142 = vmul.f32 1.0, %v2141
    %v2143 = vmul.f32 %v2135, %v1633
    %v2144 = vmul.f32 %v2129, %v2136
    %v2145 = vadd.f32 %v2143, %v2144
    %v2146 = vtanh.pop %v2145
    %v2147 = vmul.f32 %v2142, %v2146
    %v2148 = vld [vmem:[%s4] sm:$0x3]
    %v2149 = vld [vmem:[%s5] sm:$0x3]
    %v2150 = vpack.c.bf16 %v2147, %v2147
    %v2151 = vpack.c.bf16 %v2148, %v2148
    %v2152 = vld [vmem:[%s14] sm:$0xff]
    %v2153 = vld [vmem:[%s14 + $0x8] sm:$0xff]
    %v2154 = vld [vmem:[%s14 + $0x10] sm:$0xff]
    %v2155 = vld [vmem:[%s14 + $0x18] sm:$0xff]
    %v2156 = vld [vmem:[%s14 + $0x20] sm:$0xff]
    %v2157 = vld [vmem:[%s14 + $0x28] sm:$0xff]
    %v2158 = vld [vmem:[%s14 + $0x30] sm:$0xff]
    %v2159 = vld [vmem:[%s14 + $0x38] sm:$0xff]
    %v2160 = vld [vmem:[%s14 + $0x40] sm:$0xff]
    %v2161 = vld [vmem:[%s14 + $0x48] sm:$0xff]
    %v2162 = vld [vmem:[%s14 + $0x50] sm:$0xff]
    %v2163 = vld [vmem:[%s14 + $0x58] sm:$0xff]
    %v2164 = vld [vmem:[%s14 + $0x60] sm:$0xff]
    %v2165 = vld [vmem:[%s14 + $0x68] sm:$0xff]
    %v2166 = vld [vmem:[%s14 + $0x70] sm:$0xff]
    %v2167 = vld [vmem:[%s14 + $0x78] sm:$0xff]
    %v2168 = vld [vmem:[%s14 + $0x80] sm:$0xff]
    %v2169 = vld [vmem:[%s14 + $0x88] sm:$0xff]
    %v2170 = vld [vmem:[%s14 + $0x90] sm:$0xff]
    %v2171 = vld [vmem:[%s14 + $0x98] sm:$0xff]
    %v2172 = vld [vmem:[%s14 + $0xa0] sm:$0xff]
    %v2173 = vld [vmem:[%s14 + $0xa8] sm:$0xff]
    %v2174 = vld [vmem:[%s14 + $0xb0] sm:$0xff]
    %v2175 = vld [vmem:[%s14 + $0xb8] sm:$0xff]
    %v2176 = vld [vmem:[%s14 + $0xc0] sm:$0xff]
    %v2177 = vld [vmem:[%s14 + $0xc8] sm:$0xff]
    %v2178 = vld [vmem:[%s14 + $0xd0] sm:$0xff]
    %v2179 = vld [vmem:[%s14 + $0xd8] sm:$0xff]
    %v2180 = vld [vmem:[%s14 + $0xe0] sm:$0xff]
    %v2181 = vld [vmem:[%s14 + $0xe8] sm:$0xff]
    %v2182 = vld [vmem:[%s14 + $0xf0] sm:$0xff]
    %v2183 = vld [vmem:[%s14 + $0xf8] sm:$0xff]
    %v2184 = vld [vmem:[%s14 + $0x100] sm:$0xff]
    %v2185 = vld [vmem:[%s14 + $0x108] sm:$0xff]
    %v2186 = vld [vmem:[%s14 + $0x110] sm:$0xff]
    %v2187 = vld [vmem:[%s14 + $0x118] sm:$0xff]
    %v2188 = vld [vmem:[%s14 + $0x120] sm:$0xff]
    %v2189 = vld [vmem:[%s14 + $0x128] sm:$0xff]
    %v2190 = vld [vmem:[%s14 + $0x130] sm:$0xff]
    %v2191 = vld [vmem:[%s14 + $0x138] sm:$0xff]
    %v2192 = vld [vmem:[%s14 + $0x140] sm:$0xff]
    %v2193 = vld [vmem:[%s14 + $0x148] sm:$0xff]
    %v2194 = vld [vmem:[%s14 + $0x150] sm:$0xff]
    %v2195 = vld [vmem:[%s14 + $0x158] sm:$0xff]
    %v2196 = vld [vmem:[%s14 + $0x160] sm:$0xff]
    %v2197 = vld [vmem:[%s14 + $0x168] sm:$0xff]
    %v2198 = vld [vmem:[%s14 + $0x170] sm:$0xff]
    %v2199 = vld [vmem:[%s14 + $0x178] sm:$0xff]
    %v2200 = vld [vmem:[%s14 + $0x180] sm:$0xff]
    %v2201 = vld [vmem:[%s14 + $0x188] sm:$0xff]
    %v2202 = vld [vmem:[%s14 + $0x190] sm:$0xff]
    %v2203 = vld [vmem:[%s14 + $0x198] sm:$0xff]
    %v2204 = vld [vmem:[%s14 + $0x1a0] sm:$0xff]
    %v2205 = vld [vmem:[%s14 + $0x1a8] sm:$0xff]
    %v2206 = vld [vmem:[%s14 + $0x1b0] sm:$0xff]
    %v2207 = vld [vmem:[%s14 + $0x1b8] sm:$0xff]
    %v2208 = vld [vmem:[%s14 + $0x1c0] sm:$0xff]
    %v2209 = vld [vmem:[%s14 + $0x1c8] sm:$0xff]
    %v2210 = vld [vmem:[%s14 + $0x1d0] sm:$0xff]
    %v2211 = vld [vmem:[%s14 + $0x1d8] sm:$0xff]
    %v2212 = vld [vmem:[%s14 + $0x1e0] sm:$0xff]
    %v2213 = vld [vmem:[%s14 + $0x1e8] sm:$0xff]
    %v2214 = vld [vmem:[%s14 + $0x1f0] sm:$0xff]
    %v2215 = vld [vmem:[%s14 + $0x1f8] sm:$0xff]
    %v2216 = vld [vmem:[%s15] sm:$0xf]
    %v2218 = vlaneseq
    %v2219 = vshrl.u32 %v2218, 7
    %v2220 = vsub.s32 0, %v2219
    %v2221 = vrot.slane %v2216, %v2220
    %v2222 = vlaneseq
    %v2223 = vshrl.u32 %v2222, 7
    %v2224 = vsub.s32 1, %v2223
    %v2225 = vrot.slane %v2216, %v2224
    %v2226 = vlaneseq
    %v2227 = vshrl.u32 %v2226, 7
    %v2228 = vsub.s32 2, %v2227
    %v2229 = vrot.slane %v2216, %v2228
    %v2230 = vlaneseq
    %v2231 = vshrl.u32 %v2230, 7
    %v2232 = vsub.s32 3, %v2231
    %v2233 = vrot.slane %v2216, %v2232
    %v2302 = vunpack.c.l.b16 %v2152
    %v2303 = vunpack.c.h.b16 %v2152
    %v2304 = vunpack.c.l.b16 %v2153
    %v2305 = vunpack.c.h.b16 %v2153
    %v2306 = vunpack.c.l.b16 %v2154
    %v2307 = vunpack.c.h.b16 %v2154
    %v2308 = vunpack.c.l.b16 %v2155
    %v2309 = vunpack.c.h.b16 %v2155
    %v2310 = vunpack.c.l.b16 %v2156
    %v2311 = vunpack.c.h.b16 %v2156
    %v2312 = vunpack.c.l.b16 %v2157
    %v2313 = vunpack.c.h.b16 %v2157
    %v2314 = vunpack.c.l.b16 %v2158
    %v2315 = vunpack.c.h.b16 %v2158
    %v2316 = vunpack.c.l.b16 %v2159
    %v2317 = vunpack.c.h.b16 %v2159
    %v2318 = vunpack.c.l.b16 %v2160
    %v2319 = vunpack.c.h.b16 %v2160
    %v2320 = vunpack.c.l.b16 %v2161
    %v2321 = vunpack.c.h.b16 %v2161
    %v2322 = vunpack.c.l.b16 %v2162
    %v2323 = vunpack.c.h.b16 %v2162
    %v2324 = vunpack.c.l.b16 %v2163
    %v2325 = vunpack.c.h.b16 %v2163
    %v2326 = vunpack.c.l.b16 %v2164
    %v2327 = vunpack.c.h.b16 %v2164
    %v2328 = vunpack.c.l.b16 %v2165
    %v2329 = vunpack.c.h.b16 %v2165
    %v2330 = vunpack.c.l.b16 %v2166
    %v2331 = vunpack.c.h.b16 %v2166
    %v2332 = vunpack.c.l.b16 %v2167
    %v2333 = vunpack.c.h.b16 %v2167
    %v2334 = vunpack.c.l.b16 %v2168
    %v2335 = vunpack.c.h.b16 %v2168
    %v2336 = vunpack.c.l.b16 %v2169
    %v2337 = vunpack.c.h.b16 %v2169
    %v2338 = vunpack.c.l.b16 %v2170
    %v2339 = vunpack.c.h.b16 %v2170
    %v2340 = vunpack.c.l.b16 %v2171
    %v2341 = vunpack.c.h.b16 %v2171
    %v2342 = vunpack.c.l.b16 %v2172
    %v2343 = vunpack.c.h.b16 %v2172
    %v2344 = vunpack.c.l.b16 %v2173
    %v2345 = vunpack.c.h.b16 %v2173
    %v2346 = vunpack.c.l.b16 %v2174
    %v2347 = vunpack.c.h.b16 %v2174
    %v2348 = vunpack.c.l.b16 %v2175
    %v2349 = vunpack.c.h.b16 %v2175
    %v2350 = vunpack.c.l.b16 %v2176
    %v2351 = vunpack.c.h.b16 %v2176
    %v2352 = vunpack.c.l.b16 %v2177
    %v2353 = vunpack.c.h.b16 %v2177
    %v2354 = vunpack.c.l.b16 %v2178
    %v2355 = vunpack.c.h.b16 %v2178
    %v2356 = vunpack.c.l.b16 %v2179
    %v2357 = vunpack.c.h.b16 %v2179
    %v2358 = vunpack.c.l.b16 %v2180
    %v2359 = vunpack.c.h.b16 %v2180
    %v2360 = vunpack.c.l.b16 %v2181
    %v2361 = vunpack.c.h.b16 %v2181
    %v2362 = vunpack.c.l.b16 %v2182
    %v2363 = vunpack.c.h.b16 %v2182
    %v2364 = vunpack.c.l.b16 %v2183
    %v2365 = vunpack.c.h.b16 %v2183
    %v2366 = vunpack.c.l.b16 %v2184
    %v2367 = vunpack.c.h.b16 %v2184
    %v2368 = vunpack.c.l.b16 %v2185
    %v2369 = vunpack.c.h.b16 %v2185
    %v2370 = vunpack.c.l.b16 %v2186
    %v2371 = vunpack.c.h.b16 %v2186
    %v2372 = vunpack.c.l.b16 %v2187
    %v2373 = vunpack.c.h.b16 %v2187
    %v2374 = vunpack.c.l.b16 %v2188
    %v2375 = vunpack.c.h.b16 %v2188
    %v2376 = vunpack.c.l.b16 %v2189
    %v2377 = vunpack.c.h.b16 %v2189
    %v2378 = vunpack.c.l.b16 %v2190
    %v2379 = vunpack.c.h.b16 %v2190
    %v2380 = vunpack.c.l.b16 %v2191
    %v2381 = vunpack.c.h.b16 %v2191
    %v2382 = vunpack.c.l.b16 %v2192
    %v2383 = vunpack.c.h.b16 %v2192
    %v2384 = vunpack.c.l.b16 %v2193
    %v2385 = vunpack.c.h.b16 %v2193
    %v2386 = vunpack.c.l.b16 %v2194
    %v2387 = vunpack.c.h.b16 %v2194
    %v2388 = vunpack.c.l.b16 %v2195
    %v2389 = vunpack.c.h.b16 %v2195
    %v2390 = vunpack.c.l.b16 %v2196
    %v2391 = vunpack.c.h.b16 %v2196
    %v2392 = vunpack.c.l.b16 %v2197
    %v2393 = vunpack.c.h.b16 %v2197
    %v2394 = vunpack.c.l.b16 %v2198
    %v2395 = vunpack.c.h.b16 %v2198
    %v2396 = vunpack.c.l.b16 %v2199
    %v2397 = vunpack.c.h.b16 %v2199
    %v2398 = vunpack.c.l.b16 %v2200
    %v2399 = vunpack.c.h.b16 %v2200
    %v2400 = vunpack.c.l.b16 %v2201
    %v2401 = vunpack.c.h.b16 %v2201
    %v2402 = vunpack.c.l.b16 %v2202
    %v2403 = vunpack.c.h.b16 %v2202
    %v2404 = vunpack.c.l.b16 %v2203
    %v2405 = vunpack.c.h.b16 %v2203
    %v2406 = vunpack.c.l.b16 %v2204
    %v2407 = vunpack.c.h.b16 %v2204
    %v2408 = vunpack.c.l.b16 %v2205
    %v2409 = vunpack.c.h.b16 %v2205
    %v2410 = vunpack.c.l.b16 %v2206
    %v2411 = vunpack.c.h.b16 %v2206
    %v2412 = vunpack.c.l.b16 %v2207
    %v2413 = vunpack.c.h.b16 %v2207
    %v2414 = vunpack.c.l.b16 %v2208
    %v2415 = vunpack.c.h.b16 %v2208
    %v2416 = vunpack.c.l.b16 %v2209
    %v2417 = vunpack.c.h.b16 %v2209
    %v2418 = vunpack.c.l.b16 %v2210
    %v2419 = vunpack.c.h.b16 %v2210
    %v2420 = vunpack.c.l.b16 %v2211
    %v2421 = vunpack.c.h.b16 %v2211
    %v2422 = vunpack.c.l.b16 %v2212
    %v2423 = vunpack.c.h.b16 %v2212
    %v2424 = vunpack.c.l.b16 %v2213
    %v2425 = vunpack.c.h.b16 %v2213
    %v2426 = vunpack.c.l.b16 %v2214
    %v2427 = vunpack.c.h.b16 %v2214
    %v2428 = vunpack.c.l.b16 %v2215
    %v2429 = vunpack.c.h.b16 %v2215
    %v2430 = vpack.c.b16 %v2306, %v2302
    %v2431 = vpack.c.b16 %v2307, %v2303
    %v2432 = vpack.c.b16 %v2308, %v2304
    %v2433 = vpack.c.b16 %v2309, %v2305
    %v2434 = vpack.c.b16 %v2314, %v2310
    %v2435 = vpack.c.b16 %v2315, %v2311
    %v2436 = vpack.c.b16 %v2316, %v2312
    %v2437 = vpack.c.b16 %v2317, %v2313
    %v2438 = vpack.c.b16 %v2322, %v2318
    %v2439 = vpack.c.b16 %v2323, %v2319
    %v2440 = vpack.c.b16 %v2324, %v2320
    %v2441 = vpack.c.b16 %v2325, %v2321
    %v2442 = vpack.c.b16 %v2330, %v2326
    %v2443 = vpack.c.b16 %v2331, %v2327
    %v2444 = vpack.c.b16 %v2332, %v2328
    %v2445 = vpack.c.b16 %v2333, %v2329
    %v2446 = vpack.c.b16 %v2338, %v2334
    %v2447 = vpack.c.b16 %v2339, %v2335
    %v2448 = vpack.c.b16 %v2340, %v2336
    %v2449 = vpack.c.b16 %v2341, %v2337
    %v2450 = vpack.c.b16 %v2346, %v2342
    %v2451 = vpack.c.b16 %v2347, %v2343
    %v2452 = vpack.c.b16 %v2348, %v2344
    %v2453 = vpack.c.b16 %v2349, %v2345
    %v2454 = vpack.c.b16 %v2354, %v2350
    %v2455 = vpack.c.b16 %v2355, %v2351
    %v2456 = vpack.c.b16 %v2356, %v2352
    %v2457 = vpack.c.b16 %v2357, %v2353
    %v2458 = vpack.c.b16 %v2362, %v2358
    %v2459 = vpack.c.b16 %v2363, %v2359
    %v2460 = vpack.c.b16 %v2364, %v2360
    %v2461 = vpack.c.b16 %v2365, %v2361
    %v2462 = vpack.c.b16 %v2370, %v2366
    %v2463 = vpack.c.b16 %v2371, %v2367
    %v2464 = vpack.c.b16 %v2372, %v2368
    %v2465 = vpack.c.b16 %v2373, %v2369
    %v2466 = vpack.c.b16 %v2378, %v2374
    %v2467 = vpack.c.b16 %v2379, %v2375
    %v2468 = vpack.c.b16 %v2380, %v2376
    %v2469 = vpack.c.b16 %v2381, %v2377
    %v2470 = vpack.c.b16 %v2386, %v2382
    %v2471 = vpack.c.b16 %v2387, %v2383
    %v2472 = vpack.c.b16 %v2388, %v2384
    %v2473 = vpack.c.b16 %v2389, %v2385
    %v2474 = vpack.c.b16 %v2394, %v2390
    %v2475 = vpack.c.b16 %v2395, %v2391
    %v2476 = vpack.c.b16 %v2396, %v2392
    %v2477 = vpack.c.b16 %v2397, %v2393
    %v2478 = vpack.c.b16 %v2402, %v2398
    %v2479 = vpack.c.b16 %v2403, %v2399
    %v2480 = vpack.c.b16 %v2404, %v2400
    %v2481 = vpack.c.b16 %v2405, %v2401
    %v2482 = vpack.c.b16 %v2410, %v2406
    %v2483 = vpack.c.b16 %v2411, %v2407
    %v2484 = vpack.c.b16 %v2412, %v2408
    %v2485 = vpack.c.b16 %v2413, %v2409
    %v2486 = vpack.c.b16 %v2418, %v2414
    %v2487 = vpack.c.b16 %v2419, %v2415
    %v2488 = vpack.c.b16 %v2420, %v2416
    %v2489 = vpack.c.b16 %v2421, %v2417
    %v2490 = vpack.c.b16 %v2426, %v2422
    %v2491 = vpack.c.b16 %v2427, %v2423
    %v2492 = vpack.c.b16 %v2428, %v2424
    %v2493 = vpack.c.b16 %v2429, %v2425
    %2558 = vmatprep.subr.bf16.mxu0 %v2431
    %2559 = vmatpush1.bf16.msra.mxu0 %v2430
    %2560 = vmatprep.subr.bf16.mxu0 %v2435
    %2561 = vmatpush1.bf16.msra.mxu0 %v2434
    %2562 = vmatprep.subr.bf16.mxu0 %v2439
    %2563 = vmatpush1.bf16.msra.mxu0 %v2438
    %2564 = vmatprep.subr.bf16.mxu0 %v2443
    %2565 = vmatpush1.bf16.msra.mxu0 %v2442
    %2566 = vmatprep.subr.bf16.mxu0 %v2447
    %2567 = vmatpush1.bf16.msra.mxu0 %v2446
    %2568 = vmatprep.subr.bf16.mxu0 %v2451
    %2569 = vmatpush1.bf16.msra.mxu0 %v2450
    %2570 = vmatprep.subr.bf16.mxu0 %v2455
    %2571 = vmatpush1.bf16.msra.mxu0 %v2454
    %2572 = vmatprep.subr.bf16.mxu0 %v2459
    %2573 = vmatpush1.bf16.msra.mxu0 %v2458
    %2574 = vmatprep.subr.bf16.mxu0 %v2463
    %2575 = vmatpush1.bf16.msra.mxu0 %v2462
    %2576 = vmatprep.subr.bf16.mxu0 %v2467
    %2577 = vmatpush1.bf16.msra.mxu0 %v2466
    %2578 = vmatprep.subr.bf16.mxu0 %v2471
    %2579 = vmatpush1.bf16.msra.mxu0 %v2470
    %2580 = vmatprep.subr.bf16.mxu0 %v2475
    %2581 = vmatpush1.bf16.msra.mxu0 %v2474
    %2582 = vmatprep.subr.bf16.mxu0 %v2479
    %2583 = vmatpush1.bf16.msra.mxu0 %v2478
    %2584 = vmatprep.subr.bf16.mxu0 %v2483
    %2585 = vmatpush1.bf16.msra.mxu0 %v2482
    %2586 = vmatprep.subr.bf16.mxu0 %v2487
    %2587 = vmatpush1.bf16.msra.mxu0 %v2486
    %2588 = vmatprep.subr.bf16.mxu0 %v2491
    %2589 = vmatpush1.bf16.msra.mxu0 %v2490
    %2590 = vmatprep.mubr.bf16.mxu0 %v2151
    %2591 = vmatmul.mubr.bf16.gmra.mrb[0].mxu0 %v2150
    %v2592 = vpop.f32.mrb[0].mxu0
    %v2593 = vadd.f32 %v2221, %v2592
    %v2594 = vpop.f32.mrb[0].mxu0
    %v2595 = vadd.f32 %v2225, %v2594
    %v2596 = vpop.f32.mrb[0].mxu0
    %v2597 = vpop.f32.mrb[0].mxu0
    %2598 = vdwg.mxu0
    %2599 = vmatprep.subr.bf16.mxu0 %v2433
    %2600 = vmatpush1.bf16.msra.mxu0 %v2432
    %2601 = vmatprep.subr.bf16.mxu0 %v2437
    %2602 = vmatpush1.bf16.msra.mxu0 %v2436
    %2603 = vmatprep.subr.bf16.mxu0 %v2441
    %2604 = vmatpush1.bf16.msra.mxu0 %v2440
    %2605 = vmatprep.subr.bf16.mxu0 %v2445
    %2606 = vmatpush1.bf16.msra.mxu0 %v2444
    %2607 = vmatprep.subr.bf16.mxu0 %v2449
    %2608 = vmatpush1.bf16.msra.mxu0 %v2448
    %2609 = vmatprep.subr.bf16.mxu0 %v2453
    %2610 = vmatpush1.bf16.msra.mxu0 %v2452
    %2611 = vmatprep.subr.bf16.mxu0 %v2457
    %2612 = vmatpush1.bf16.msra.mxu0 %v2456
    %2613 = vmatprep.subr.bf16.mxu0 %v2461
    %2614 = vmatpush1.bf16.msra.mxu0 %v2460
    %2615 = vmatprep.subr.bf16.mxu0 %v2465
    %2616 = vmatpush1.bf16.msra.mxu0 %v2464
    %2617 = vmatprep.subr.bf16.mxu0 %v2469
    %2618 = vmatpush1.bf16.msra.mxu0 %v2468
    %2619 = vmatprep.subr.bf16.mxu0 %v2473
    %2620 = vmatpush1.bf16.msra.mxu0 %v2472
    %2621 = vmatprep.subr.bf16.mxu0 %v2477
    %2622 = vmatpush1.bf16.msra.mxu0 %v2476
    %2623 = vmatprep.subr.bf16.mxu0 %v2481
    %2624 = vmatpush1.bf16.msra.mxu0 %v2480
    %2625 = vmatprep.subr.bf16.mxu0 %v2485
    %2626 = vmatpush1.bf16.msra.mxu0 %v2484
    %2627 = vmatprep.subr.bf16.mxu0 %v2489
    %2628 = vmatpush1.bf16.msra.mxu0 %v2488
    %2629 = vmatprep.subr.bf16.mxu0 %v2493
    %2630 = vmatpush1.bf16.msra.mxu0 %v2492
    %2631 = vmatprep.mubr.bf16.mxu0 %v2151
    %2632 = vmatmul.mubr.bf16.gmra.mrb[0].mxu0 %v2150
    %v2633 = vpop.f32.mrb[0].mxu0
    %v2634 = vadd.f32 %v2229, %v2633
    %v2635 = vpop.f32.mrb[0].mxu0
    %v2636 = vadd.f32 %v2233, %v2635
    %v2637 = vpop.f32.mrb[0].mxu0
    %v2638 = vpop.f32.mrb[0].mxu0
    %2639 = vdwg.mxu0
    %v2640 = vxor.u32 %v2593, 2147483648
    %v2641 = vmul.f32 %v2640, 1.442695
    %v2642 = vpow.pop %v2641
    %v2643 = vadd.f32 %v2642, 1.0
    %v2644 = vrcp.pop %v2643
    %v2645 = vmul.f32 1.0, %v2644
    %v2646 = vxor.u32 %v2595, 2147483648
    %v2647 = vmul.f32 %v2646, 1.442695
    %v2648 = vpow.pop %v2647
    %v2649 = vadd.f32 %v2648, 1.0
    %v2650 = vrcp.pop %v2649
    %v2651 = vmul.f32 1.0, %v2650
    %v2652 = vtanh.pop %v2634
    %v2653 = vxor.u32 %v2636, 2147483648
    %v2654 = vmul.f32 %v2653, 1.442695
    %v2655 = vpow.pop %v2654
    %v2656 = vadd.f32 %v2655, 1.0
    %v2657 = vrcp.pop %v2656
    %v2658 = vmul.f32 1.0, %v2657
    %v2659 = vmul.f32 %v2651, %v2149
    %v2660 = vmul.f32 %v2645, %v2652
    %v2661 = vadd.f32 %v2659, %v2660
    %v2662 = vtanh.pop %v2661
    %v2663 = vmul.f32 %v2658, %v2662
    %v2664 = vpack.c.bf16 %v2663, %v2663
    %v2665 = vld [vmem:[%s16] sm:$0xf]
    %v2666 = vld [vmem:[%s16 + $0x4] sm:$0xf]
    %v2667 = vld [vmem:[%s16 + $0x8] sm:$0xf]
    %v2668 = vld [vmem:[%s16 + $0xc] sm:$0xf]
    %v2669 = vld [vmem:[%s16 + $0x10] sm:$0xf]
    %v2670 = vld [vmem:[%s16 + $0x14] sm:$0xf]
    %v2671 = vld [vmem:[%s16 + $0x18] sm:$0xf]
    %v2672 = vld [vmem:[%s16 + $0x1c] sm:$0xf]
    %v2673 = vld [vmem:[%s16 + $0x20] sm:$0xf]
    %v2674 = vld [vmem:[%s16 + $0x24] sm:$0xf]
    %v2675 = vld [vmem:[%s16 + $0x28] sm:$0xf]
    %v2676 = vld [vmem:[%s16 + $0x2c] sm:$0xf]
    %v2677 = vld [vmem:[%s16 + $0x30] sm:$0xf]
    %v2678 = vld [vmem:[%s16 + $0x34] sm:$0xf]
    %v2679 = vld [vmem:[%s16 + $0x38] sm:$0xf]
    %v2680 = vld [vmem:[%s16 + $0x3c] sm:$0xf]
    %v2681 = vld [vmem:[%s16 + $0x40] sm:$0xf]
    %v2682 = vld [vmem:[%s16 + $0x44] sm:$0xf]
    %v2683 = vld [vmem:[%s16 + $0x48] sm:$0xf]
    %v2684 = vld [vmem:[%s16 + $0x4c] sm:$0xf]
    %v2685 = vld [vmem:[%s16 + $0x50] sm:$0xf]
    %v2686 = vld [vmem:[%s16 + $0x54] sm:$0xf]
    %v2687 = vld [vmem:[%s16 + $0x58] sm:$0xf]
    %v2688 = vld [vmem:[%s16 + $0x5c] sm:$0xf]
    %v2689 = vld [vmem:[%s16 + $0x60] sm:$0xf]
    %v2690 = vld [vmem:[%s16 + $0x64] sm:$0xf]
    %v2691 = vld [vmem:[%s16 + $0x68] sm:$0xf]
    %v2692 = vld [vmem:[%s16 + $0x6c] sm:$0xf]
    %v2693 = vld [vmem:[%s16 + $0x70] sm:$0xf]
    %v2694 = vld [vmem:[%s16 + $0x74] sm:$0xf]
    %v2695 = vld [vmem:[%s16 + $0x78] sm:$0xf]
    %v2696 = vld [vmem:[%s16 + $0x7c] sm:$0xf]
    %v2697 = vld [vmem:[%s17] sm:$0x1]
    %v2699 = vlaneseq
    %v2700 = vshrl.u32 %v2699, 7
    %v2701 = vsub.s32 0, %v2700
    %v2702 = vrot.slane %v2697, %v2701
    %v2736 = vunpack.c.l.b16 %v2665
    %v2737 = vunpack.c.l.b16 %v2666
    %v2738 = vunpack.c.l.b16 %v2667
    %v2739 = vunpack.c.l.b16 %v2668
    %v2740 = vunpack.c.l.b16 %v2669
    %v2741 = vunpack.c.l.b16 %v2670
    %v2742 = vunpack.c.l.b16 %v2671
    %v2743 = vunpack.c.l.b16 %v2672
    %v2744 = vunpack.c.l.b16 %v2673
    %v2745 = vunpack.c.l.b16 %v2674
    %v2746 = vunpack.c.l.b16 %v2675
    %v2747 = vunpack.c.l.b16 %v2676
    %v2748 = vunpack.c.l.b16 %v2677
    %v2749 = vunpack.c.l.b16 %v2678
    %v2750 = vunpack.c.l.b16 %v2679
    %v2751 = vunpack.c.l.b16 %v2680
    %v2752 = vunpack.c.l.b16 %v2681
    %v2753 = vunpack.c.l.b16 %v2682
    %v2754 = vunpack.c.l.b16 %v2683
    %v2755 = vunpack.c.l.b16 %v2684
    %v2756 = vunpack.c.l.b16 %v2685
    %v2757 = vunpack.c.l.b16 %v2686
    %v2758 = vunpack.c.l.b16 %v2687
    %v2759 = vunpack.c.l.b16 %v2688
    %v2760 = vunpack.c.l.b16 %v2689
    %v2761 = vunpack.c.l.b16 %v2690
    %v2762 = vunpack.c.l.b16 %v2691
    %v2763 = vunpack.c.l.b16 %v2692
    %v2764 = vunpack.c.l.b16 %v2693
    %v2765 = vunpack.c.l.b16 %v2694
    %v2766 = vunpack.c.l.b16 %v2695
    %v2767 = vunpack.c.l.b16 %v2696
    %v2768 = vpack.c.b16 %v2737, %v2736
    %v2769 = vpack.c.b16 %v2739, %v2738
    %v2770 = vpack.c.b16 %v2741, %v2740
    %v2771 = vpack.c.b16 %v2743, %v2742
    %v2772 = vpack.c.b16 %v2745, %v2744
    %v2773 = vpack.c.b16 %v2747, %v2746
    %v2774 = vpack.c.b16 %v2749, %v2748
    %v2775 = vpack.c.b16 %v2751, %v2750
    %v2776 = vpack.c.b16 %v2753, %v2752
    %v2777 = vpack.c.b16 %v2755, %v2754
    %v2778 = vpack.c.b16 %v2757, %v2756
    %v2779 = vpack.c.b16 %v2759, %v2758
    %v2780 = vpack.c.b16 %v2761, %v2760
    %v2781 = vpack.c.b16 %v2763, %v2762
    %v2782 = vpack.c.b16 %v2765, %v2764
    %v2783 = vpack.c.b16 %v2767, %v2766
    %2800 = vmatprep.subr.bf16.mxu0 0
    %2801 = vmatpush1.bf16.msra.mxu0 %v2768
    %2802 = vmatprep.subr.bf16.mxu0 0
    %2803 = vmatpush1.bf16.msra.mxu0 %v2769
    %2804 = vmatprep.subr.bf16.mxu0 0
    %2805 = vmatpush1.bf16.msra.mxu0 %v2770
    %2806 = vmatprep.subr.bf16.mxu0 0
    %2807 = vmatpush1.bf16.msra.mxu0 %v2771
    %2808 = vmatprep.subr.bf16.mxu0 0
    %2809 = vmatpush1.bf16.msra.mxu0 %v2772
    %2810 = vmatprep.subr.bf16.mxu0 0
    %2811 = vmatpush1.bf16.msra.mxu0 %v2773
    %2812 = vmatprep.subr.bf16.mxu0 0
    %2813 = vmatpush1.bf16.msra.mxu0 %v2774
    %2814 = vmatprep.subr.bf16.mxu0 0
    %2815 = vmatpush1.bf16.msra.mxu0 %v2775
    %2816 = vmatprep.subr.bf16.mxu0 0
    %2817 = vmatpush1.bf16.msra.mxu0 %v2776
    %2818 = vmatprep.subr.bf16.mxu0 0
    %2819 = vmatpush1.bf16.msra.mxu0 %v2777
    %2820 = vmatprep.subr.bf16.mxu0 0
    %2821 = vmatpush1.bf16.msra.mxu0 %v2778
    %2822 = vmatprep.subr.bf16.mxu0 0
    %2823 = vmatpush1.bf16.msra.mxu0 %v2779
    %2824 = vmatprep.subr.bf16.mxu0 0
    %2825 = vmatpush1.bf16.msra.mxu0 %v2780
    %2826 = vmatprep.subr.bf16.mxu0 0
    %2827 = vmatpush1.bf16.msra.mxu0 %v2781
    %2828 = vmatprep.subr.bf16.mxu0 0
    %2829 = vmatpush1.bf16.msra.mxu0 %v2782
    %2830 = vmatprep.subr.bf16.mxu0 0
    %2831 = vmatpush1.bf16.msra.mxu0 %v2783
    %2832 = vmatprep.mubr.bf16.mxu0 %v2664
    %2833 = vmatmul.mubr.bf16.gmra.mrb[0].mxu0 %v2150
    %v2834 = vpop.f32.mrb[0].mxu0
    %v2835 = vadd.f32 %v2702, %v2834
    %v2836 = vpop.f32.mrb[0].mxu0
    %v2837 = vpop.f32.mrb[0].mxu0
    %v2838 = vpop.f32.mrb[0].mxu0
    %2839 = vdwg.mxu0
    %2840 = vst [vmem:[#allocation2] sm:$0x3] %v2147
    %2841 = vst [vmem:[#allocation4] sm:$0x3] %v2145
    %2842 = vst [vmem:[#allocation6] sm:$0x3] %v2663
    %2843 = vst [vmem:[#allocation7] sm:$0x3] %v2661
    %2844 = vst [vmem:[%s22] sm:$0x3] %v2835
    // Predicated region
    $region74: #{gdram_forward.17} parent=1 // pred_check
      _
    $region75: #{gdram_forward.17} parent=1 // pred_check_branch
      %2846 = sbr.rel (0) target = $region77
    $region76: #{gdram_forward.17} parent=1 // pred_region
      %s2848 = ssub.s32 32, 32
      %2849 = vsyncadd [#allocation3], %s2848
      %s2851 = sshll.u32 [#allocation2], 4
      %s2852 = int_to_ptr.vmem [resolvable:$true] %s2851
      %2854 = dma.vmem_to_hbm [thread:$0]  %s2852, 32, %s18, [#allocation3]
    $region77: #{gdram_forward.17} parent=1 // pred_fallthru
      _
    // Predicated region
    $region78: #{gdram_forward.17} parent=1 // pred_check
      _
    $region79: #{gdram_forward.17} parent=1 // pred_check_branch
      %2856 = sbr.rel (0) target = $region81
    $region80: #{gdram_forward.17} parent=1 // pred_region
      %s2858 = ssub.s32 32, 32
      %2859 = vsyncadd [#allocation5], %s2858
      %s2861 = sshll.u32 [#allocation4], 4
      %s2862 = int_to_ptr.vmem [resolvable:$true] %s2861
      %2864 = dma.vmem_to_hbm [thread:$0]  %s2862, 32, %s19, [#allocation5]
    $region81: #{gdram_forward.17} parent=1 // pred_fallthru
      _
    // Predicated region
    $region82: #{gdram_forward.17} parent=1 // pred_check
      _
    $region83: #{gdram_forward.17} parent=1 // pred_check_branch
      %2866 = sbr.rel (0) target = $region85
    $region84: #{gdram_forward.17} parent=1 // pred_region
      %s2868 = ssub.s32 32, 32
      %2869 = vsyncadd [#allocation5], %s2868
      %s2871 = sshll.u32 [#allocation6], 4
      %s2872 = int_to_ptr.vmem [resolvable:$true] %s2871
      %2874 = dma.vmem_to_hbm [thread:$0]  %s2872, 32, %s20, [#allocation5]
    $region85: #{gdram_forward.17} parent=1 // pred_fallthru
      _
    // Predicated region
    $region86: #{gdram_forward.17} parent=1 // pred_check
      _
    $region87: #{gdram_forward.17} parent=1 // pred_check_branch
      %2876 = sbr.rel (0) target = $region89
    $region88: #{gdram_forward.17} parent=1 // pred_region
      %s2878 = ssub.s32 32, 32
      %2879 = vsyncadd [#allocation8], %s2878
      %s2881 = sshll.u32 [#allocation7], 4
      %s2882 = int_to_ptr.vmem [resolvable:$true] %s2881
      %2884 = dma.vmem_to_hbm [thread:$0]  %s2882, 32, %s21, [#allocation8]
    $region89: #{gdram_forward.17} parent=1 // pred_fallthru
      _
    // Predicated region
    $region90: #{gdram_forward.17} parent=1 // pred_check
      _
    $region91: #{gdram_forward.17} parent=1 // pred_check_branch
      %2886 = sbr.rel (0) target = $region93
    $region92: #{gdram_forward.17} parent=1 // pred_region
      _
    $region93: #{gdram_forward.17} parent=1 // pred_fallthru
      _
    // Predicated region
    $region94: #{gdram_forward.17} parent=1 // pred_check
      _
    $region95: #{gdram_forward.17} parent=1 // pred_check_branch
      %2888 = sbr.rel (0) target = $region97
    $region96: #{gdram_forward.17} parent=1 // pred_region
      %2889 = dma.done [#allocation3], 32
    $region97: #{gdram_forward.17} parent=1 // pred_fallthru
      _
    // Predicated region
    $region98: #{gdram_forward.17} parent=1 // pred_check
      _
    $region99: #{gdram_forward.17} parent=1 // pred_check_branch
      %2891 = sbr.rel (0) target = $region101
    $region100: #{gdram_forward.17} parent=1 // pred_region
      %2892 = dma.done [#allocation5], 32
    $region101: #{gdram_forward.17} parent=1 // pred_fallthru
      _
    // Predicated region
    $region102: #{gdram_forward.17} parent=1 // pred_check
      _
    $region103: #{gdram_forward.17} parent=1 // pred_check_branch
      %2894 = sbr.rel (0) target = $region105
    $region104: #{gdram_forward.17} parent=1 // pred_region
      %2895 = dma.done [#allocation5], 32
    $region105: #{gdram_forward.17} parent=1 // pred_fallthru
      _
    // Predicated region
    $region106: #{gdram_forward.17} parent=1 // pred_check
      _
    $region107: #{gdram_forward.17} parent=1 // pred_check_branch
      %2897 = sbr.rel (0) target = $region109
    $region108: #{gdram_forward.17} parent=1 // pred_region
      %2898 = dma.done [#allocation8], 32
    $region109: #{gdram_forward.17} parent=1 // pred_fallthru
      _
    // Predicated region
    $region110: #{gdram_forward.17} parent=1 // pred_check
      _
    $region111: #{gdram_forward.17} parent=1 // pred_check_branch
      %2900 = sbr.rel (0) target = $region113
    $region112: #{gdram_forward.17} parent=1 // pred_region
      _
    $region113: #{gdram_forward.17} parent=1 // pred_fallthru
      _
    %2901 = vsyncpa [#allocation3], 1
    %2902 = vsyncpa [#allocation5], 1
    %2903 = vsyncpa [#allocation8], 1

// kernel: gdram_forward.10
$region0: #{gdram_forward.10}
  #allocation0 [shape = 'u32[]', space=smem, size = 0x4, offset = 0x4, fixed_abs, tag = 'smem constant byte address 0x4 - core index']
  #allocation1 [shape = 'u32[144,128]{1,0:T(1,128)}', space=vmem, size = 0x12000, scoped, tag = 'internal scratch']
  %s0 = inlined_call_operand.vmem [shape: bf16[2,1792], index: 0, kind: input, shape index: {}]
  %s1 = inlined_call_operand.vmem [shape: f32[2,2], index: 1, kind: input, shape index: {}]
  %s2 = inlined_call_operand.vmem [shape: f32[2,128], index: 2, kind: input, shape index: {}, may-alias: {2,3,5}]
  %s3 = inlined_call_operand.vmem [shape: f32[2,128], index: 3, kind: input, shape index: {}, may-alias: {2,3,5}]
  %s4 = inlined_call_operand.vmem [shape: f32[2,128], index: 4, kind: input, shape index: {}]
  %s5 = inlined_call_operand.vmem [shape: f32[2,128], index: 5, kind: input, shape index: {}, may-alias: {2,3,5}]
  %s6 = inlined_call_operand.vmem [shape: bf16[1792,128], index: 6, kind: input, shape index: {}]
  %s7 = inlined_call_operand.vmem [shape: f32[1,128], index: 7, kind: input, shape index: {}]
  %s8 = inlined_call_operand.vmem [shape: f32[2,128], index: 8, kind: input, shape index: {}]
  %s9 = inlined_call_operand.vmem [shape: f32[1,128], index: 9, kind: input, shape index: {}]
  %s10 = inlined_call_operand.vmem [shape: bf16[256,128], index: 10, kind: input, shape index: {}]
  %s11 = inlined_call_operand.vmem [shape: f32[1,128], index: 11, kind: input, shape index: {}]
  %s12 = inlined_call_operand.vmem [shape: bf16[256,512], index: 12, kind: input, shape index: {}]
  %s13 = inlined_call_operand.vmem [shape: f32[1,512], index: 13, kind: input, shape index: {}]
  %s14 = inlined_call_operand.vmem [shape: bf16[256,512], index: 14, kind: input, shape index: {}]
  %s15 = inlined_call_operand.vmem [shape: f32[1,512], index: 15, kind: input, shape index: {}]
  %s16 = inlined_call_operand.vmem [shape: bf16[256,128], index: 16, kind: input, shape index: {}]
  %s17 = inlined_call_operand.vmem [shape: f32[1,128], index: 17, kind: input, shape index: {}]
  %s18 = inlined_call_operand.vmem [shape: f32[2,128], index: 18, kind: output, shape index: {0}]
  %s19 = inlined_call_operand.vmem [shape: f32[2,128], index: 19, kind: output, shape index: {1}]
  %s20 = inlined_call_operand.vmem [shape: f32[2,128], index: 20, kind: output, shape index: {2}]
  %s21 = inlined_call_operand.vmem [shape: f32[2,128], index: 21, kind: output, shape index: {3}]
  %s22 = inlined_call_operand.vmem [shape: f32[2,128], index: 22, kind: output, shape index: {4}]
  %23 = xla_tuple %s18, %s19, %s20, %s21, %s22
  %s24 = sld [smem:[#allocation0]]
  $region114: #{gdram_forward.10} parent=0
    _
  %s26 = ssub.s32 1, %s24
  %s27 = scalar_select 0, %s26, %s24
  // Predicated region
  $region2: #{gdram_forward.10} parent=0 // pred_check
    _
  $region3: #{gdram_forward.10} parent=0 // pred_check_branch
    %29 = sbr.rel (0) target = $region5
  $region4: #{gdram_forward.10} parent=0 // pred_region
    _
  $region5: #{gdram_forward.10} parent=0 // pred_fallthru
    _
  // Predicated region
  $region6: #{gdram_forward.10} parent=0 // pred_check
    _
  $region7: #{gdram_forward.10} parent=0 // pred_check_branch
    %31 = sbr.rel (0) target = $region9
  $region8: #{gdram_forward.10} parent=0 // pred_region
    _
  $region9: #{gdram_forward.10} parent=0 // pred_fallthru
    _
  // Predicated region
  $region10: #{gdram_forward.10} parent=0 // pred_check
    _
  $region11: #{gdram_forward.10} parent=0 // pred_check_branch
    %33 = sbr.rel (0) target = $region13
  $region12: #{gdram_forward.10} parent=0 // pred_region
    _
  $region13: #{gdram_forward.10} parent=0 // pred_fallthru
    _
  // Predicated region
  $region14: #{gdram_forward.10} parent=0 // pred_check
    _
  $region15: #{gdram_forward.10} parent=0 // pred_check_branch
    %35 = sbr.rel (0) target = $region17
  $region16: #{gdram_forward.10} parent=0 // pred_region
    _
  $region17: #{gdram_forward.10} parent=0 // pred_fallthru
    _
  // Predicated region
  $region18: #{gdram_forward.10} parent=0 // pred_check
    _
  $region19: #{gdram_forward.10} parent=0 // pred_check_branch
    %37 = sbr.rel (0) target = $region21
  $region20: #{gdram_forward.10} parent=0 // pred_region
    _
  $region21: #{gdram_forward.10} parent=0 // pred_fallthru
    _
  // Predicated region
  $region22: #{gdram_forward.10} parent=0 // pred_check
    _
  $region23: #{gdram_forward.10} parent=0 // pred_check_branch
    %39 = sbr.rel (0) target = $region25
  $region24: #{gdram_forward.10} parent=0 // pred_region
    _
  $region25: #{gdram_forward.10} parent=0 // pred_fallthru
    _
  // Predicated region
  $region26: #{gdram_forward.10} parent=0 // pred_check
    _
  $region27: #{gdram_forward.10} parent=0 // pred_check_branch
    %41 = sbr.rel (0) target = $region29
  $region28: #{gdram_forward.10} parent=0 // pred_region
    _
  $region29: #{gdram_forward.10} parent=0 // pred_fallthru
    _
  // Predicated region
  $region30: #{gdram_forward.10} parent=0 // pred_check
    _
  $region31: #{gdram_forward.10} parent=0 // pred_check_branch
    %43 = sbr.rel (0) target = $region33
  $region32: #{gdram_forward.10} parent=0 // pred_region
    _
  $region33: #{gdram_forward.10} parent=0 // pred_fallthru
    _
  // Predicated region
  $region34: #{gdram_forward.10} parent=0 // pred_check
    _
  $region35: #{gdram_forward.10} parent=0 // pred_check_branch
    %45 = sbr.rel (0) target = $region37
  $region36: #{gdram_forward.10} parent=0 // pred_region
    _
  $region37: #{gdram_forward.10} parent=0 // pred_fallthru
    _
  // Predicated region
  $region38: #{gdram_forward.10} parent=0 // pred_check
    _
  $region39: #{gdram_forward.10} parent=0 // pred_check_branch
    %47 = sbr.rel (0) target = $region41
  $region40: #{gdram_forward.10} parent=0 // pred_region
    _
  $region41: #{gdram_forward.10} parent=0 // pred_fallthru
    _
  // Predicated region
  $region42: #{gdram_forward.10} parent=0 // pred_check
    _
  $region43: #{gdram_forward.10} parent=0 // pred_check_branch
    %49 = sbr.rel (0) target = $region45
  $region44: #{gdram_forward.10} parent=0 // pred_region
    _
  $region45: #{gdram_forward.10} parent=0 // pred_fallthru
    _
  // Predicated region
  $region46: #{gdram_forward.10} parent=0 // pred_check
    _
  $region47: #{gdram_forward.10} parent=0 // pred_check_branch
    %51 = sbr.rel (0) target = $region49
  $region48: #{gdram_forward.10} parent=0 // pred_region
    _
  $region49: #{gdram_forward.10} parent=0 // pred_fallthru
    _
  // Predicated region
  $region50: #{gdram_forward.10} parent=0 // pred_check
    _
  $region51: #{gdram_forward.10} parent=0 // pred_check_branch
    %53 = sbr.rel (0) target = $region53
  $region52: #{gdram_forward.10} parent=0 // pred_region
    _
  $region53: #{gdram_forward.10} parent=0 // pred_fallthru
    _
  // Predicated region
  $region54: #{gdram_forward.10} parent=0 // pred_check
    _
  $region55: #{gdram_forward.10} parent=0 // pred_check_branch
    %55 = sbr.rel (0) target = $region57
  $region56: #{gdram_forward.10} parent=0 // pred_region
    _
  $region57: #{gdram_forward.10} parent=0 // pred_fallthru
    _
  // Predicated region
  $region58: #{gdram_forward.10} parent=0 // pred_check
    _
  $region59: #{gdram_forward.10} parent=0 // pred_check_branch
    %57 = sbr.rel (0) target = $region61
  $region60: #{gdram_forward.10} parent=0 // pred_region
    _
  $region61: #{gdram_forward.10} parent=0 // pred_fallthru
    _
  // Predicated region
  $region62: #{gdram_forward.10} parent=0 // pred_check
    _
  $region63: #{gdram_forward.10} parent=0 // pred_check_branch
    %59 = sbr.rel (0) target = $region65
  $region64: #{gdram_forward.10} parent=0 // pred_region
    _
  $region65: #{gdram_forward.10} parent=0 // pred_fallthru
    _
  // Predicated region
  $region66: #{gdram_forward.10} parent=0 // pred_check
    _
  $region67: #{gdram_forward.10} parent=0 // pred_check_branch
    %61 = sbr.rel (0) target = $region69
  $region68: #{gdram_forward.10} parent=0 // pred_region
    _
  $region69: #{gdram_forward.10} parent=0 // pred_fallthru
    _
  // Predicated region
  $region70: #{gdram_forward.10} parent=0 // pred_check
    _
  $region71: #{gdram_forward.10} parent=0 // pred_check_branch
    %63 = sbr.rel (0) target = $region73
  $region72: #{gdram_forward.10} parent=0 // pred_region
    _
  $region73: #{gdram_forward.10} parent=0 // pred_fallthru
    _
  %v65 = vld [vmem:[%s0] sm:$0xff]
  %v66 = vld [vmem:[%s0 + $0x8] sm:$0x3f]
  %v67 = vld [vmem:[%s6] sm:$0xf]
  %v68 = vld [vmem:[%s6 + $0x4] sm:$0xf]
  %v69 = vld [vmem:[%s6 + $0x8] sm:$0xf]
  %v70 = vld [vmem:[%s6 + $0xc] sm:$0xf]
  %v71 = vld [vmem:[%s6 + $0x10] sm:$0xf]
  %v72 = vld [vmem:[%s6 + $0x14] sm:$0xf]
  %v73 = vld [vmem:[%s6 + $0x18] sm:$0xf]
  %v74 = vld [vmem:[%s6 + $0x1c] sm:$0xf]
  %v75 = vld [vmem:[%s6 + $0x20] sm:$0xf]
  %v76 = vld [vmem:[%s6 + $0x24] sm:$0xf]
  %v77 = vld [vmem:[%s6 + $0x28] sm:$0xf]
  %v78 = vld [vmem:[%s6 + $0x2c] sm:$0xf]
  %v79 = vld [vmem:[%s6 + $0x30] sm:$0xf]
  %v80 = vld [vmem:[%s6 + $0x34] sm:$0xf]
  %v81 = vld [vmem:[%s6 + $0x38] sm:$0xf]
  %v82 = vld [vmem:[%s6 + $0x3c] sm:$0xf]
  %v83 = vld [vmem:[%s6 + $0x40] sm:$0xf]
  %v84 = vld [vmem:[%s6 + $0x44] sm:$0xf]
  %v85 = vld [vmem:[%s6 + $0x48] sm:$0xf]
  %v86 = vld [vmem:[%s6 + $0x4c] sm:$0xf]
  %v87 = vld [vmem:[%s6 + $0x50] sm:$0xf]
  %v88 = vld [vmem:[%s6 + $0x54] sm:$0xf]
  %v89 = vld [vmem:[%s6 + $0x58] sm:$0xf]
  %v90 = vld [vmem:[%s6 + $0x5c] sm:$0xf]
  %v91 = vld [vmem:[%s6 + $0x60] sm:$0xf]
  %v92 = vld [vmem:[%s6 + $0x64] sm:$0xf]
  %v93 = vld [vmem:[%s6 + $0x68] sm:$0xf]
  %v94 = vld [vmem:[%s6 + $0x6c] sm:$0xf]
  %v95 = vld [vmem:[%s6 + $0x70] sm:$0xf]
  %v96 = vld [vmem:[%s6 + $0x74] sm:$0xf]
  %v97 = vld [vmem:[%s6 + $0x78] sm:$0xf]
  %v98 = vld [vmem:[%s6 + $0x7c] sm:$0xf]
  %v99 = vld [vmem:[%s6 + $0x80] sm:$0xf]
  %v100 = vld [vmem:[%s6 + $0x84] sm:$0xf]
  %v101 = vld [vmem:[%s6 + $0x88] sm:$0xf]
  %v102 = vld [vmem:[%s6 + $0x8c] sm:$0xf]
  %v103 = vld [vmem:[%s6 + $0x90] sm:$0xf]
  %v104 = vld [vmem:[%s6 + $0x94] sm:$0xf]
  %v105 = vld [vmem:[%s6 + $0x98] sm:$0xf]
  %v106 = vld [vmem:[%s6 + $0x9c] sm:$0xf]
  %v107 = vld [vmem:[%s6 + $0xa0] sm:$0xf]
  %v108 = vld [vmem:[%s6 + $0xa4] sm:$0xf]
  %v109 = vld [vmem:[%s6 + $0xa8] sm:$0xf]
  %v110 = vld [vmem:[%s6 + $0xac] sm:$0xf]
  %v111 = vld [vmem:[%s6 + $0xb0] sm:$0xf]
  %v112 = vld [vmem:[%s6 + $0xb4] sm:$0xf]
  %v113 = vld [vmem:[%s6 + $0xb8] sm:$0xf]
  %v114 = vld [vmem:[%s6 + $0xbc] sm:$0xf]
  %v115 = vld [vmem:[%s6 + $0xc0] sm:$0xf]
  %v116 = vld [vmem:[%s6 + $0xc4] sm:$0xf]
  %v117 = vld [vmem:[%s6 + $0xc8] sm:$0xf]
  %v118 = vld [vmem:[%s6 + $0xcc] sm:$0xf]
  %v119 = vld [vmem:[%s6 + $0xd0] sm:$0xf]
  %v120 = vld [vmem:[%s6 + $0xd4] sm:$0xf]
  %v121 = vld [vmem:[%s6 + $0xd8] sm:$0xf]
  %v122 = vld [vmem:[%s6 + $0xdc] sm:$0xf]
  %v123 = vld [vmem:[%s6 + $0xe0] sm:$0xf]
  %v124 = vld [vmem:[%s6 + $0xe4] sm:$0xf]
  %v125 = vld [vmem:[%s6 + $0xe8] sm:$0xf]
  %v126 = vld [vmem:[%s6 + $0xec] sm:$0xf]
  %v127 = vld [vmem:[%s6 + $0xf0] sm:$0xf]
  %v128 = vld [vmem:[%s6 + $0xf4] sm:$0xf]
  %v129 = vld [vmem:[%s6 + $0xf8] sm:$0xf]
  %v130 = vld [vmem:[%s6 + $0xfc] sm:$0xf]
  %v131 = vld [vmem:[%s6 + $0x100] sm:$0xf]
  %v132 = vld [vmem:[%s6 + $0x104] sm:$0xf]
  %v133 = vld [vmem:[%s6 + $0x108] sm:$0xf]
  %v134 = vld [vmem:[%s6 + $0x10c] sm:$0xf]
  %v135 = vld [vmem:[%s6 + $0x110] sm:$0xf]
  %v136 = vld [vmem:[%s6 + $0x114] sm:$0xf]
  %v137 = vld [vmem:[%s6 + $0x118] sm:$0xf]
  %v138 = vld [vmem:[%s6 + $0x11c] sm:$0xf]
  %v139 = vld [vmem:[%s6 + $0x120] sm:$0xf]
  %v140 = vld [vmem:[%s6 + $0x124] sm:$0xf]
  %v141 = vld [vmem:[%s6 + $0x128] sm:$0xf]
  %v142 = vld [vmem:[%s6 + $0x12c] sm:$0xf]
  %v143 = vld [vmem:[%s6 + $0x130] sm:$0xf]
  %v144 = vld [vmem:[%s6 + $0x134] sm:$0xf]
  %v145 = vld [vmem:[%s6 + $0x138] sm:$0xf]
  %v146 = vld [vmem:[%s6 + $0x13c] sm:$0xf]
  %v147 = vld [vmem:[%s6 + $0x140] sm:$0xf]
  %v148 = vld [vmem:[%s6 + $0x144] sm:$0xf]
  %v149 = vld [vmem:[%s6 + $0x148] sm:$0xf]
  %v150 = vld [vmem:[%s6 + $0x14c] sm:$0xf]
  %v151 = vld [vmem:[%s6 + $0x150] sm:$0xf]
  %v152 = vld [vmem:[%s6 + $0x154] sm:$0xf]
  %v153 = vld [vmem:[%s6 + $0x158] sm:$0xf]
  %v154 = vld [vmem:[%s6 + $0x15c] sm:$0xf]
  %v155 = vld [vmem:[%s6 + $0x160] sm:$0xf]
  %v156 = vld [vmem:[%s6 + $0x164] sm:$0xf]
  %v157 = vld [vmem:[%s6 + $0x168] sm:$0xf]
  %v158 = vld [vmem:[%s6 + $0x16c] sm:$0xf]
  %v159 = vld [vmem:[%s6 + $0x170] sm:$0xf]
  %v160 = vld [vmem:[%s6 + $0x174] sm:$0xf]
  %v161 = vld [vmem:[%s6 + $0x178] sm:$0xf]
  %v162 = vld [vmem:[%s6 + $0x17c] sm:$0xf]
  %v163 = vld [vmem:[%s6 + $0x180] sm:$0xf]
  %v164 = vld [vmem:[%s6 + $0x184] sm:$0xf]
  %v165 = vld [vmem:[%s6 + $0x188] sm:$0xf]
  %v166 = vld [vmem:[%s6 + $0x18c] sm:$0xf]
  %v167 = vld [vmem:[%s6 + $0x190] sm:$0xf]
  %v168 = vld [vmem:[%s6 + $0x194] sm:$0xf]
  %v169 = vld [vmem:[%s6 + $0x198] sm:$0xf]
  %v170 = vld [vmem:[%s6 + $0x19c] sm:$0xf]
  %v171 = vld [vmem:[%s6 + $0x1a0] sm:$0xf]
  %v172 = vld [vmem:[%s6 + $0x1a4] sm:$0xf]
  %v173 = vld [vmem:[%s6 + $0x1a8] sm:$0xf]
  %v174 = vld [vmem:[%s6 + $0x1ac] sm:$0xf]
  %v175 = vld [vmem:[%s6 + $0x1b0] sm:$0xf]
  %v176 = vld [vmem:[%s6 + $0x1b4] sm:$0xf]
  %v177 = vld [vmem:[%s6 + $0x1b8] sm:$0xf]
  %v178 = vld [vmem:[%s6 + $0x1bc] sm:$0xf]
  %v179 = vld [vmem:[%s6 + $0x1c0] sm:$0xf]
  %v180 = vld [vmem:[%s6 + $0x1c4] sm:$0xf]
  %v181 = vld [vmem:[%s6 + $0x1c8] sm:$0xf]
  %v182 = vld [vmem:[%s6 + $0x1cc] sm:$0xf]
  %v183 = vld [vmem:[%s6 + $0x1d0] sm:$0xf]
  %v184 = vld [vmem:[%s6 + $0x1d4] sm:$0xf]
  %v185 = vld [vmem:[%s6 + $0x1d8] sm:$0xf]
  %v186 = vld [vmem:[%s6 + $0x1dc] sm:$0xf]
  %v187 = vld [vmem:[%s6 + $0x1e0] sm:$0xf]
  %v188 = vld [vmem:[%s6 + $0x1e4] sm:$0xf]
  %v189 = vld [vmem:[%s6 + $0x1e8] sm:$0xf]
  %v190 = vld [vmem:[%s6 + $0x1ec] sm:$0xf]
  %v191 = vld [vmem:[%s6 + $0x1f0] sm:$0xf]
  %v192 = vld [vmem:[%s6 + $0x1f4] sm:$0xf]
  %v193 = vld [vmem:[%s6 + $0x1f8] sm:$0xf]
  %v194 = vld [vmem:[%s6 + $0x1fc] sm:$0xf]
  %v195 = vld [vmem:[%s6 + $0x200] sm:$0xf]
  %v196 = vld [vmem:[%s6 + $0x204] sm:$0xf]
  %v197 = vld [vmem:[%s6 + $0x208] sm:$0xf]
  %v198 = vld [vmem:[%s6 + $0x20c] sm:$0xf]
  %v199 = vld [vmem:[%s6 + $0x210] sm:$0xf]
  %v200 = vld [vmem:[%s6 + $0x214] sm:$0xf]
  %v201 = vld [vmem:[%s6 + $0x218] sm:$0xf]
  %v202 = vld [vmem:[%s6 + $0x21c] sm:$0xf]
  %v203 = vld [vmem:[%s6 + $0x220] sm:$0xf]
  %v204 = vld [vmem:[%s6 + $0x224] sm:$0xf]
  %v205 = vld [vmem:[%s6 + $0x228] sm:$0xf]
  %v206 = vld [vmem:[%s6 + $0x22c] sm:$0xf]
  %v207 = vld [vmem:[%s6 + $0x230] sm:$0xf]
  %v208 = vld [vmem:[%s6 + $0x234] sm:$0xf]
  %v209 = vld [vmem:[%s6 + $0x238] sm:$0xf]
  %v210 = vld [vmem:[%s6 + $0x23c] sm:$0xf]
  %v211 = vld [vmem:[%s6 + $0x240] sm:$0xf]
  %v212 = vld [vmem:[%s6 + $0x244] sm:$0xf]
  %v213 = vld [vmem:[%s6 + $0x248] sm:$0xf]
  %v214 = vld [vmem:[%s6 + $0x24c] sm:$0xf]
  %v215 = vld [vmem:[%s6 + $0x250] sm:$0xf]
  %v216 = vld [vmem:[%s6 + $0x254] sm:$0xf]
  %v217 = vld [vmem:[%s6 + $0x258] sm:$0xf]
  %v218 = vld [vmem:[%s6 + $0x25c] sm:$0xf]
  %v219 = vld [vmem:[%s6 + $0x260] sm:$0xf]
  %v220 = vld [vmem:[%s6 + $0x264] sm:$0xf]
  %v221 = vld [vmem:[%s6 + $0x268] sm:$0xf]
  %v222 = vld [vmem:[%s6 + $0x26c] sm:$0xf]
  %v223 = vld [vmem:[%s6 + $0x270] sm:$0xf]
  %v224 = vld [vmem:[%s6 + $0x274] sm:$0xf]
  %v225 = vld [vmem:[%s6 + $0x278] sm:$0xf]
  %v226 = vld [vmem:[%s6 + $0x27c] sm:$0xf]
  %v227 = vld [vmem:[%s6 + $0x280] sm:$0xf]
  %v228 = vld [vmem:[%s6 + $0x284] sm:$0xf]
  %v229 = vld [vmem:[%s6 + $0x288] sm:$0xf]
  %v230 = vld [vmem:[%s6 + $0x28c] sm:$0xf]
  %v231 = vld [vmem:[%s6 + $0x290] sm:$0xf]
  %v232 = vld [vmem:[%s6 + $0x294] sm:$0xf]
  %v233 = vld [vmem:[%s6 + $0x298] sm:$0xf]
  %v234 = vld [vmem:[%s6 + $0x29c] sm:$0xf]
  %v235 = vld [vmem:[%s6 + $0x2a0] sm:$0xf]
  %v236 = vld [vmem:[%s6 + $0x2a4] sm:$0xf]
  %v237 = vld [vmem:[%s6 + $0x2a8] sm:$0xf]
  %v238 = vld [vmem:[%s6 + $0x2ac] sm:$0xf]
  %v239 = vld [vmem:[%s6 + $0x2b0] sm:$0xf]
  %v240 = vld [vmem:[%s6 + $0x2b4] sm:$0xf]
  %v241 = vld [vmem:[%s6 + $0x2b8] sm:$0xf]
  %v242 = vld [vmem:[%s6 + $0x2bc] sm:$0xf]
  %v243 = vld [vmem:[%s6 + $0x2c0] sm:$0xf]
  %v244 = vld [vmem:[%s6 + $0x2c4] sm:$0xf]
  %v245 = vld [vmem:[%s6 + $0x2c8] sm:$0xf]
  %v246 = vld [vmem:[%s6 + $0x2cc] sm:$0xf]
  %v247 = vld [vmem:[%s6 + $0x2d0] sm:$0xf]
  %v248 = vld [vmem:[%s6 + $0x2d4] sm:$0xf]
  %v249 = vld [vmem:[%s6 + $0x2d8] sm:$0xf]
  %v250 = vld [vmem:[%s6 + $0x2dc] sm:$0xf]
  %v251 = vld [vmem:[%s6 + $0x2e0] sm:$0xf]
  %v252 = vld [vmem:[%s6 + $0x2e4] sm:$0xf]
  %v253 = vld [vmem:[%s6 + $0x2e8] sm:$0xf]
  %v254 = vld [vmem:[%s6 + $0x2ec] sm:$0xf]
  %v255 = vld [vmem:[%s6 + $0x2f0] sm:$0xf]
  %v256 = vld [vmem:[%s6 + $0x2f4] sm:$0xf]
  %v257 = vld [vmem:[%s6 + $0x2f8] sm:$0xf]
  %v258 = vld [vmem:[%s6 + $0x2fc] sm:$0xf]
  %v259 = vld [vmem:[%s6 + $0x300] sm:$0xf]
  %v260 = vld [vmem:[%s6 + $0x304] sm:$0xf]
  %v261 = vld [vmem:[%s6 + $0x308] sm:$0xf]
  %v262 = vld [vmem:[%s6 + $0x30c] sm:$0xf]
  %v263 = vld [vmem:[%s6 + $0x310] sm:$0xf]
  %v264 = vld [vmem:[%s6 + $0x314] sm:$0xf]
  %v265 = vld [vmem:[%s6 + $0x318] sm:$0xf]
  %v266 = vld [vmem:[%s6 + $0x31c] sm:$0xf]
  %v267 = vld [vmem:[%s6 + $0x320] sm:$0xf]
  %v268 = vld [vmem:[%s6 + $0x324] sm:$0xf]
  %v269 = vld [vmem:[%s6 + $0x328] sm:$0xf]
  %v270 = vld [vmem:[%s6 + $0x32c] sm:$0xf]
  %v271 = vld [vmem:[%s6 + $0x330] sm:$0xf]
  %v272 = vld [vmem:[%s6 + $0x334] sm:$0xf]
  %v273 = vld [vmem:[%s6 + $0x338] sm:$0xf]
  %v274 = vld [vmem:[%s6 + $0x33c] sm:$0xf]
  %v275 = vld [vmem:[%s6 + $0x340] sm:$0xf]
  %v276 = vld [vmem:[%s6 + $0x344] sm:$0xf]
  %v277 = vld [vmem:[%s6 + $0x348] sm:$0xf]
  %v278 = vld [vmem:[%s6 + $0x34c] sm:$0xf]
  %v279 = vld [vmem:[%s6 + $0x350] sm:$0xf]
  %v280 = vld [vmem:[%s6 + $0x354] sm:$0xf]
  %v281 = vld [vmem:[%s6 + $0x358] sm:$0xf]
  %v282 = vld [vmem:[%s6 + $0x35c] sm:$0xf]
  %v283 = vld [vmem:[%s6 + $0x360] sm:$0xf]
  %v284 = vld [vmem:[%s6 + $0x364] sm:$0xf]
  %v285 = vld [vmem:[%s6 + $0x368] sm:$0xf]
  %v286 = vld [vmem:[%s6 + $0x36c] sm:$0xf]
  %v287 = vld [vmem:[%s6 + $0x370] sm:$0xf]
  %v288 = vld [vmem:[%s6 + $0x374] sm:$0xf]
  %v289 = vld [vmem:[%s6 + $0x378] sm:$0xf]
  %v290 = vld [vmem:[%s6 + $0x37c] sm:$0xf]
  %v291 = vld [vmem:[%s7] sm:$0x1]
  %v293 = vlaneseq
  %v294 = vshrl.u32 %v293, 7
  %v295 = vsub.s32 0, %v294
  %v296 = vrot.slane %v291, %v295
  %v300 = vcombine.high %v65, %v65
  %v302 = vunpack.c.l.s4 1966171168
  %v303 = vunpack.c.0.s8 %v302
  %v304 = vlaneseq
  %v305 = vshrl.u32 %v304, 7
  %v306 = vsub.s32 %v303, %v305
  %v307 = vrot.slane %v65, %v306
  %v309 = vunpack.c.l.s4 1966171168
  %v310 = vunpack.c.0.s8 %v309
  %v311 = vlaneseq
  %v312 = vshrl.u32 %v311, 7
  %v313 = vsub.s32 %v310, %v312
  %v314 = vrot.slane %v300, %v313
  %v315 = vcombine.high %v307, %v307
  %v316 = vcombine.high %v314, %v314
  %v318 = vunpack.c.l.s4 1966171168
  %v319 = vunpack.c.0.s8 %v318
  %v320 = vlaneseq
  %v321 = vshrl.u32 %v320, 7
  %v322 = vsub.s32 %v319, %v321
  %v323 = vrot.slane %v307, %v322
  %v325 = vunpack.c.l.s4 1966171168
  %v326 = vunpack.c.0.s8 %v325
  %v327 = vlaneseq
  %v328 = vshrl.u32 %v327, 7
  %v329 = vsub.s32 %v326, %v328
  %v330 = vrot.slane %v314, %v329
  %v332 = vunpack.c.l.s4 1966171168
  %v333 = vunpack.c.0.s8 %v332
  %v334 = vlaneseq
  %v335 = vshrl.u32 %v334, 7
  %v336 = vsub.s32 %v333, %v335
  %v337 = vrot.slane %v315, %v336
  %v339 = vunpack.c.l.s4 1966171168
  %v340 = vunpack.c.0.s8 %v339
  %v341 = vlaneseq
  %v342 = vshrl.u32 %v341, 7
  %v343 = vsub.s32 %v340, %v342
  %v344 = vrot.slane %v316, %v343
  %v345 = vcombine.high %v323, %v323
  %v346 = vcombine.high %v330, %v330
  %v347 = vcombine.high %v337, %v337
  %v348 = vcombine.high %v344, %v344
  %v349 = vcombine.high %v66, %v66
  %v351 = vunpack.c.l.s4 1966171168
  %v352 = vunpack.c.0.s8 %v351
  %v353 = vlaneseq
  %v354 = vshrl.u32 %v353, 7
  %v355 = vsub.s32 %v352, %v354
  %v356 = vrot.slane %v66, %v355
  %v358 = vunpack.c.l.s4 1966171168
  %v359 = vunpack.c.0.s8 %v358
  %v360 = vlaneseq
  %v361 = vshrl.u32 %v360, 7
  %v362 = vsub.s32 %v359, %v361
  %v363 = vrot.slane %v349, %v362
  %v364 = vcombine.high %v356, %v356
  %v365 = vcombine.high %v363, %v363
  %v367 = vunpack.c.l.s4 1966171168
  %v368 = vunpack.c.0.s8 %v367
  %v369 = vlaneseq
  %v370 = vshrl.u32 %v369, 7
  %v371 = vsub.s32 %v368, %v370
  %v372 = vrot.slane %v356, %v371
  %v374 = vunpack.c.l.s4 1966171168
  %v375 = vunpack.c.0.s8 %v374
  %v376 = vlaneseq
  %v377 = vshrl.u32 %v376, 7
  %v378 = vsub.s32 %v375, %v377
  %v379 = vrot.slane %v363, %v378
  %v381 = vunpack.c.l.s4 1966171168
  %v382 = vunpack.c.0.s8 %v381
  %v383 = vlaneseq
  %v384 = vshrl.u32 %v383, 7
  %v385 = vsub.s32 %v382, %v384
  %v386 = vrot.slane %v364, %v385
  %v388 = vunpack.c.l.s4 1966171168
  %v389 = vunpack.c.0.s8 %v388
  %v390 = vlaneseq
  %v391 = vshrl.u32 %v390, 7
  %v392 = vsub.s32 %v389, %v391
  %v393 = vrot.slane %v365, %v392
  %v394 = vcombine.high %v372, %v372
  %v395 = vcombine.high %v386, %v386
  %v634 = vunpack.c.l.b16 %v67
  %v635 = vunpack.c.l.b16 %v68
  %v636 = vunpack.c.l.b16 %v69
  %v637 = vunpack.c.l.b16 %v70
  %v638 = vunpack.c.l.b16 %v71
  %v639 = vunpack.c.l.b16 %v72
  %v640 = vunpack.c.l.b16 %v73
  %v641 = vunpack.c.l.b16 %v74
  %v642 = vunpack.c.l.b16 %v75
  %v643 = vunpack.c.l.b16 %v76
  %v644 = vunpack.c.l.b16 %v77
  %v645 = vunpack.c.l.b16 %v78
  %v646 = vunpack.c.l.b16 %v79
  %v647 = vunpack.c.l.b16 %v80
  %v648 = vunpack.c.l.b16 %v81
  %v649 = vunpack.c.l.b16 %v82
  %v650 = vunpack.c.l.b16 %v83
  %v651 = vunpack.c.l.b16 %v84
  %v652 = vunpack.c.l.b16 %v85
  %v653 = vunpack.c.l.b16 %v86
  %v654 = vunpack.c.l.b16 %v87
  %v655 = vunpack.c.l.b16 %v88
  %v656 = vunpack.c.l.b16 %v89
  %v657 = vunpack.c.l.b16 %v90
  %v658 = vunpack.c.l.b16 %v91
  %v659 = vunpack.c.l.b16 %v92
  %v660 = vunpack.c.l.b16 %v93
  %v661 = vunpack.c.l.b16 %v94
  %v662 = vunpack.c.l.b16 %v95
  %v663 = vunpack.c.l.b16 %v96
  %v664 = vunpack.c.l.b16 %v97
  %v665 = vunpack.c.l.b16 %v98
  %v666 = vunpack.c.l.b16 %v99
  %v667 = vunpack.c.l.b16 %v100
  %v668 = vunpack.c.l.b16 %v101
  %v669 = vunpack.c.l.b16 %v102
  %v670 = vunpack.c.l.b16 %v103
  %v671 = vunpack.c.l.b16 %v104
  %v672 = vunpack.c.l.b16 %v105
  %v673 = vunpack.c.l.b16 %v106
  %v674 = vunpack.c.l.b16 %v107
  %v675 = vunpack.c.l.b16 %v108
  %v676 = vunpack.c.l.b16 %v109
  %v677 = vunpack.c.l.b16 %v110
  %v678 = vunpack.c.l.b16 %v111
  %v679 = vunpack.c.l.b16 %v112
  %v680 = vunpack.c.l.b16 %v113
  %v681 = vunpack.c.l.b16 %v114
  %v682 = vunpack.c.l.b16 %v115
  %v683 = vunpack.c.l.b16 %v116
  %v684 = vunpack.c.l.b16 %v117
  %v685 = vunpack.c.l.b16 %v118
  %v686 = vunpack.c.l.b16 %v119
  %v687 = vunpack.c.l.b16 %v120
  %v688 = vunpack.c.l.b16 %v121
  %v689 = vunpack.c.l.b16 %v122
  %v690 = vunpack.c.l.b16 %v123
  %v691 = vunpack.c.l.b16 %v124
  %v692 = vunpack.c.l.b16 %v125
  %v693 = vunpack.c.l.b16 %v126
  %v694 = vunpack.c.l.b16 %v127
  %v695 = vunpack.c.l.b16 %v128
  %v696 = vunpack.c.l.b16 %v129
  %v697 = vunpack.c.l.b16 %v130
  %v698 = vunpack.c.l.b16 %v131
  %v699 = vunpack.c.l.b16 %v132
  %v700 = vunpack.c.l.b16 %v133
  %v701 = vunpack.c.l.b16 %v134
  %v702 = vunpack.c.l.b16 %v135
  %v703 = vunpack.c.l.b16 %v136
  %v704 = vunpack.c.l.b16 %v137
  %v705 = vunpack.c.l.b16 %v138
  %v706 = vunpack.c.l.b16 %v139
  %v707 = vunpack.c.l.b16 %v140
  %v708 = vunpack.c.l.b16 %v141
  %v709 = vunpack.c.l.b16 %v142
  %v710 = vunpack.c.l.b16 %v143
  %v711 = vunpack.c.l.b16 %v144
  %v712 = vunpack.c.l.b16 %v145
  %v713 = vunpack.c.l.b16 %v146
  %v714 = vunpack.c.l.b16 %v147
  %v715 = vunpack.c.l.b16 %v148
  %v716 = vunpack.c.l.b16 %v149
  %v717 = vunpack.c.l.b16 %v150
  %v718 = vunpack.c.l.b16 %v151
  %v719 = vunpack.c.l.b16 %v152
  %v720 = vunpack.c.l.b16 %v153
  %v721 = vunpack.c.l.b16 %v154
  %v722 = vunpack.c.l.b16 %v155
  %v723 = vunpack.c.l.b16 %v156
  %v724 = vunpack.c.l.b16 %v157
  %v725 = vunpack.c.l.b16 %v158
  %v726 = vunpack.c.l.b16 %v159
  %v727 = vunpack.c.l.b16 %v160
  %v728 = vunpack.c.l.b16 %v161
  %v729 = vunpack.c.l.b16 %v162
  %v730 = vunpack.c.l.b16 %v163
  %v731 = vunpack.c.l.b16 %v164
  %v732 = vunpack.c.l.b16 %v165
  %v733 = vunpack.c.l.b16 %v166
  %v734 = vunpack.c.l.b16 %v167
  %v735 = vunpack.c.l.b16 %v168
  %v736 = vunpack.c.l.b16 %v169
  %v737 = vunpack.c.l.b16 %v170
  %v738 = vunpack.c.l.b16 %v171
  %v739 = vunpack.c.l.b16 %v172
  %v740 = vunpack.c.l.b16 %v173
  %v741 = vunpack.c.l.b16 %v174
  %v742 = vunpack.c.l.b16 %v175
  %v743 = vunpack.c.l.b16 %v176
  %v744 = vunpack.c.l.b16 %v177
  %v745 = vunpack.c.l.b16 %v178
  %v746 = vunpack.c.l.b16 %v179
  %v747 = vunpack.c.l.b16 %v180
  %v748 = vunpack.c.l.b16 %v181
  %v749 = vunpack.c.l.b16 %v182
  %v750 = vunpack.c.l.b16 %v183
  %v751 = vunpack.c.l.b16 %v184
  %v752 = vunpack.c.l.b16 %v185
  %v753 = vunpack.c.l.b16 %v186
  %v754 = vunpack.c.l.b16 %v187
  %v755 = vunpack.c.l.b16 %v188
  %v756 = vunpack.c.l.b16 %v189
  %v757 = vunpack.c.l.b16 %v190
  %v758 = vunpack.c.l.b16 %v191
  %v759 = vunpack.c.l.b16 %v192
  %v760 = vunpack.c.l.b16 %v193
  %v761 = vunpack.c.l.b16 %v194
  %v762 = vunpack.c.l.b16 %v195
  %v763 = vunpack.c.l.b16 %v196
  %v764 = vunpack.c.l.b16 %v197
  %v765 = vunpack.c.l.b16 %v198
  %v766 = vunpack.c.l.b16 %v199
  %v767 = vunpack.c.l.b16 %v200
  %v768 = vunpack.c.l.b16 %v201
  %v769 = vunpack.c.l.b16 %v202
  %v770 = vunpack.c.l.b16 %v203
  %v771 = vunpack.c.l.b16 %v204
  %v772 = vunpack.c.l.b16 %v205
  %v773 = vunpack.c.l.b16 %v206
  %v774 = vunpack.c.l.b16 %v207
  %v775 = vunpack.c.l.b16 %v208
  %v776 = vunpack.c.l.b16 %v209
  %v777 = vunpack.c.l.b16 %v210
  %v778 = vunpack.c.l.b16 %v211
  %v779 = vunpack.c.l.b16 %v212
  %v780 = vunpack.c.l.b16 %v213
  %v781 = vunpack.c.l.b16 %v214
  %v782 = vunpack.c.l.b16 %v215
  %v783 = vunpack.c.l.b16 %v216
  %v784 = vunpack.c.l.b16 %v217
  %v785 = vunpack.c.l.b16 %v218
  %v786 = vunpack.c.l.b16 %v219
  %v787 = vunpack.c.l.b16 %v220
  %v788 = vunpack.c.l.b16 %v221
  %v789 = vunpack.c.l.b16 %v222
  %v790 = vunpack.c.l.b16 %v223
  %v791 = vunpack.c.l.b16 %v224
  %v792 = vunpack.c.l.b16 %v225
  %v793 = vunpack.c.l.b16 %v226
  %v794 = vunpack.c.l.b16 %v227
  %v795 = vunpack.c.l.b16 %v228
  %v796 = vunpack.c.l.b16 %v229
  %v797 = vunpack.c.l.b16 %v230
  %v798 = vunpack.c.l.b16 %v231
  %v799 = vunpack.c.l.b16 %v232
  %v800 = vunpack.c.l.b16 %v233
  %v801 = vunpack.c.l.b16 %v234
  %v802 = vunpack.c.l.b16 %v235
  %v803 = vunpack.c.l.b16 %v236
  %v804 = vunpack.c.l.b16 %v237
  %v805 = vunpack.c.l.b16 %v238
  %v806 = vunpack.c.l.b16 %v239
  %v807 = vunpack.c.l.b16 %v240
  %v808 = vunpack.c.l.b16 %v241
  %v809 = vunpack.c.l.b16 %v242
  %v810 = vunpack.c.l.b16 %v243
  %v811 = vunpack.c.l.b16 %v244
  %v812 = vunpack.c.l.b16 %v245
  %v813 = vunpack.c.l.b16 %v246
  %v814 = vunpack.c.l.b16 %v247
  %v815 = vunpack.c.l.b16 %v248
  %v816 = vunpack.c.l.b16 %v249
  %v817 = vunpack.c.l.b16 %v250
  %v818 = vunpack.c.l.b16 %v251
  %v819 = vunpack.c.l.b16 %v252
  %v820 = vunpack.c.l.b16 %v253
  %v821 = vunpack.c.l.b16 %v254
  %v822 = vunpack.c.l.b16 %v255
  %v823 = vunpack.c.l.b16 %v256
  %v824 = vunpack.c.l.b16 %v257
  %v825 = vunpack.c.l.b16 %v258
  %v826 = vunpack.c.l.b16 %v259
  %v827 = vunpack.c.l.b16 %v260
  %v828 = vunpack.c.l.b16 %v261
  %v829 = vunpack.c.l.b16 %v262
  %v830 = vunpack.c.l.b16 %v263
  %v831 = vunpack.c.l.b16 %v264
  %v832 = vunpack.c.l.b16 %v265
  %v833 = vunpack.c.l.b16 %v266
  %v834 = vunpack.c.l.b16 %v267
  %v835 = vunpack.c.l.b16 %v268
  %v836 = vunpack.c.l.b16 %v269
  %v837 = vunpack.c.l.b16 %v270
  %v838 = vunpack.c.l.b16 %v271
  %v839 = vunpack.c.l.b16 %v272
  %v840 = vunpack.c.l.b16 %v273
  %v841 = vunpack.c.l.b16 %v274
  %v842 = vunpack.c.l.b16 %v275
  %v843 = vunpack.c.l.b16 %v276
  %v844 = vunpack.c.l.b16 %v277
  %v845 = vunpack.c.l.b16 %v278
  %v846 = vunpack.c.l.b16 %v279
  %v847 = vunpack.c.l.b16 %v280
  %v848 = vunpack.c.l.b16 %v281
  %v849 = vunpack.c.l.b16 %v282
  %v850 = vunpack.c.l.b16 %v283
  %v851 = vunpack.c.l.b16 %v284
  %v852 = vunpack.c.l.b16 %v285
  %v853 = vunpack.c.l.b16 %v286
  %v854 = vunpack.c.l.b16 %v287
  %v855 = vunpack.c.l.b16 %v288
  %v856 = vunpack.c.l.b16 %v289
  %v857 = vunpack.c.l.b16 %v290
  %v858 = vpack.c.b16 %v635, %v634
  %v859 = vpack.c.b16 %v637, %v636
  %v860 = vpack.c.b16 %v639, %v638
  %v861 = vpack.c.b16 %v641, %v640
  %v862 = vpack.c.b16 %v643, %v642
  %v863 = vpack.c.b16 %v645, %v644
  %v864 = vpack.c.b16 %v647, %v646
  %v865 = vpack.c.b16 %v649, %v648
  %v866 = vpack.c.b16 %v651, %v650
  %v867 = vpack.c.b16 %v653, %v652
  %v868 = vpack.c.b16 %v655, %v654
  %v869 = vpack.c.b16 %v657, %v656
  %v870 = vpack.c.b16 %v659, %v658
  %v871 = vpack.c.b16 %v661, %v660
  %v872 = vpack.c.b16 %v663, %v662
  %v873 = vpack.c.b16 %v665, %v664
  %v874 = vpack.c.b16 %v667, %v666
  %v875 = vpack.c.b16 %v669, %v668
  %v876 = vpack.c.b16 %v671, %v670
  %v877 = vpack.c.b16 %v673, %v672
  %v878 = vpack.c.b16 %v675, %v674
  %v879 = vpack.c.b16 %v677, %v676
  %v880 = vpack.c.b16 %v679, %v678
  %v881 = vpack.c.b16 %v681, %v680
  %v882 = vpack.c.b16 %v683, %v682
  %v883 = vpack.c.b16 %v685, %v684
  %v884 = vpack.c.b16 %v687, %v686
  %v885 = vpack.c.b16 %v689, %v688
  %v886 = vpack.c.b16 %v691, %v690
  %v887 = vpack.c.b16 %v693, %v692
  %v888 = vpack.c.b16 %v695, %v694
  %v889 = vpack.c.b16 %v697, %v696
  %v890 = vpack.c.b16 %v699, %v698
  %v891 = vpack.c.b16 %v701, %v700
  %v892 = vpack.c.b16 %v703, %v702
  %v893 = vpack.c.b16 %v705, %v704
  %v894 = vpack.c.b16 %v707, %v706
  %v895 = vpack.c.b16 %v709, %v708
  %v896 = vpack.c.b16 %v711, %v710
  %v897 = vpack.c.b16 %v713, %v712
  %v898 = vpack.c.b16 %v715, %v714
  %v899 = vpack.c.b16 %v717, %v716
  %v900 = vpack.c.b16 %v719, %v718
  %v901 = vpack.c.b16 %v721, %v720
  %v902 = vpack.c.b16 %v723, %v722
  %v903 = vpack.c.b16 %v725, %v724
  %v904 = vpack.c.b16 %v727, %v726
  %v905 = vpack.c.b16 %v729, %v728
  %v906 = vpack.c.b16 %v731, %v730
  %v907 = vpack.c.b16 %v733, %v732
  %v908 = vpack.c.b16 %v735, %v734
  %v909 = vpack.c.b16 %v737, %v736
  %v910 = vpack.c.b16 %v739, %v738
  %v911 = vpack.c.b16 %v741, %v740
  %v912 = vpack.c.b16 %v743, %v742
  %v913 = vpack.c.b16 %v745, %v744
  %v914 = vpack.c.b16 %v747, %v746
  %v915 = vpack.c.b16 %v749, %v748
  %v916 = vpack.c.b16 %v751, %v750
  %v917 = vpack.c.b16 %v753, %v752
  %v918 = vpack.c.b16 %v755, %v754
  %v919 = vpack.c.b16 %v757, %v756
  %v920 = vpack.c.b16 %v759, %v758
  %v921 = vpack.c.b16 %v761, %v760
  %v922 = vpack.c.b16 %v763, %v762
  %v923 = vpack.c.b16 %v765, %v764
  %v924 = vpack.c.b16 %v767, %v766
  %v925 = vpack.c.b16 %v769, %v768
  %v926 = vpack.c.b16 %v771, %v770
  %v927 = vpack.c.b16 %v773, %v772
  %v928 = vpack.c.b16 %v775, %v774
  %v929 = vpack.c.b16 %v777, %v776
  %v930 = vpack.c.b16 %v779, %v778
  %v931 = vpack.c.b16 %v781, %v780
  %v932 = vpack.c.b16 %v783, %v782
  %v933 = vpack.c.b16 %v785, %v784
  %v934 = vpack.c.b16 %v787, %v786
  %v935 = vpack.c.b16 %v789, %v788
  %v936 = vpack.c.b16 %v791, %v790
  %v937 = vpack.c.b16 %v793, %v792
  %v938 = vpack.c.b16 %v795, %v794
  %v939 = vpack.c.b16 %v797, %v796
  %v940 = vpack.c.b16 %v799, %v798
  %v941 = vpack.c.b16 %v801, %v800
  %v942 = vpack.c.b16 %v803, %v802
  %v943 = vpack.c.b16 %v805, %v804
  %v944 = vpack.c.b16 %v807, %v806
  %v945 = vpack.c.b16 %v809, %v808
  %v946 = vpack.c.b16 %v811, %v810
  %v947 = vpack.c.b16 %v813, %v812
  %v948 = vpack.c.b16 %v815, %v814
  %v949 = vpack.c.b16 %v817, %v816
  %v950 = vpack.c.b16 %v819, %v818
  %v951 = vpack.c.b16 %v821, %v820
  %v952 = vpack.c.b16 %v823, %v822
  %v953 = vpack.c.b16 %v825, %v824
  %v954 = vpack.c.b16 %v827, %v826
  %v955 = vpack.c.b16 %v829, %v828
  %v956 = vpack.c.b16 %v831, %v830
  %v957 = vpack.c.b16 %v833, %v832
  %v958 = vpack.c.b16 %v835, %v834
  %v959 = vpack.c.b16 %v837, %v836
  %v960 = vpack.c.b16 %v839, %v838
  %v961 = vpack.c.b16 %v841, %v840
  %v962 = vpack.c.b16 %v843, %v842
  %v963 = vpack.c.b16 %v845, %v844
  %v964 = vpack.c.b16 %v847, %v846
  %v965 = vpack.c.b16 %v849, %v848
  %v966 = vpack.c.b16 %v851, %v850
  %v967 = vpack.c.b16 %v853, %v852
  %v968 = vpack.c.b16 %v855, %v854
  %v969 = vpack.c.b16 %v857, %v856
  %1082 = vmatprep.subr.bf16.mxu0 0
  %1083 = vmatpush1.bf16.msra.mxu0 %v858
  %1084 = vmatprep.subr.bf16.mxu0 0
  %1085 = vmatpush1.bf16.msra.mxu0 %v859
  %1086 = vmatprep.subr.bf16.mxu0 0
  %1087 = vmatpush1.bf16.msra.mxu0 %v860
  %1088 = vmatprep.subr.bf16.mxu0 0
  %1089 = vmatpush1.bf16.msra.mxu0 %v861
  %1090 = vmatprep.subr.bf16.mxu0 0
  %1091 = vmatpush1.bf16.msra.mxu0 %v862
  %1092 = vmatprep.subr.bf16.mxu0 0
  %1093 = vmatpush1.bf16.msra.mxu0 %v863
  %1094 = vmatprep.subr.bf16.mxu0 0
  %1095 = vmatpush1.bf16.msra.mxu0 %v864
  %1096 = vmatprep.subr.bf16.mxu0 0
  %1097 = vmatpush1.bf16.msra.mxu0 %v865
  %1098 = vmatprep.subr.bf16.mxu0 0
  %1099 = vmatpush1.bf16.msra.mxu0 %v866
  %1100 = vmatprep.subr.bf16.mxu0 0
  %1101 = vmatpush1.bf16.msra.mxu0 %v867
  %1102 = vmatprep.subr.bf16.mxu0 0
  %1103 = vmatpush1.bf16.msra.mxu0 %v868
  %1104 = vmatprep.subr.bf16.mxu0 0
  %1105 = vmatpush1.bf16.msra.mxu0 %v869
  %1106 = vmatprep.subr.bf16.mxu0 0
  %1107 = vmatpush1.bf16.msra.mxu0 %v870
  %1108 = vmatprep.subr.bf16.mxu0 0
  %1109 = vmatpush1.bf16.msra.mxu0 %v871
  %1110 = vmatprep.subr.bf16.mxu0 0
  %1111 = vmatpush1.bf16.msra.mxu0 %v872
  %1112 = vmatprep.subr.bf16.mxu0 0
  %1113 = vmatpush1.bf16.msra.mxu0 %v873
  %1114 = vmatprep.mubr.bf16.mxu0 %v337
  %1115 = vmatmul.mubr.bf16.gmra.mrb[0].mxu0 %v323
  %v1116 = vpop.f32.mrb[0].mxu0
  %v1117 = vadd.f32 %v296, %v1116
  %v1118 = vpop.f32.mrb[0].mxu0
  %v1119 = vpop.f32.mrb[0].mxu0
  %v1120 = vpop.f32.mrb[0].mxu0
  %1121 = vdwg.mxu0
  %1122 = vmatprep.subr.bf16.mxu0 0
  %1123 = vmatpush1.bf16.msra.mxu0 %v874
  %1124 = vmatprep.subr.bf16.mxu0 0
  %1125 = vmatpush1.bf16.msra.mxu0 %v875
  %1126 = vmatprep.subr.bf16.mxu0 0
  %1127 = vmatpush1.bf16.msra.mxu0 %v876
  %1128 = vmatprep.subr.bf16.mxu0 0
  %1129 = vmatpush1.bf16.msra.mxu0 %v877
  %1130 = vmatprep.subr.bf16.mxu0 0
  %1131 = vmatpush1.bf16.msra.mxu0 %v878
  %1132 = vmatprep.subr.bf16.mxu0 0
  %1133 = vmatpush1.bf16.msra.mxu0 %v879
  %1134 = vmatprep.subr.bf16.mxu0 0
  %1135 = vmatpush1.bf16.msra.mxu0 %v880
  %1136 = vmatprep.subr.bf16.mxu0 0
  %1137 = vmatpush1.bf16.msra.mxu0 %v881
  %1138 = vmatprep.subr.bf16.mxu0 0
  %1139 = vmatpush1.bf16.msra.mxu0 %v882
  %1140 = vmatprep.subr.bf16.mxu0 0
  %1141 = vmatpush1.bf16.msra.mxu0 %v883
  %1142 = vmatprep.subr.bf16.mxu0 0
  %1143 = vmatpush1.bf16.msra.mxu0 %v884
  %1144 = vmatprep.subr.bf16.mxu0 0
  %1145 = vmatpush1.bf16.msra.mxu0 %v885
  %1146 = vmatprep.subr.bf16.mxu0 0
  %1147 = vmatpush1.bf16.msra.mxu0 %v886
  %1148 = vmatprep.subr.bf16.mxu0 0
  %1149 = vmatpush1.bf16.msra.mxu0 %v887
  %1150 = vmatprep.subr.bf16.mxu0 0
  %1151 = vmatpush1.bf16.msra.mxu0 %v888
  %1152 = vmatprep.subr.bf16.mxu0 0
  %1153 = vmatpush1.bf16.msra.mxu0 %v889
  %1154 = vmatprep.mubr.bf16.mxu0 %v347
  %1155 = vmatmul.mubr.bf16.gmra.mrb[0].mxu0 %v345
  %v1156 = vpop.f32.mrb[0].mxu0
  %v1157 = vadd.f32 %v1117, %v1156
  %v1158 = vpop.f32.mrb[0].mxu0
  %v1159 = vpop.f32.mrb[0].mxu0
  %v1160 = vpop.f32.mrb[0].mxu0
  %1161 = vdwg.mxu0
  %1162 = vmatprep.subr.bf16.mxu0 0
  %1163 = vmatpush1.bf16.msra.mxu0 %v890
  %1164 = vmatprep.subr.bf16.mxu0 0
  %1165 = vmatpush1.bf16.msra.mxu0 %v891
  %1166 = vmatprep.subr.bf16.mxu0 0
  %1167 = vmatpush1.bf16.msra.mxu0 %v892
  %1168 = vmatprep.subr.bf16.mxu0 0
  %1169 = vmatpush1.bf16.msra.mxu0 %v893
  %1170 = vmatprep.subr.bf16.mxu0 0
  %1171 = vmatpush1.bf16.msra.mxu0 %v894
  %1172 = vmatprep.subr.bf16.mxu0 0
  %1173 = vmatpush1.bf16.msra.mxu0 %v895
  %1174 = vmatprep.subr.bf16.mxu0 0
  %1175 = vmatpush1.bf16.msra.mxu0 %v896
  %1176 = vmatprep.subr.bf16.mxu0 0
  %1177 = vmatpush1.bf16.msra.mxu0 %v897
  %1178 = vmatprep.subr.bf16.mxu0 0
  %1179 = vmatpush1.bf16.msra.mxu0 %v898
  %1180 = vmatprep.subr.bf16.mxu0 0
  %1181 = vmatpush1.bf16.msra.mxu0 %v899
  %1182 = vmatprep.subr.bf16.mxu0 0
  %1183 = vmatpush1.bf16.msra.mxu0 %v900
  %1184 = vmatprep.subr.bf16.mxu0 0
  %1185 = vmatpush1.bf16.msra.mxu0 %v901
  %1186 = vmatprep.subr.bf16.mxu0 0
  %1187 = vmatpush1.bf16.msra.mxu0 %v902
  %1188 = vmatprep.subr.bf16.mxu0 0
  %1189 = vmatpush1.bf16.msra.mxu0 %v903
  %1190 = vmatprep.subr.bf16.mxu0 0
  %1191 = vmatpush1.bf16.msra.mxu0 %v904
  %1192 = vmatprep.subr.bf16.mxu0 0
  %1193 = vmatpush1.bf16.msra.mxu0 %v905
  %1194 = vmatprep.mubr.bf16.mxu0 %v344
  %1195 = vmatmul.mubr.bf16.gmra.mrb[0].mxu0 %v330
  %v1196 = vpop.f32.mrb[0].mxu0
  %v1197 = vadd.f32 %v1157, %v1196
  %v1198 = vpop.f32.mrb[0].mxu0
  %v1199 = vpop.f32.mrb[0].mxu0
  %v1200 = vpop.f32.mrb[0].mxu0
  %1201 = vdwg.mxu0
  %1202 = vmatprep.subr.bf16.mxu0 0
  %1203 = vmatpush1.bf16.msra.mxu0 %v906
  %1204 = vmatprep.subr.bf16.mxu0 0
  %1205 = vmatpush1.bf16.msra.mxu0 %v907
  %1206 = vmatprep.subr.bf16.mxu0 0
  %1207 = vmatpush1.bf16.msra.mxu0 %v908
  %1208 = vmatprep.subr.bf16.mxu0 0
  %1209 = vmatpush1.bf16.msra.mxu0 %v909
  %1210 = vmatprep.subr.bf16.mxu0 0
  %1211 = vmatpush1.bf16.msra.mxu0 %v910
  %1212 = vmatprep.subr.bf16.mxu0 0
  %1213 = vmatpush1.bf16.msra.mxu0 %v911
  %1214 = vmatprep.subr.bf16.mxu0 0
  %1215 = vmatpush1.bf16.msra.mxu0 %v912
  %1216 = vmatprep.subr.bf16.mxu0 0
  %1217 = vmatpush1.bf16.msra.mxu0 %v913
  %1218 = vmatprep.subr.bf16.mxu0 0
  %1219 = vmatpush1.bf16.msra.mxu0 %v914
  %1220 = vmatprep.subr.bf16.mxu0 0
  %1221 = vmatpush1.bf16.msra.mxu0 %v915
  %1222 = vmatprep.subr.bf16.mxu0 0
  %1223 = vmatpush1.bf16.msra.mxu0 %v916
  %1224 = vmatprep.subr.bf16.mxu0 0
  %1225 = vmatpush1.bf16.msra.mxu0 %v917
  %1226 = vmatprep.subr.bf16.mxu0 0
  %1227 = vmatpush1.bf16.msra.mxu0 %v918
  %1228 = vmatprep.subr.bf16.mxu0 0
  %1229 = vmatpush1.bf16.msra.mxu0 %v919
  %1230 = vmatprep.subr.bf16.mxu0 0
  %1231 = vmatpush1.bf16.msra.mxu0 %v920
  %1232 = vmatprep.subr.bf16.mxu0 0
  %1233 = vmatpush1.bf16.msra.mxu0 %v921
  %1234 = vmatprep.mubr.bf16.mxu0 %v348
  %1235 = vmatmul.mubr.bf16.gmra.mrb[0].mxu0 %v346
  %v1236 = vpop.f32.mrb[0].mxu0
  %v1237 = vadd.f32 %v1197, %v1236
  %v1238 = vpop.f32.mrb[0].mxu0
  %v1239 = vpop.f32.mrb[0].mxu0
  %v1240 = vpop.f32.mrb[0].mxu0
  %1241 = vdwg.mxu0
  %1242 = vmatprep.subr.bf16.mxu0 0
  %1243 = vmatpush1.bf16.msra.mxu0 %v922
  %1244 = vmatprep.subr.bf16.mxu0 0
  %1245 = vmatpush1.bf16.msra.mxu0 %v923
  %1246 = vmatprep.subr.bf16.mxu0 0
  %1247 = vmatpush1.bf16.msra.mxu0 %v924
  %1248 = vmatprep.subr.bf16.mxu0 0
  %1249 = vmatpush1.bf16.msra.mxu0 %v925
  %1250 = vmatprep.subr.bf16.mxu0 0
  %1251 = vmatpush1.bf16.msra.mxu0 %v926
  %1252 = vmatprep.subr.bf16.mxu0 0
  %1253 = vmatpush1.bf16.msra.mxu0 %v927
  %1254 = vmatprep.subr.bf16.mxu0 0
  %1255 = vmatpush1.bf16.msra.mxu0 %v928
  %1256 = vmatprep.subr.bf16.mxu0 0
  %1257 = vmatpush1.bf16.msra.mxu0 %v929
  %1258 = vmatprep.subr.bf16.mxu0 0
  %1259 = vmatpush1.bf16.msra.mxu0 %v930
  %1260 = vmatprep.subr.bf16.mxu0 0
  %1261 = vmatpush1.bf16.msra.mxu0 %v931
  %1262 = vmatprep.subr.bf16.mxu0 0
  %1263 = vmatpush1.bf16.msra.mxu0 %v932
  %1264 = vmatprep.subr.bf16.mxu0 0
  %1265 = vmatpush1.bf16.msra.mxu0 %v933
  %1266 = vmatprep.subr.bf16.mxu0 0
  %1267 = vmatpush1.bf16.msra.mxu0 %v934
  %1268 = vmatprep.subr.bf16.mxu0 0
  %1269 = vmatpush1.bf16.msra.mxu0 %v935
  %1270 = vmatprep.subr.bf16.mxu0 0
  %1271 = vmatpush1.bf16.msra.mxu0 %v936
  %1272 = vmatprep.subr.bf16.mxu0 0
  %1273 = vmatpush1.bf16.msra.mxu0 %v937
  %1274 = vmatprep.mubr.bf16.mxu0 %v386
  %1275 = vmatmul.mubr.bf16.gmra.mrb[0].mxu0 %v372
  %v1276 = vpop.f32.mrb[0].mxu0
  %v1277 = vadd.f32 %v1237, %v1276
  %v1278 = vpop.f32.mrb[0].mxu0
  %v1279 = vpop.f32.mrb[0].mxu0
  %v1280 = vpop.f32.mrb[0].mxu0
  %1281 = vdwg.mxu0
  %1282 = vmatprep.subr.bf16.mxu0 0
  %1283 = vmatpush1.bf16.msra.mxu0 %v938
  %1284 = vmatprep.subr.bf16.mxu0 0
  %1285 = vmatpush1.bf16.msra.mxu0 %v939
  %1286 = vmatprep.subr.bf16.mxu0 0
  %1287 = vmatpush1.bf16.msra.mxu0 %v940
  %1288 = vmatprep.subr.bf16.mxu0 0
  %1289 = vmatpush1.bf16.msra.mxu0 %v941
  %1290 = vmatprep.subr.bf16.mxu0 0
  %1291 = vmatpush1.bf16.msra.mxu0 %v942
  %1292 = vmatprep.subr.bf16.mxu0 0
  %1293 = vmatpush1.bf16.msra.mxu0 %v943
  %1294 = vmatprep.subr.bf16.mxu0 0
  %1295 = vmatpush1.bf16.msra.mxu0 %v944
  %1296 = vmatprep.subr.bf16.mxu0 0
  %1297 = vmatpush1.bf16.msra.mxu0 %v945
  %1298 = vmatprep.subr.bf16.mxu0 0
  %1299 = vmatpush1.bf16.msra.mxu0 %v946
  %1300 = vmatprep.subr.bf16.mxu0 0
  %1301 = vmatpush1.bf16.msra.mxu0 %v947
  %1302 = vmatprep.subr.bf16.mxu0 0
  %1303 = vmatpush1.bf16.msra.mxu0 %v948
  %1304 = vmatprep.subr.bf16.mxu0 0
  %1305 = vmatpush1.bf16.msra.mxu0 %v949
  %1306 = vmatprep.subr.bf16.mxu0 0
  %1307 = vmatpush1.bf16.msra.mxu0 %v950
  %1308 = vmatprep.subr.bf16.mxu0 0
  %1309 = vmatpush1.bf16.msra.mxu0 %v951
  %1310 = vmatprep.subr.bf16.mxu0 0
  %1311 = vmatpush1.bf16.msra.mxu0 %v952
  %1312 = vmatprep.subr.bf16.mxu0 0
  %1313 = vmatpush1.bf16.msra.mxu0 %v953
  %1314 = vmatprep.mubr.bf16.mxu0 %v395
  %1315 = vmatmul.mubr.bf16.gmra.mrb[0].mxu0 %v394
  %v1316 = vpop.f32.mrb[0].mxu0
  %v1317 = vadd.f32 %v1277, %v1316
  %v1318 = vpop.f32.mrb[0].mxu0
  %v1319 = vpop.f32.mrb[0].mxu0
  %v1320 = vpop.f32.mrb[0].mxu0
  %1321 = vdwg.mxu0
  %1322 = vmatprep.subr.bf16.mxu0 0
  %1323 = vmatpush1.bf16.msra.mxu0 %v954
  %1324 = vmatprep.subr.bf16.mxu0 0
  %1325 = vmatpush1.bf16.msra.mxu0 %v955
  %1326 = vmatprep.subr.bf16.mxu0 0
  %1327 = vmatpush1.bf16.msra.mxu0 %v956
  %1328 = vmatprep.subr.bf16.mxu0 0
  %1329 = vmatpush1.bf16.msra.mxu0 %v957
  %1330 = vmatprep.subr.bf16.mxu0 0
  %1331 = vmatpush1.bf16.msra.mxu0 %v958
  %1332 = vmatprep.subr.bf16.mxu0 0
  %1333 = vmatpush1.bf16.msra.mxu0 %v959
  %1334 = vmatprep.subr.bf16.mxu0 0
  %1335 = vmatpush1.bf16.msra.mxu0 %v960
  %1336 = vmatprep.subr.bf16.mxu0 0
  %1337 = vmatpush1.bf16.msra.mxu0 %v961
  %1338 = vmatprep.subr.bf16.mxu0 0
  %1339 = vmatpush1.bf16.msra.mxu0 %v962
  %1340 = vmatprep.subr.bf16.mxu0 0
  %1341 = vmatpush1.bf16.msra.mxu0 %v963
  %1342 = vmatprep.subr.bf16.mxu0 0
  %1343 = vmatpush1.bf16.msra.mxu0 %v964
  %1344 = vmatprep.subr.bf16.mxu0 0
  %1345 = vmatpush1.bf16.msra.mxu0 %v965
  %1346 = vmatprep.subr.bf16.mxu0 0
  %1347 = vmatpush1.bf16.msra.mxu0 %v966
  %1348 = vmatprep.subr.bf16.mxu0 0
  %1349 = vmatpush1.bf16.msra.mxu0 %v967
  %1350 = vmatprep.subr.bf16.mxu0 0
  %1351 = vmatpush1.bf16.msra.mxu0 %v968
  %1352 = vmatprep.subr.bf16.mxu0 0
  %1353 = vmatpush1.bf16.msra.mxu0 %v969
  %1354 = vmatprep.mubr.bf16.mxu0 %v393
  %1355 = vmatmul.mubr.bf16.gmra.mrb[0].mxu0 %v379
  %v1356 = vpop.f32.mrb[0].mxu0
  %v1357 = vadd.f32 %v1317, %v1356
  %v1358 = vpop.f32.mrb[0].mxu0
  %v1359 = vpop.f32.mrb[0].mxu0
  %v1360 = vpop.f32.mrb[0].mxu0
  %1361 = vdwg.mxu0
  %v1362 = vmax.f32 %v1357, 0.0
  %v1363 = vld [vmem:[%s1] sm:$0x3]
  %v1364 = vld [vmem:[%s8] sm:$0x3]
  %v1365 = vld [vmem:[%s9] sm:$0x1]
  %v1367 = vlaneseq
  %v1368 = vshrl.u32 %v1367, 7
  %v1369 = vsub.s32 0, %v1368
  %v1370 = vrot.slane %v1365, %v1369
  %vm1372 = vcmask 15360
  %v1374 = vsel %vm1372, %v1363, 0
  %vm1376 = vcmask 1041408
  %v1378 = vsel %vm1376, %v1364, 0
  %1380 = vmatprep.subr.mxu0 0.0
  %1381 = vmatpush1.msra.mxu0 %v1378
  %1382 = vmatprep.subr.mxu0 0.0
  %1383 = vmatpush1.msra.mxu0 0.0
  %1384 = vmatprep.subr.mxu0 0.0
  %1385 = vmatpush1.msra.mxu0 0.0
  %1386 = vmatprep.subr.mxu0 0.0
  %1387 = vmatpush1.msra.mxu0 0.0
  %1388 = vmatprep.subr.mxu0 0.0
  %1389 = vmatpush1.msra.mxu0 0.0
  %1390 = vmatprep.subr.mxu0 0.0
  %1391 = vmatpush1.msra.mxu0 0.0
  %1392 = vmatprep.subr.mxu0 0.0
  %1393 = vmatpush1.msra.mxu0 0.0
  %1394 = vmatprep.subr.mxu0 0.0
  %1395 = vmatpush1.msra.mxu0 0.0
  %1396 = vmatprep.subr.mxu0 0.0
  %1397 = vmatpush1.msra.mxu0 0.0
  %1398 = vmatprep.subr.mxu0 0.0
  %1399 = vmatpush1.msra.mxu0 0.0
  %1400 = vmatprep.subr.mxu0 0.0
  %1401 = vmatpush1.msra.mxu0 0.0
  %1402 = vmatprep.subr.mxu0 0.0
  %1403 = vmatpush1.msra.mxu0 0.0
  %1404 = vmatprep.subr.mxu0 0.0
  %1405 = vmatpush1.msra.mxu0 0.0
  %1406 = vmatprep.subr.mxu0 0.0
  %1407 = vmatpush1.msra.mxu0 0.0
  %1408 = vmatprep.subr.mxu0 0.0
  %1409 = vmatpush1.msra.mxu0 0.0
  %1410 = vmatprep.subr.mxu0 0.0
  %1411 = vmatpush1.msra.mxu0 0.0
  %1412 = vmatprep.subr.mxu0 0.0
  %1413 = vmatpush1.msra.mxu0 0.0
  %1414 = vmatprep.subr.mxu0 0.0
  %1415 = vmatpush1.msra.mxu0 0.0
  %1416 = vmatprep.subr.mxu0 0.0
  %1417 = vmatpush1.msra.mxu0 0.0
  %1418 = vmatprep.subr.mxu0 0.0
  %1419 = vmatpush1.msra.mxu0 0.0
  %1420 = vmatprep.subr.mxu0 0.0
  %1421 = vmatpush1.msra.mxu0 0.0
  %1422 = vmatprep.subr.mxu0 0.0
  %1423 = vmatpush1.msra.mxu0 0.0
  %1424 = vmatprep.subr.mxu0 0.0
  %1425 = vmatpush1.msra.mxu0 0.0
  %1426 = vmatprep.subr.mxu0 0.0
  %1427 = vmatpush1.msra.mxu0 0.0
  %1428 = vmatprep.subr.mxu0 0.0
  %1429 = vmatpush1.msra.mxu0 0.0
  %1430 = vmatprep.subr.mxu0 0.0
  %1431 = vmatpush1.msra.mxu0 0.0
  %1432 = vmatprep.subr.mxu0 0.0
  %1433 = vmatpush1.msra.mxu0 0.0
  %1434 = vmatprep.subr.mxu0 0.0
  %1435 = vmatpush1.msra.mxu0 0.0
  %1436 = vmatprep.subr.mxu0 0.0
  %1437 = vmatpush1.msra.mxu0 0.0
  %1438 = vmatprep.subr.mxu0 0.0
  %1439 = vmatpush1.msra.mxu0 0.0
  %1440 = vmatprep.subr.mxu0 0.0
  %1441 = vmatpush1.msra.mxu0 0.0
  %1442 = vmatprep.subr.mxu0 0.0
  %1443 = vmatpush1.msra.mxu0 0.0
  %1444 = vmatprep.mubr.f32.mxu0 0.0
  %1445 = vmatmul.mubr.f32.gmra.mrb[0].mxu0 %v1374
  %v1446 = vpop.f32.mrb[0].mxu0
  %v1447 = vadd.f32 %v1370, %v1446
  %v1448 = vpop.f32.mrb[0].mxu0
  %1449 = vdwg.mxu0
  %v1450 = vmax.f32 %v1447, 0.0
  %v1451 = vpack.c.bf16 %v1362, %v1362
  %v1452 = vpack.c.bf16 %v1450, %v1450
  %v1453 = vld [vmem:[%s10] sm:$0xf]
  %v1454 = vld [vmem:[%s10 + $0x4] sm:$0xf]
  %v1455 = vld [vmem:[%s10 + $0x8] sm:$0xf]
  %v1456 = vld [vmem:[%s10 + $0xc] sm:$0xf]
  %v1457 = vld [vmem:[%s10 + $0x10] sm:$0xf]
  %v1458 = vld [vmem:[%s10 + $0x14] sm:$0xf]
  %v1459 = vld [vmem:[%s10 + $0x18] sm:$0xf]
  %v1460 = vld [vmem:[%s10 + $0x1c] sm:$0xf]
  %v1461 = vld [vmem:[%s10 + $0x20] sm:$0xf]
  %v1462 = vld [vmem:[%s10 + $0x24] sm:$0xf]
  %v1463 = vld [vmem:[%s10 + $0x28] sm:$0xf]
  %v1464 = vld [vmem:[%s10 + $0x2c] sm:$0xf]
  %v1465 = vld [vmem:[%s10 + $0x30] sm:$0xf]
  %v1466 = vld [vmem:[%s10 + $0x34] sm:$0xf]
  %v1467 = vld [vmem:[%s10 + $0x38] sm:$0xf]
  %v1468 = vld [vmem:[%s10 + $0x3c] sm:$0xf]
  %v1469 = vld [vmem:[%s10 + $0x40] sm:$0xf]
  %v1470 = vld [vmem:[%s10 + $0x44] sm:$0xf]
  %v1471 = vld [vmem:[%s10 + $0x48] sm:$0xf]
  %v1472 = vld [vmem:[%s10 + $0x4c] sm:$0xf]
  %v1473 = vld [vmem:[%s10 + $0x50] sm:$0xf]
  %v1474 = vld [vmem:[%s10 + $0x54] sm:$0xf]
  %v1475 = vld [vmem:[%s10 + $0x58] sm:$0xf]
  %v1476 = vld [vmem:[%s10 + $0x5c] sm:$0xf]
  %v1477 = vld [vmem:[%s10 + $0x60] sm:$0xf]
  %v1478 = vld [vmem:[%s10 + $0x64] sm:$0xf]
  %v1479 = vld [vmem:[%s10 + $0x68] sm:$0xf]
  %v1480 = vld [vmem:[%s10 + $0x6c] sm:$0xf]
  %v1481 = vld [vmem:[%s10 + $0x70] sm:$0xf]
  %v1482 = vld [vmem:[%s10 + $0x74] sm:$0xf]
  %v1483 = vld [vmem:[%s10 + $0x78] sm:$0xf]
  %v1484 = vld [vmem:[%s10 + $0x7c] sm:$0xf]
  %v1485 = vld [vmem:[%s11] sm:$0x1]
  %v1487 = vlaneseq
  %v1488 = vshrl.u32 %v1487, 7
  %v1489 = vsub.s32 0, %v1488
  %v1490 = vrot.slane %v1485, %v1489
  %v1524 = vunpack.c.l.b16 %v1453
  %v1525 = vunpack.c.l.b16 %v1454
  %v1526 = vunpack.c.l.b16 %v1455
  %v1527 = vunpack.c.l.b16 %v1456
  %v1528 = vunpack.c.l.b16 %v1457
  %v1529 = vunpack.c.l.b16 %v1458
  %v1530 = vunpack.c.l.b16 %v1459
  %v1531 = vunpack.c.l.b16 %v1460
  %v1532 = vunpack.c.l.b16 %v1461
  %v1533 = vunpack.c.l.b16 %v1462
  %v1534 = vunpack.c.l.b16 %v1463
  %v1535 = vunpack.c.l.b16 %v1464
  %v1536 = vunpack.c.l.b16 %v1465
  %v1537 = vunpack.c.l.b16 %v1466
  %v1538 = vunpack.c.l.b16 %v1467
  %v1539 = vunpack.c.l.b16 %v1468
  %v1540 = vunpack.c.l.b16 %v1469
  %v1541 = vunpack.c.l.b16 %v1470
  %v1542 = vunpack.c.l.b16 %v1471
  %v1543 = vunpack.c.l.b16 %v1472
  %v1544 = vunpack.c.l.b16 %v1473
  %v1545 = vunpack.c.l.b16 %v1474
  %v1546 = vunpack.c.l.b16 %v1475
  %v1547 = vunpack.c.l.b16 %v1476
  %v1548 = vunpack.c.l.b16 %v1477
  %v1549 = vunpack.c.l.b16 %v1478
  %v1550 = vunpack.c.l.b16 %v1479
  %v1551 = vunpack.c.l.b16 %v1480
  %v1552 = vunpack.c.l.b16 %v1481
  %v1553 = vunpack.c.l.b16 %v1482
  %v1554 = vunpack.c.l.b16 %v1483
  %v1555 = vunpack.c.l.b16 %v1484
  %v1556 = vpack.c.b16 %v1525, %v1524
  %v1557 = vpack.c.b16 %v1527, %v1526
  %v1558 = vpack.c.b16 %v1529, %v1528
  %v1559 = vpack.c.b16 %v1531, %v1530
  %v1560 = vpack.c.b16 %v1533, %v1532
  %v1561 = vpack.c.b16 %v1535, %v1534
  %v1562 = vpack.c.b16 %v1537, %v1536
  %v1563 = vpack.c.b16 %v1539, %v1538
  %v1564 = vpack.c.b16 %v1541, %v1540
  %v1565 = vpack.c.b16 %v1543, %v1542
  %v1566 = vpack.c.b16 %v1545, %v1544
  %v1567 = vpack.c.b16 %v1547, %v1546
  %v1568 = vpack.c.b16 %v1549, %v1548
  %v1569 = vpack.c.b16 %v1551, %v1550
  %v1570 = vpack.c.b16 %v1553, %v1552
  %v1571 = vpack.c.b16 %v1555, %v1554
  %1588 = vmatprep.subr.bf16.mxu0 0
  %1589 = vmatpush1.bf16.msra.mxu0 %v1556
  %1590 = vmatprep.subr.bf16.mxu0 0
  %1591 = vmatpush1.bf16.msra.mxu0 %v1557
  %1592 = vmatprep.subr.bf16.mxu0 0
  %1593 = vmatpush1.bf16.msra.mxu0 %v1558
  %1594 = vmatprep.subr.bf16.mxu0 0
  %1595 = vmatpush1.bf16.msra.mxu0 %v1559
  %1596 = vmatprep.subr.bf16.mxu0 0
  %1597 = vmatpush1.bf16.msra.mxu0 %v1560
  %1598 = vmatprep.subr.bf16.mxu0 0
  %1599 = vmatpush1.bf16.msra.mxu0 %v1561
  %1600 = vmatprep.subr.bf16.mxu0 0
  %1601 = vmatpush1.bf16.msra.mxu0 %v1562
  %1602 = vmatprep.subr.bf16.mxu0 0
  %1603 = vmatpush1.bf16.msra.mxu0 %v1563
  %1604 = vmatprep.subr.bf16.mxu0 0
  %1605 = vmatpush1.bf16.msra.mxu0 %v1564
  %1606 = vmatprep.subr.bf16.mxu0 0
  %1607 = vmatpush1.bf16.msra.mxu0 %v1565
  %1608 = vmatprep.subr.bf16.mxu0 0
  %1609 = vmatpush1.bf16.msra.mxu0 %v1566
  %1610 = vmatprep.subr.bf16.mxu0 0
  %1611 = vmatpush1.bf16.msra.mxu0 %v1567
  %1612 = vmatprep.subr.bf16.mxu0 0
  %1613 = vmatpush1.bf16.msra.mxu0 %v1568
  %1614 = vmatprep.subr.bf16.mxu0 0
  %1615 = vmatpush1.bf16.msra.mxu0 %v1569
  %1616 = vmatprep.subr.bf16.mxu0 0
  %1617 = vmatpush1.bf16.msra.mxu0 %v1570
  %1618 = vmatprep.subr.bf16.mxu0 0
  %1619 = vmatpush1.bf16.msra.mxu0 %v1571
  %1620 = vmatprep.mubr.bf16.mxu0 %v1452
  %1621 = vmatmul.mubr.bf16.gmra.mrb[0].mxu0 %v1451
  %v1622 = vpop.f32.mrb[0].mxu0
  %v1623 = vadd.f32 %v1490, %v1622
  %v1624 = vpop.f32.mrb[0].mxu0
  %v1625 = vpop.f32.mrb[0].mxu0
  %v1626 = vpop.f32.mrb[0].mxu0
  %1627 = vdwg.mxu0
  %v1628 = vmax.f32 %v1623, 0.0
  %v1629 = vld [vmem:[%s2] sm:$0x3]
  %v1630 = vld [vmem:[%s3] sm:$0x3]
  %v1631 = vpack.c.bf16 %v1628, %v1628
  %v1632 = vpack.c.bf16 %v1629, %v1629
  %v1633 = vld [vmem:[%s12] sm:$0xff]
  %v1634 = vld [vmem:[%s12 + $0x8] sm:$0xff]
  %v1635 = vld [vmem:[%s12 + $0x10] sm:$0xff]
  %v1636 = vld [vmem:[%s12 + $0x18] sm:$0xff]
  %v1637 = vld [vmem:[%s12 + $0x20] sm:$0xff]
  %v1638 = vld [vmem:[%s12 + $0x28] sm:$0xff]
  %v1639 = vld [vmem:[%s12 + $0x30] sm:$0xff]
  %v1640 = vld [vmem:[%s12 + $0x38] sm:$0xff]
  %v1641 = vld [vmem:[%s12 + $0x40] sm:$0xff]
  %v1642 = vld [vmem:[%s12 + $0x48] sm:$0xff]
  %v1643 = vld [vmem:[%s12 + $0x50] sm:$0xff]
  %v1644 = vld [vmem:[%s12 + $0x58] sm:$0xff]
  %v1645 = vld [vmem:[%s12 + $0x60] sm:$0xff]
  %v1646 = vld [vmem:[%s12 + $0x68] sm:$0xff]
  %v1647 = vld [vmem:[%s12 + $0x70] sm:$0xff]
  %v1648 = vld [vmem:[%s12 + $0x78] sm:$0xff]
  %v1649 = vld [vmem:[%s12 + $0x80] sm:$0xff]
  %v1650 = vld [vmem:[%s12 + $0x88] sm:$0xff]
  %v1651 = vld [vmem:[%s12 + $0x90] sm:$0xff]
  %v1652 = vld [vmem:[%s12 + $0x98] sm:$0xff]
  %v1653 = vld [vmem:[%s12 + $0xa0] sm:$0xff]
  %v1654 = vld [vmem:[%s12 + $0xa8] sm:$0xff]
  %v1655 = vld [vmem:[%s12 + $0xb0] sm:$0xff]
  %v1656 = vld [vmem:[%s12 + $0xb8] sm:$0xff]
  %v1657 = vld [vmem:[%s12 + $0xc0] sm:$0xff]
  %v1658 = vld [vmem:[%s12 + $0xc8] sm:$0xff]
  %v1659 = vld [vmem:[%s12 + $0xd0] sm:$0xff]
  %v1660 = vld [vmem:[%s12 + $0xd8] sm:$0xff]
  %v1661 = vld [vmem:[%s12 + $0xe0] sm:$0xff]
  %v1662 = vld [vmem:[%s12 + $0xe8] sm:$0xff]
  %v1663 = vld [vmem:[%s12 + $0xf0] sm:$0xff]
  %v1664 = vld [vmem:[%s12 + $0xf8] sm:$0xff]
  %v1665 = vld [vmem:[%s12 + $0x100] sm:$0xff]
  %v1666 = vld [vmem:[%s12 + $0x108] sm:$0xff]
  %v1667 = vld [vmem:[%s12 + $0x110] sm:$0xff]
  %v1668 = vld [vmem:[%s12 + $0x118] sm:$0xff]
  %v1669 = vld [vmem:[%s12 + $0x120] sm:$0xff]
  %v1670 = vld [vmem:[%s12 + $0x128] sm:$0xff]
  %v1671 = vld [vmem:[%s12 + $0x130] sm:$0xff]
  %v1672 = vld [vmem:[%s12 + $0x138] sm:$0xff]
  %v1673 = vld [vmem:[%s12 + $0x140] sm:$0xff]
  %v1674 = vld [vmem:[%s12 + $0x148] sm:$0xff]
  %v1675 = vld [vmem:[%s12 + $0x150] sm:$0xff]
  %v1676 = vld [vmem:[%s12 + $0x158] sm:$0xff]
  %v1677 = vld [vmem:[%s12 + $0x160] sm:$0xff]
  %v1678 = vld [vmem:[%s12 + $0x168] sm:$0xff]
  %v1679 = vld [vmem:[%s12 + $0x170] sm:$0xff]
  %v1680 = vld [vmem:[%s12 + $0x178] sm:$0xff]
  %v1681 = vld [vmem:[%s12 + $0x180] sm:$0xff]
  %v1682 = vld [vmem:[%s12 + $0x188] sm:$0xff]
  %v1683 = vld [vmem:[%s12 + $0x190] sm:$0xff]
  %v1684 = vld [vmem:[%s12 + $0x198] sm:$0xff]
  %v1685 = vld [vmem:[%s12 + $0x1a0] sm:$0xff]
  %v1686 = vld [vmem:[%s12 + $0x1a8] sm:$0xff]
  %v1687 = vld [vmem:[%s12 + $0x1b0] sm:$0xff]
  %v1688 = vld [vmem:[%s12 + $0x1b8] sm:$0xff]
  %v1689 = vld [vmem:[%s12 + $0x1c0] sm:$0xff]
  %v1690 = vld [vmem:[%s12 + $0x1c8] sm:$0xff]
  %v1691 = vld [vmem:[%s12 + $0x1d0] sm:$0xff]
  %v1692 = vld [vmem:[%s12 + $0x1d8] sm:$0xff]
  %v1693 = vld [vmem:[%s12 + $0x1e0] sm:$0xff]
  %v1694 = vld [vmem:[%s12 + $0x1e8] sm:$0xff]
  %v1695 = vld [vmem:[%s12 + $0x1f0] sm:$0xff]
  %v1696 = vld [vmem:[%s12 + $0x1f8] sm:$0xff]
  %v1697 = vld [vmem:[%s13] sm:$0xf]
  %v1699 = vlaneseq
  %v1700 = vshrl.u32 %v1699, 7
  %v1701 = vsub.s32 0, %v1700
  %v1702 = vrot.slane %v1697, %v1701
  %v1703 = vlaneseq
  %v1704 = vshrl.u32 %v1703, 7
  %v1705 = vsub.s32 1, %v1704
  %v1706 = vrot.slane %v1697, %v1705
  %v1707 = vlaneseq
  %v1708 = vshrl.u32 %v1707, 7
  %v1709 = vsub.s32 2, %v1708
  %v1710 = vrot.slane %v1697, %v1709
  %v1711 = vlaneseq
  %v1712 = vshrl.u32 %v1711, 7
  %v1713 = vsub.s32 3, %v1712
  %v1714 = vrot.slane %v1697, %v1713
  %v1783 = vunpack.c.l.b16 %v1633
  %v1784 = vunpack.c.h.b16 %v1633
  %v1785 = vunpack.c.l.b16 %v1634
  %v1786 = vunpack.c.h.b16 %v1634
  %v1787 = vunpack.c.l.b16 %v1635
  %v1788 = vunpack.c.h.b16 %v1635
  %v1789 = vunpack.c.l.b16 %v1636
  %v1790 = vunpack.c.h.b16 %v1636
  %v1791 = vunpack.c.l.b16 %v1637
  %v1792 = vunpack.c.h.b16 %v1637
  %v1793 = vunpack.c.l.b16 %v1638
  %v1794 = vunpack.c.h.b16 %v1638
  %v1795 = vunpack.c.l.b16 %v1639
  %v1796 = vunpack.c.h.b16 %v1639
  %v1797 = vunpack.c.l.b16 %v1640
  %v1798 = vunpack.c.h.b16 %v1640
  %v1799 = vunpack.c.l.b16 %v1641
  %v1800 = vunpack.c.h.b16 %v1641
  %v1801 = vunpack.c.l.b16 %v1642
  %v1802 = vunpack.c.h.b16 %v1642
  %v1803 = vunpack.c.l.b16 %v1643
  %v1804 = vunpack.c.h.b16 %v1643
  %v1805 = vunpack.c.l.b16 %v1644
  %v1806 = vunpack.c.h.b16 %v1644
  %v1807 = vunpack.c.l.b16 %v1645
  %v1808 = vunpack.c.h.b16 %v1645
  %v1809 = vunpack.c.l.b16 %v1646
  %v1810 = vunpack.c.h.b16 %v1646
  %v1811 = vunpack.c.l.b16 %v1647
  %v1812 = vunpack.c.h.b16 %v1647
  %v1813 = vunpack.c.l.b16 %v1648
  %v1814 = vunpack.c.h.b16 %v1648
  %v1815 = vunpack.c.l.b16 %v1649
  %v1816 = vunpack.c.h.b16 %v1649
  %v1817 = vunpack.c.l.b16 %v1650
  %v1818 = vunpack.c.h.b16 %v1650
  %v1819 = vunpack.c.l.b16 %v1651
  %v1820 = vunpack.c.h.b16 %v1651
  %v1821 = vunpack.c.l.b16 %v1652
  %v1822 = vunpack.c.h.b16 %v1652
  %v1823 = vunpack.c.l.b16 %v1653
  %v1824 = vunpack.c.h.b16 %v1653
  %v1825 = vunpack.c.l.b16 %v1654
  %v1826 = vunpack.c.h.b16 %v1654
  %v1827 = vunpack.c.l.b16 %v1655
  %v1828 = vunpack.c.h.b16 %v1655
  %v1829 = vunpack.c.l.b16 %v1656
  %v1830 = vunpack.c.h.b16 %v1656
  %v1831 = vunpack.c.l.b16 %v1657
  %v1832 = vunpack.c.h.b16 %v1657
  %v1833 = vunpack.c.l.b16 %v1658
  %v1834 = vunpack.c.h.b16 %v1658
  %v1835 = vunpack.c.l.b16 %v1659
  %v1836 = vunpack.c.h.b16 %v1659
  %v1837 = vunpack.c.l.b16 %v1660
  %v1838 = vunpack.c.h.b16 %v1660
  %v1839 = vunpack.c.l.b16 %v1661
  %v1840 = vunpack.c.h.b16 %v1661
  %v1841 = vunpack.c.l.b16 %v1662
  %v1842 = vunpack.c.h.b16 %v1662
  %v1843 = vunpack.c.l.b16 %v1663
  %v1844 = vunpack.c.h.b16 %v1663
  %v1845 = vunpack.c.l.b16 %v1664
  %v1846 = vunpack.c.h.b16 %v1664
  %v1847 = vunpack.c.l.b16 %v1665
  %v1848 = vunpack.c.h.b16 %v1665
  %v1849 = vunpack.c.l.b16 %v1666
  %v1850 = vunpack.c.h.b16 %v1666
  %v1851 = vunpack.c.l.b16 %v1667
  %v1852 = vunpack.c.h.b16 %v1667
  %v1853 = vunpack.c.l.b16 %v1668
  %v1854 = vunpack.c.h.b16 %v1668
  %v1855 = vunpack.c.l.b16 %v1669
  %v1856 = vunpack.c.h.b16 %v1669
  %v1857 = vunpack.c.l.b16 %v1670
  %v1858 = vunpack.c.h.b16 %v1670
  %v1859 = vunpack.c.l.b16 %v1671
  %v1860 = vunpack.c.h.b16 %v1671
  %v1861 = vunpack.c.l.b16 %v1672
  %v1862 = vunpack.c.h.b16 %v1672
  %v1863 = vunpack.c.l.b16 %v1673
  %v1864 = vunpack.c.h.b16 %v1673
  %v1865 = vunpack.c.l.b16 %v1674
  %v1866 = vunpack.c.h.b16 %v1674
  %v1867 = vunpack.c.l.b16 %v1675
  %v1868 = vunpack.c.h.b16 %v1675
  %v1869 = vunpack.c.l.b16 %v1676
  %v1870 = vunpack.c.h.b16 %v1676
  %v1871 = vunpack.c.l.b16 %v1677
  %v1872 = vunpack.c.h.b16 %v1677
  %v1873 = vunpack.c.l.b16 %v1678
  %v1874 = vunpack.c.h.b16 %v1678
  %v1875 = vunpack.c.l.b16 %v1679
  %v1876 = vunpack.c.h.b16 %v1679
  %v1877 = vunpack.c.l.b16 %v1680
  %v1878 = vunpack.c.h.b16 %v1680
  %v1879 = vunpack.c.l.b16 %v1681
  %v1880 = vunpack.c.h.b16 %v1681
  %v1881 = vunpack.c.l.b16 %v1682
  %v1882 = vunpack.c.h.b16 %v1682
  %v1883 = vunpack.c.l.b16 %v1683
  %v1884 = vunpack.c.h.b16 %v1683
  %v1885 = vunpack.c.l.b16 %v1684
  %v1886 = vunpack.c.h.b16 %v1684
  %v1887 = vunpack.c.l.b16 %v1685
  %v1888 = vunpack.c.h.b16 %v1685
  %v1889 = vunpack.c.l.b16 %v1686
  %v1890 = vunpack.c.h.b16 %v1686
  %v1891 = vunpack.c.l.b16 %v1687
  %v1892 = vunpack.c.h.b16 %v1687
  %v1893 = vunpack.c.l.b16 %v1688
  %v1894 = vunpack.c.h.b16 %v1688
  %v1895 = vunpack.c.l.b16 %v1689
  %v1896 = vunpack.c.h.b16 %v1689
  %v1897 = vunpack.c.l.b16 %v1690
  %v1898 = vunpack.c.h.b16 %v1690
  %v1899 = vunpack.c.l.b16 %v1691
  %v1900 = vunpack.c.h.b16 %v1691
  %v1901 = vunpack.c.l.b16 %v1692
  %v1902 = vunpack.c.h.b16 %v1692
  %v1903 = vunpack.c.l.b16 %v1693
  %v1904 = vunpack.c.h.b16 %v1693
  %v1905 = vunpack.c.l.b16 %v1694
  %v1906 = vunpack.c.h.b16 %v1694
  %v1907 = vunpack.c.l.b16 %v1695
  %v1908 = vunpack.c.h.b16 %v1695
  %v1909 = vunpack.c.l.b16 %v1696
  %v1910 = vunpack.c.h.b16 %v1696
  %v1911 = vpack.c.b16 %v1787, %v1783
  %v1912 = vpack.c.b16 %v1788, %v1784
  %v1913 = vpack.c.b16 %v1789, %v1785
  %v1914 = vpack.c.b16 %v1790, %v1786
  %v1915 = vpack.c.b16 %v1795, %v1791
  %v1916 = vpack.c.b16 %v1796, %v1792
  %v1917 = vpack.c.b16 %v1797, %v1793
  %v1918 = vpack.c.b16 %v1798, %v1794
  %v1919 = vpack.c.b16 %v1803, %v1799
  %v1920 = vpack.c.b16 %v1804, %v1800
  %v1921 = vpack.c.b16 %v1805, %v1801
  %v1922 = vpack.c.b16 %v1806, %v1802
  %v1923 = vpack.c.b16 %v1811, %v1807
  %v1924 = vpack.c.b16 %v1812, %v1808
  %v1925 = vpack.c.b16 %v1813, %v1809
  %v1926 = vpack.c.b16 %v1814, %v1810
  %v1927 = vpack.c.b16 %v1819, %v1815
  %v1928 = vpack.c.b16 %v1820, %v1816
  %v1929 = vpack.c.b16 %v1821, %v1817
  %v1930 = vpack.c.b16 %v1822, %v1818
  %v1931 = vpack.c.b16 %v1827, %v1823
  %v1932 = vpack.c.b16 %v1828, %v1824
  %v1933 = vpack.c.b16 %v1829, %v1825
  %v1934 = vpack.c.b16 %v1830, %v1826
  %v1935 = vpack.c.b16 %v1835, %v1831
  %v1936 = vpack.c.b16 %v1836, %v1832
  %v1937 = vpack.c.b16 %v1837, %v1833
  %v1938 = vpack.c.b16 %v1838, %v1834
  %v1939 = vpack.c.b16 %v1843, %v1839
  %v1940 = vpack.c.b16 %v1844, %v1840
  %v1941 = vpack.c.b16 %v1845, %v1841
  %v1942 = vpack.c.b16 %v1846, %v1842
  %v1943 = vpack.c.b16 %v1851, %v1847
  %v1944 = vpack.c.b16 %v1852, %v1848
  %v1945 = vpack.c.b16 %v1853, %v1849
  %v1946 = vpack.c.b16 %v1854, %v1850
  %v1947 = vpack.c.b16 %v1859, %v1855
  %v1948 = vpack.c.b16 %v1860, %v1856
  %v1949 = vpack.c.b16 %v1861, %v1857
  %v1950 = vpack.c.b16 %v1862, %v1858
  %v1951 = vpack.c.b16 %v1867, %v1863
  %v1952 = vpack.c.b16 %v1868, %v1864
  %v1953 = vpack.c.b16 %v1869, %v1865
  %v1954 = vpack.c.b16 %v1870, %v1866
  %v1955 = vpack.c.b16 %v1875, %v1871
  %v1956 = vpack.c.b16 %v1876, %v1872
  %v1957 = vpack.c.b16 %v1877, %v1873
  %v1958 = vpack.c.b16 %v1878, %v1874
  %v1959 = vpack.c.b16 %v1883, %v1879
  %v1960 = vpack.c.b16 %v1884, %v1880
  %v1961 = vpack.c.b16 %v1885, %v1881
  %v1962 = vpack.c.b16 %v1886, %v1882
  %v1963 = vpack.c.b16 %v1891, %v1887
  %v1964 = vpack.c.b16 %v1892, %v1888
  %v1965 = vpack.c.b16 %v1893, %v1889
  %v1966 = vpack.c.b16 %v1894, %v1890
  %v1967 = vpack.c.b16 %v1899, %v1895
  %v1968 = vpack.c.b16 %v1900, %v1896
  %v1969 = vpack.c.b16 %v1901, %v1897
  %v1970 = vpack.c.b16 %v1902, %v1898
  %v1971 = vpack.c.b16 %v1907, %v1903
  %v1972 = vpack.c.b16 %v1908, %v1904
  %v1973 = vpack.c.b16 %v1909, %v1905
  %v1974 = vpack.c.b16 %v1910, %v1906
  %2039 = vmatprep.subr.bf16.mxu0 %v1912
  %2040 = vmatpush1.bf16.msra.mxu0 %v1911
  %2041 = vmatprep.subr.bf16.mxu0 %v1916
  %2042 = vmatpush1.bf16.msra.mxu0 %v1915
  %2043 = vmatprep.subr.bf16.mxu0 %v1920
  %2044 = vmatpush1.bf16.msra.mxu0 %v1919
  %2045 = vmatprep.subr.bf16.mxu0 %v1924
  %2046 = vmatpush1.bf16.msra.mxu0 %v1923
  %2047 = vmatprep.subr.bf16.mxu0 %v1928
  %2048 = vmatpush1.bf16.msra.mxu0 %v1927
  %2049 = vmatprep.subr.bf16.mxu0 %v1932
  %2050 = vmatpush1.bf16.msra.mxu0 %v1931
  %2051 = vmatprep.subr.bf16.mxu0 %v1936
  %2052 = vmatpush1.bf16.msra.mxu0 %v1935
  %2053 = vmatprep.subr.bf16.mxu0 %v1940
  %2054 = vmatpush1.bf16.msra.mxu0 %v1939
  %2055 = vmatprep.subr.bf16.mxu0 %v1944
  %2056 = vmatpush1.bf16.msra.mxu0 %v1943
  %2057 = vmatprep.subr.bf16.mxu0 %v1948
  %2058 = vmatpush1.bf16.msra.mxu0 %v1947
  %2059 = vmatprep.subr.bf16.mxu0 %v1952
  %2060 = vmatpush1.bf16.msra.mxu0 %v1951
  %2061 = vmatprep.subr.bf16.mxu0 %v1956
  %2062 = vmatpush1.bf16.msra.mxu0 %v1955
  %2063 = vmatprep.subr.bf16.mxu0 %v1960
  %2064 = vmatpush1.bf16.msra.mxu0 %v1959
  %2065 = vmatprep.subr.bf16.mxu0 %v1964
  %2066 = vmatpush1.bf16.msra.mxu0 %v1963
  %2067 = vmatprep.subr.bf16.mxu0 %v1968
  %2068 = vmatpush1.bf16.msra.mxu0 %v1967
  %2069 = vmatprep.subr.bf16.mxu0 %v1972
  %2070 = vmatpush1.bf16.msra.mxu0 %v1971
  %2071 = vmatprep.mubr.bf16.mxu0 %v1632
  %2072 = vmatmul.mubr.bf16.gmra.mrb[0].mxu0 %v1631
  %v2073 = vpop.f32.mrb[0].mxu0
  %v2074 = vadd.f32 %v1702, %v2073
  %v2075 = vpop.f32.mrb[0].mxu0
  %v2076 = vadd.f32 %v1706, %v2075
  %v2077 = vpop.f32.mrb[0].mxu0
  %v2078 = vpop.f32.mrb[0].mxu0
  %2079 = vdwg.mxu0
  %2080 = vmatprep.subr.bf16.mxu0 %v1914
  %2081 = vmatpush1.bf16.msra.mxu0 %v1913
  %2082 = vmatprep.subr.bf16.mxu0 %v1918
  %2083 = vmatpush1.bf16.msra.mxu0 %v1917
  %2084 = vmatprep.subr.bf16.mxu0 %v1922
  %2085 = vmatpush1.bf16.msra.mxu0 %v1921
  %2086 = vmatprep.subr.bf16.mxu0 %v1926
  %2087 = vmatpush1.bf16.msra.mxu0 %v1925
  %2088 = vmatprep.subr.bf16.mxu0 %v1930
  %2089 = vmatpush1.bf16.msra.mxu0 %v1929
  %2090 = vmatprep.subr.bf16.mxu0 %v1934
  %2091 = vmatpush1.bf16.msra.mxu0 %v1933
  %2092 = vmatprep.subr.bf16.mxu0 %v1938
  %2093 = vmatpush1.bf16.msra.mxu0 %v1937
  %2094 = vmatprep.subr.bf16.mxu0 %v1942
  %2095 = vmatpush1.bf16.msra.mxu0 %v1941
  %2096 = vmatprep.subr.bf16.mxu0 %v1946
  %2097 = vmatpush1.bf16.msra.mxu0 %v1945
  %2098 = vmatprep.subr.bf16.mxu0 %v1950
  %2099 = vmatpush1.bf16.msra.mxu0 %v1949
  %2100 = vmatprep.subr.bf16.mxu0 %v1954
  %2101 = vmatpush1.bf16.msra.mxu0 %v1953
  %2102 = vmatprep.subr.bf16.mxu0 %v1958
  %2103 = vmatpush1.bf16.msra.mxu0 %v1957
  %2104 = vmatprep.subr.bf16.mxu0 %v1962
  %2105 = vmatpush1.bf16.msra.mxu0 %v1961
  %2106 = vmatprep.subr.bf16.mxu0 %v1966
  %2107 = vmatpush1.bf16.msra.mxu0 %v1965
  %2108 = vmatprep.subr.bf16.mxu0 %v1970
  %2109 = vmatpush1.bf16.msra.mxu0 %v1969
  %2110 = vmatprep.subr.bf16.mxu0 %v1974
  %2111 = vmatpush1.bf16.msra.mxu0 %v1973
  %2112 = vmatprep.mubr.bf16.mxu0 %v1632
  %2113 = vmatmul.mubr.bf16.gmra.mrb[0].mxu0 %v1631
  %v2114 = vpop.f32.mrb[0].mxu0
  %v2115 = vadd.f32 %v1710, %v2114
  %v2116 = vpop.f32.mrb[0].mxu0
  %v2117 = vadd.f32 %v1714, %v2116
  %v2118 = vpop.f32.mrb[0].mxu0
  %v2119 = vpop.f32.mrb[0].mxu0
  %2120 = vdwg.mxu0
  %v2121 = vxor.u32 %v2074, 2147483648
  %v2122 = vmul.f32 %v2121, 1.442695
  %v2123 = vpow.pop %v2122
  %v2124 = vadd.f32 %v2123, 1.0
  %v2125 = vrcp.pop %v2124
  %v2126 = vmul.f32 1.0, %v2125
  %v2127 = vxor.u32 %v2076, 2147483648
  %v2128 = vmul.f32 %v2127, 1.442695
  %v2129 = vpow.pop %v2128
  %v2130 = vadd.f32 %v2129, 1.0
  %v2131 = vrcp.pop %v2130
  %v2132 = vmul.f32 1.0, %v2131
  %v2133 = vtanh.pop %v2115
  %v2134 = vxor.u32 %v2117, 2147483648
  %v2135 = vmul.f32 %v2134, 1.442695
  %v2136 = vpow.pop %v2135
  %v2137 = vadd.f32 %v2136, 1.0
  %v2138 = vrcp.pop %v2137
  %v2139 = vmul.f32 1.0, %v2138
  %v2140 = vmul.f32 %v2132, %v1630
  %v2141 = vmul.f32 %v2126, %v2133
  %v2142 = vadd.f32 %v2140, %v2141
  %v2143 = vtanh.pop %v2142
  %v2144 = vmul.f32 %v2139, %v2143
  %v2145 = vld [vmem:[%s4] sm:$0x3]
  %v2146 = vld [vmem:[%s5] sm:$0x3]
  %v2147 = vpack.c.bf16 %v2144, %v2144
  %v2148 = vpack.c.bf16 %v2145, %v2145
  %v2149 = vld [vmem:[%s14] sm:$0xff]
  %v2150 = vld [vmem:[%s14 + $0x8] sm:$0xff]
  %v2151 = vld [vmem:[%s14 + $0x10] sm:$0xff]
  %v2152 = vld [vmem:[%s14 + $0x18] sm:$0xff]
  %v2153 = vld [vmem:[%s14 + $0x20] sm:$0xff]
  %v2154 = vld [vmem:[%s14 + $0x28] sm:$0xff]
  %v2155 = vld [vmem:[%s14 + $0x30] sm:$0xff]
  %v2156 = vld [vmem:[%s14 + $0x38] sm:$0xff]
  %v2157 = vld [vmem:[%s14 + $0x40] sm:$0xff]
  %v2158 = vld [vmem:[%s14 + $0x48] sm:$0xff]
  %v2159 = vld [vmem:[%s14 + $0x50] sm:$0xff]
  %v2160 = vld [vmem:[%s14 + $0x58] sm:$0xff]
  %v2161 = vld [vmem:[%s14 + $0x60] sm:$0xff]
  %v2162 = vld [vmem:[%s14 + $0x68] sm:$0xff]
  %v2163 = vld [vmem:[%s14 + $0x70] sm:$0xff]
  %v2164 = vld [vmem:[%s14 + $0x78] sm:$0xff]
  %v2165 = vld [vmem:[%s14 + $0x80] sm:$0xff]
  %v2166 = vld [vmem:[%s14 + $0x88] sm:$0xff]
  %v2167 = vld [vmem:[%s14 + $0x90] sm:$0xff]
  %v2168 = vld [vmem:[%s14 + $0x98] sm:$0xff]
  %v2169 = vld [vmem:[%s14 + $0xa0] sm:$0xff]
  %v2170 = vld [vmem:[%s14 + $0xa8] sm:$0xff]
  %v2171 = vld [vmem:[%s14 + $0xb0] sm:$0xff]
  %v2172 = vld [vmem:[%s14 + $0xb8] sm:$0xff]
  %v2173 = vld [vmem:[%s14 + $0xc0] sm:$0xff]
  %v2174 = vld [vmem:[%s14 + $0xc8] sm:$0xff]
  %v2175 = vld [vmem:[%s14 + $0xd0] sm:$0xff]
  %v2176 = vld [vmem:[%s14 + $0xd8] sm:$0xff]
  %v2177 = vld [vmem:[%s14 + $0xe0] sm:$0xff]
  %v2178 = vld [vmem:[%s14 + $0xe8] sm:$0xff]
  %v2179 = vld [vmem:[%s14 + $0xf0] sm:$0xff]
  %v2180 = vld [vmem:[%s14 + $0xf8] sm:$0xff]
  %v2181 = vld [vmem:[%s14 + $0x100] sm:$0xff]
  %v2182 = vld [vmem:[%s14 + $0x108] sm:$0xff]
  %v2183 = vld [vmem:[%s14 + $0x110] sm:$0xff]
  %v2184 = vld [vmem:[%s14 + $0x118] sm:$0xff]
  %v2185 = vld [vmem:[%s14 + $0x120] sm:$0xff]
  %v2186 = vld [vmem:[%s14 + $0x128] sm:$0xff]
  %v2187 = vld [vmem:[%s14 + $0x130] sm:$0xff]
  %v2188 = vld [vmem:[%s14 + $0x138] sm:$0xff]
  %v2189 = vld [vmem:[%s14 + $0x140] sm:$0xff]
  %v2190 = vld [vmem:[%s14 + $0x148] sm:$0xff]
  %v2191 = vld [vmem:[%s14 + $0x150] sm:$0xff]
  %v2192 = vld [vmem:[%s14 + $0x158] sm:$0xff]
  %v2193 = vld [vmem:[%s14 + $0x160] sm:$0xff]
  %v2194 = vld [vmem:[%s14 + $0x168] sm:$0xff]
  %v2195 = vld [vmem:[%s14 + $0x170] sm:$0xff]
  %v2196 = vld [vmem:[%s14 + $0x178] sm:$0xff]
  %v2197 = vld [vmem:[%s14 + $0x180] sm:$0xff]
  %v2198 = vld [vmem:[%s14 + $0x188] sm:$0xff]
  %v2199 = vld [vmem:[%s14 + $0x190] sm:$0xff]
  %v2200 = vld [vmem:[%s14 + $0x198] sm:$0xff]
  %v2201 = vld [vmem:[%s14 + $0x1a0] sm:$0xff]
  %v2202 = vld [vmem:[%s14 + $0x1a8] sm:$0xff]
  %v2203 = vld [vmem:[%s14 + $0x1b0] sm:$0xff]
  %v2204 = vld [vmem:[%s14 + $0x1b8] sm:$0xff]
  %v2205 = vld [vmem:[%s14 + $0x1c0] sm:$0xff]
  %v2206 = vld [vmem:[%s14 + $0x1c8] sm:$0xff]
  %v2207 = vld [vmem:[%s14 + $0x1d0] sm:$0xff]
  %v2208 = vld [vmem:[%s14 + $0x1d8] sm:$0xff]
  %v2209 = vld [vmem:[%s14 + $0x1e0] sm:$0xff]
  %v2210 = vld [vmem:[%s14 + $0x1e8] sm:$0xff]
  %v2211 = vld [vmem:[%s14 + $0x1f0] sm:$0xff]
  %v2212 = vld [vmem:[%s14 + $0x1f8] sm:$0xff]
  %v2213 = vld [vmem:[%s15] sm:$0xf]
  %v2215 = vlaneseq
  %v2216 = vshrl.u32 %v2215, 7
  %v2217 = vsub.s32 0, %v2216
  %v2218 = vrot.slane %v2213, %v2217
  %v2219 = vlaneseq
  %v2220 = vshrl.u32 %v2219, 7
  %v2221 = vsub.s32 1, %v2220
  %v2222 = vrot.slane %v2213, %v2221
  %v2223 = vlaneseq
  %v2224 = vshrl.u32 %v2223, 7
  %v2225 = vsub.s32 2, %v2224
  %v2226 = vrot.slane %v2213, %v2225
  %v2227 = vlaneseq
  %v2228 = vshrl.u32 %v2227, 7
  %v2229 = vsub.s32 3, %v2228
  %v2230 = vrot.slane %v2213, %v2229
  %v2299 = vunpack.c.l.b16 %v2149
  %v2300 = vunpack.c.h.b16 %v2149
  %v2301 = vunpack.c.l.b16 %v2150
  %v2302 = vunpack.c.h.b16 %v2150
  %v2303 = vunpack.c.l.b16 %v2151
  %v2304 = vunpack.c.h.b16 %v2151
  %v2305 = vunpack.c.l.b16 %v2152
  %v2306 = vunpack.c.h.b16 %v2152
  %v2307 = vunpack.c.l.b16 %v2153
  %v2308 = vunpack.c.h.b16 %v2153
  %v2309 = vunpack.c.l.b16 %v2154
  %v2310 = vunpack.c.h.b16 %v2154
  %v2311 = vunpack.c.l.b16 %v2155
  %v2312 = vunpack.c.h.b16 %v2155
  %v2313 = vunpack.c.l.b16 %v2156
  %v2314 = vunpack.c.h.b16 %v2156
  %v2315 = vunpack.c.l.b16 %v2157
  %v2316 = vunpack.c.h.b16 %v2157
  %v2317 = vunpack.c.l.b16 %v2158
  %v2318 = vunpack.c.h.b16 %v2158
  %v2319 = vunpack.c.l.b16 %v2159
  %v2320 = vunpack.c.h.b16 %v2159
  %v2321 = vunpack.c.l.b16 %v2160
  %v2322 = vunpack.c.h.b16 %v2160
  %v2323 = vunpack.c.l.b16 %v2161
  %v2324 = vunpack.c.h.b16 %v2161
  %v2325 = vunpack.c.l.b16 %v2162
  %v2326 = vunpack.c.h.b16 %v2162
  %v2327 = vunpack.c.l.b16 %v2163
  %v2328 = vunpack.c.h.b16 %v2163
  %v2329 = vunpack.c.l.b16 %v2164
  %v2330 = vunpack.c.h.b16 %v2164
  %v2331 = vunpack.c.l.b16 %v2165
  %v2332 = vunpack.c.h.b16 %v2165
  %v2333 = vunpack.c.l.b16 %v2166
  %v2334 = vunpack.c.h.b16 %v2166
  %v2335 = vunpack.c.l.b16 %v2167
  %v2336 = vunpack.c.h.b16 %v2167
  %v2337 = vunpack.c.l.b16 %v2168
  %v2338 = vunpack.c.h.b16 %v2168
  %v2339 = vunpack.c.l.b16 %v2169
  %v2340 = vunpack.c.h.b16 %v2169
  %v2341 = vunpack.c.l.b16 %v2170
  %v2342 = vunpack.c.h.b16 %v2170
  %v2343 = vunpack.c.l.b16 %v2171
  %v2344 = vunpack.c.h.b16 %v2171
  %v2345 = vunpack.c.l.b16 %v2172
  %v2346 = vunpack.c.h.b16 %v2172
  %v2347 = vunpack.c.l.b16 %v2173
  %v2348 = vunpack.c.h.b16 %v2173
  %v2349 = vunpack.c.l.b16 %v2174
  %v2350 = vunpack.c.h.b16 %v2174
  %v2351 = vunpack.c.l.b16 %v2175
  %v2352 = vunpack.c.h.b16 %v2175
  %v2353 = vunpack.c.l.b16 %v2176
  %v2354 = vunpack.c.h.b16 %v2176
  %v2355 = vunpack.c.l.b16 %v2177
  %v2356 = vunpack.c.h.b16 %v2177
  %v2357 = vunpack.c.l.b16 %v2178
  %v2358 = vunpack.c.h.b16 %v2178
  %v2359 = vunpack.c.l.b16 %v2179
  %v2360 = vunpack.c.h.b16 %v2179
  %v2361 = vunpack.c.l.b16 %v2180
  %v2362 = vunpack.c.h.b16 %v2180
  %v2363 = vunpack.c.l.b16 %v2181
  %v2364 = vunpack.c.h.b16 %v2181
  %v2365 = vunpack.c.l.b16 %v2182
  %v2366 = vunpack.c.h.b16 %v2182
  %v2367 = vunpack.c.l.b16 %v2183
  %v2368 = vunpack.c.h.b16 %v2183
  %v2369 = vunpack.c.l.b16 %v2184
  %v2370 = vunpack.c.h.b16 %v2184
  %v2371 = vunpack.c.l.b16 %v2185
  %v2372 = vunpack.c.h.b16 %v2185
  %v2373 = vunpack.c.l.b16 %v2186
  %v2374 = vunpack.c.h.b16 %v2186
  %v2375 = vunpack.c.l.b16 %v2187
  %v2376 = vunpack.c.h.b16 %v2187
  %v2377 = vunpack.c.l.b16 %v2188
  %v2378 = vunpack.c.h.b16 %v2188
  %v2379 = vunpack.c.l.b16 %v2189
  %v2380 = vunpack.c.h.b16 %v2189
  %v2381 = vunpack.c.l.b16 %v2190
  %v2382 = vunpack.c.h.b16 %v2190
  %v2383 = vunpack.c.l.b16 %v2191
  %v2384 = vunpack.c.h.b16 %v2191
  %v2385 = vunpack.c.l.b16 %v2192
  %v2386 = vunpack.c.h.b16 %v2192
  %v2387 = vunpack.c.l.b16 %v2193
  %v2388 = vunpack.c.h.b16 %v2193
  %v2389 = vunpack.c.l.b16 %v2194
  %v2390 = vunpack.c.h.b16 %v2194
  %v2391 = vunpack.c.l.b16 %v2195
  %v2392 = vunpack.c.h.b16 %v2195
  %v2393 = vunpack.c.l.b16 %v2196
  %v2394 = vunpack.c.h.b16 %v2196
  %v2395 = vunpack.c.l.b16 %v2197
  %v2396 = vunpack.c.h.b16 %v2197
  %v2397 = vunpack.c.l.b16 %v2198
  %v2398 = vunpack.c.h.b16 %v2198
  %v2399 = vunpack.c.l.b16 %v2199
  %v2400 = vunpack.c.h.b16 %v2199
  %v2401 = vunpack.c.l.b16 %v2200
  %v2402 = vunpack.c.h.b16 %v2200
  %v2403 = vunpack.c.l.b16 %v2201
  %v2404 = vunpack.c.h.b16 %v2201
  %v2405 = vunpack.c.l.b16 %v2202
  %v2406 = vunpack.c.h.b16 %v2202
  %v2407 = vunpack.c.l.b16 %v2203
  %v2408 = vunpack.c.h.b16 %v2203
  %v2409 = vunpack.c.l.b16 %v2204
  %v2410 = vunpack.c.h.b16 %v2204
  %v2411 = vunpack.c.l.b16 %v2205
  %v2412 = vunpack.c.h.b16 %v2205
  %v2413 = vunpack.c.l.b16 %v2206
  %v2414 = vunpack.c.h.b16 %v2206
  %v2415 = vunpack.c.l.b16 %v2207
  %v2416 = vunpack.c.h.b16 %v2207
  %v2417 = vunpack.c.l.b16 %v2208
  %v2418 = vunpack.c.h.b16 %v2208
  %v2419 = vunpack.c.l.b16 %v2209
  %v2420 = vunpack.c.h.b16 %v2209
  %v2421 = vunpack.c.l.b16 %v2210
  %v2422 = vunpack.c.h.b16 %v2210
  %v2423 = vunpack.c.l.b16 %v2211
  %v2424 = vunpack.c.h.b16 %v2211
  %v2425 = vunpack.c.l.b16 %v2212
  %v2426 = vunpack.c.h.b16 %v2212
  %v2427 = vpack.c.b16 %v2303, %v2299
  %v2428 = vpack.c.b16 %v2304, %v2300
  %v2429 = vpack.c.b16 %v2305, %v2301
  %v2430 = vpack.c.b16 %v2306, %v2302
  %v2431 = vpack.c.b16 %v2311, %v2307
  %v2432 = vpack.c.b16 %v2312, %v2308
  %v2433 = vpack.c.b16 %v2313, %v2309
  %v2434 = vpack.c.b16 %v2314, %v2310
  %v2435 = vpack.c.b16 %v2319, %v2315
  %v2436 = vpack.c.b16 %v2320, %v2316
  %v2437 = vpack.c.b16 %v2321, %v2317
  %v2438 = vpack.c.b16 %v2322, %v2318
  %v2439 = vpack.c.b16 %v2327, %v2323
  %v2440 = vpack.c.b16 %v2328, %v2324
  %v2441 = vpack.c.b16 %v2329, %v2325
  %v2442 = vpack.c.b16 %v2330, %v2326
  %v2443 = vpack.c.b16 %v2335, %v2331
  %v2444 = vpack.c.b16 %v2336, %v2332
  %v2445 = vpack.c.b16 %v2337, %v2333
  %v2446 = vpack.c.b16 %v2338, %v2334
  %v2447 = vpack.c.b16 %v2343, %v2339
  %v2448 = vpack.c.b16 %v2344, %v2340
  %v2449 = vpack.c.b16 %v2345, %v2341
  %v2450 = vpack.c.b16 %v2346, %v2342
  %v2451 = vpack.c.b16 %v2351, %v2347
  %v2452 = vpack.c.b16 %v2352, %v2348
  %v2453 = vpack.c.b16 %v2353, %v2349
  %v2454 = vpack.c.b16 %v2354, %v2350
  %v2455 = vpack.c.b16 %v2359, %v2355
  %v2456 = vpack.c.b16 %v2360, %v2356
  %v2457 = vpack.c.b16 %v2361, %v2357
  %v2458 = vpack.c.b16 %v2362, %v2358
  %v2459 = vpack.c.b16 %v2367, %v2363
  %v2460 = vpack.c.b16 %v2368, %v2364
  %v2461 = vpack.c.b16 %v2369, %v2365
  %v2462 = vpack.c.b16 %v2370, %v2366
  %v2463 = vpack.c.b16 %v2375, %v2371
  %v2464 = vpack.c.b16 %v2376, %v2372
  %v2465 = vpack.c.b16 %v2377, %v2373
  %v2466 = vpack.c.b16 %v2378, %v2374
  %v2467 = vpack.c.b16 %v2383, %v2379
  %v2468 = vpack.c.b16 %v2384, %v2380
  %v2469 = vpack.c.b16 %v2385, %v2381
  %v2470 = vpack.c.b16 %v2386, %v2382
  %v2471 = vpack.c.b16 %v2391, %v2387
  %v2472 = vpack.c.b16 %v2392, %v2388
  %v2473 = vpack.c.b16 %v2393, %v2389
  %v2474 = vpack.c.b16 %v2394, %v2390
  %v2475 = vpack.c.b16 %v2399, %v2395
  %v2476 = vpack.c.b16 %v2400, %v2396
  %v2477 = vpack.c.b16 %v2401, %v2397
  %v2478 = vpack.c.b16 %v2402, %v2398
  %v2479 = vpack.c.b16 %v2407, %v2403
  %v2480 = vpack.c.b16 %v2408, %v2404
  %v2481 = vpack.c.b16 %v2409, %v2405
  %v2482 = vpack.c.b16 %v2410, %v2406
  %v2483 = vpack.c.b16 %v2415, %v2411
  %v2484 = vpack.c.b16 %v2416, %v2412
  %v2485 = vpack.c.b16 %v2417, %v2413
  %v2486 = vpack.c.b16 %v2418, %v2414
  %v2487 = vpack.c.b16 %v2423, %v2419
  %v2488 = vpack.c.b16 %v2424, %v2420
  %v2489 = vpack.c.b16 %v2425, %v2421
  %v2490 = vpack.c.b16 %v2426, %v2422
  %2555 = vmatprep.subr.bf16.mxu0 %v2428
  %2556 = vmatpush1.bf16.msra.mxu0 %v2427
  %2557 = vmatprep.subr.bf16.mxu0 %v2432
  %2558 = vmatpush1.bf16.msra.mxu0 %v2431
  %2559 = vmatprep.subr.bf16.mxu0 %v2436
  %2560 = vmatpush1.bf16.msra.mxu0 %v2435
  %2561 = vmatprep.subr.bf16.mxu0 %v2440
  %2562 = vmatpush1.bf16.msra.mxu0 %v2439
  %2563 = vmatprep.subr.bf16.mxu0 %v2444
  %2564 = vmatpush1.bf16.msra.mxu0 %v2443
  %2565 = vmatprep.subr.bf16.mxu0 %v2448
  %2566 = vmatpush1.bf16.msra.mxu0 %v2447
  %2567 = vmatprep.subr.bf16.mxu0 %v2452
  %2568 = vmatpush1.bf16.msra.mxu0 %v2451
  %2569 = vmatprep.subr.bf16.mxu0 %v2456
  %2570 = vmatpush1.bf16.msra.mxu0 %v2455
  %2571 = vmatprep.subr.bf16.mxu0 %v2460
  %2572 = vmatpush1.bf16.msra.mxu0 %v2459
  %2573 = vmatprep.subr.bf16.mxu0 %v2464
  %2574 = vmatpush1.bf16.msra.mxu0 %v2463
  %2575 = vmatprep.subr.bf16.mxu0 %v2468
  %2576 = vmatpush1.bf16.msra.mxu0 %v2467
  %2577 = vmatprep.subr.bf16.mxu0 %v2472
  %2578 = vmatpush1.bf16.msra.mxu0 %v2471
  %2579 = vmatprep.subr.bf16.mxu0 %v2476
  %2580 = vmatpush1.bf16.msra.mxu0 %v2475
  %2581 = vmatprep.subr.bf16.mxu0 %v2480
  %2582 = vmatpush1.bf16.msra.mxu0 %v2479
  %2583 = vmatprep.subr.bf16.mxu0 %v2484
  %2584 = vmatpush1.bf16.msra.mxu0 %v2483
  %2585 = vmatprep.subr.bf16.mxu0 %v2488
  %2586 = vmatpush1.bf16.msra.mxu0 %v2487
  %2587 = vmatprep.mubr.bf16.mxu0 %v2148
  %2588 = vmatmul.mubr.bf16.gmra.mrb[0].mxu0 %v2147
  %v2589 = vpop.f32.mrb[0].mxu0
  %v2590 = vadd.f32 %v2218, %v2589
  %v2591 = vpop.f32.mrb[0].mxu0
  %v2592 = vadd.f32 %v2222, %v2591
  %v2593 = vpop.f32.mrb[0].mxu0
  %v2594 = vpop.f32.mrb[0].mxu0
  %2595 = vdwg.mxu0
  %2596 = vmatprep.subr.bf16.mxu0 %v2430
  %2597 = vmatpush1.bf16.msra.mxu0 %v2429
  %2598 = vmatprep.subr.bf16.mxu0 %v2434
  %2599 = vmatpush1.bf16.msra.mxu0 %v2433
  %2600 = vmatprep.subr.bf16.mxu0 %v2438
  %2601 = vmatpush1.bf16.msra.mxu0 %v2437
  %2602 = vmatprep.subr.bf16.mxu0 %v2442
  %2603 = vmatpush1.bf16.msra.mxu0 %v2441
  %2604 = vmatprep.subr.bf16.mxu0 %v2446
  %2605 = vmatpush1.bf16.msra.mxu0 %v2445
  %2606 = vmatprep.subr.bf16.mxu0 %v2450
  %2607 = vmatpush1.bf16.msra.mxu0 %v2449
  %2608 = vmatprep.subr.bf16.mxu0 %v2454
  %2609 = vmatpush1.bf16.msra.mxu0 %v2453
  %2610 = vmatprep.subr.bf16.mxu0 %v2458
  %2611 = vmatpush1.bf16.msra.mxu0 %v2457
  %2612 = vmatprep.subr.bf16.mxu0 %v2462
  %2613 = vmatpush1.bf16.msra.mxu0 %v2461
  %2614 = vmatprep.subr.bf16.mxu0 %v2466
  %2615 = vmatpush1.bf16.msra.mxu0 %v2465
  %2616 = vmatprep.subr.bf16.mxu0 %v2470
  %2617 = vmatpush1.bf16.msra.mxu0 %v2469
  %2618 = vmatprep.subr.bf16.mxu0 %v2474
  %2619 = vmatpush1.bf16.msra.mxu0 %v2473
  %2620 = vmatprep.subr.bf16.mxu0 %v2478
  %2621 = vmatpush1.bf16.msra.mxu0 %v2477
  %2622 = vmatprep.subr.bf16.mxu0 %v2482
  %2623 = vmatpush1.bf16.msra.mxu0 %v2481
  %2624 = vmatprep.subr.bf16.mxu0 %v2486
  %2625 = vmatpush1.bf16.msra.mxu0 %v2485
  %2626 = vmatprep.subr.bf16.mxu0 %v2490
  %2627 = vmatpush1.bf16.msra.mxu0 %v2489
  %2628 = vmatprep.mubr.bf16.mxu0 %v2148
  %2629 = vmatmul.mubr.bf16.gmra.mrb[0].mxu0 %v2147
  %v2630 = vpop.f32.mrb[0].mxu0
  %v2631 = vadd.f32 %v2226, %v2630
  %v2632 = vpop.f32.mrb[0].mxu0
  %v2633 = vadd.f32 %v2230, %v2632
  %v2634 = vpop.f32.mrb[0].mxu0
  %v2635 = vpop.f32.mrb[0].mxu0
  %2636 = vdwg.mxu0
  %v2637 = vxor.u32 %v2590, 2147483648
  %v2638 = vmul.f32 %v2637, 1.442695
  %v2639 = vpow.pop %v2638
  %v2640 = vadd.f32 %v2639, 1.0
  %v2641 = vrcp.pop %v2640
  %v2642 = vmul.f32 1.0, %v2641
  %v2643 = vxor.u32 %v2592, 2147483648
  %v2644 = vmul.f32 %v2643, 1.442695
  %v2645 = vpow.pop %v2644
  %v2646 = vadd.f32 %v2645, 1.0
  %v2647 = vrcp.pop %v2646
  %v2648 = vmul.f32 1.0, %v2647
  %v2649 = vtanh.pop %v2631
  %v2650 = vxor.u32 %v2633, 2147483648
  %v2651 = vmul.f32 %v2650, 1.442695
  %v2652 = vpow.pop %v2651
  %v2653 = vadd.f32 %v2652, 1.0
  %v2654 = vrcp.pop %v2653
  %v2655 = vmul.f32 1.0, %v2654
  %v2656 = vmul.f32 %v2648, %v2146
  %v2657 = vmul.f32 %v2642, %v2649
  %v2658 = vadd.f32 %v2656, %v2657
  %v2659 = vtanh.pop %v2658
  %v2660 = vmul.f32 %v2655, %v2659
  %v2661 = vpack.c.bf16 %v2660, %v2660
  %v2662 = vld [vmem:[%s16] sm:$0xf]
  %v2663 = vld [vmem:[%s16 + $0x4] sm:$0xf]
  %v2664 = vld [vmem:[%s16 + $0x8] sm:$0xf]
  %v2665 = vld [vmem:[%s16 + $0xc] sm:$0xf]
  %v2666 = vld [vmem:[%s16 + $0x10] sm:$0xf]
  %v2667 = vld [vmem:[%s16 + $0x14] sm:$0xf]
  %v2668 = vld [vmem:[%s16 + $0x18] sm:$0xf]
  %v2669 = vld [vmem:[%s16 + $0x1c] sm:$0xf]
  %v2670 = vld [vmem:[%s16 + $0x20] sm:$0xf]
  %v2671 = vld [vmem:[%s16 + $0x24] sm:$0xf]
  %v2672 = vld [vmem:[%s16 + $0x28] sm:$0xf]
  %v2673 = vld [vmem:[%s16 + $0x2c] sm:$0xf]
  %v2674 = vld [vmem:[%s16 + $0x30] sm:$0xf]
  %v2675 = vld [vmem:[%s16 + $0x34] sm:$0xf]
  %v2676 = vld [vmem:[%s16 + $0x38] sm:$0xf]
  %v2677 = vld [vmem:[%s16 + $0x3c] sm:$0xf]
  %v2678 = vld [vmem:[%s16 + $0x40] sm:$0xf]
  %v2679 = vld [vmem:[%s16 + $0x44] sm:$0xf]
  %v2680 = vld [vmem:[%s16 + $0x48] sm:$0xf]
  %v2681 = vld [vmem:[%s16 + $0x4c] sm:$0xf]
  %v2682 = vld [vmem:[%s16 + $0x50] sm:$0xf]
  %v2683 = vld [vmem:[%s16 + $0x54] sm:$0xf]
  %v2684 = vld [vmem:[%s16 + $0x58] sm:$0xf]
  %v2685 = vld [vmem:[%s16 + $0x5c] sm:$0xf]
  %v2686 = vld [vmem:[%s16 + $0x60] sm:$0xf]
  %v2687 = vld [vmem:[%s16 + $0x64] sm:$0xf]
  %v2688 = vld [vmem:[%s16 + $0x68] sm:$0xf]
  %v2689 = vld [vmem:[%s16 + $0x6c] sm:$0xf]
  %v2690 = vld [vmem:[%s16 + $0x70] sm:$0xf]
  %v2691 = vld [vmem:[%s16 + $0x74] sm:$0xf]
  %v2692 = vld [vmem:[%s16 + $0x78] sm:$0xf]
  %v2693 = vld [vmem:[%s16 + $0x7c] sm:$0xf]
  %v2694 = vld [vmem:[%s17] sm:$0x1]
  %v2696 = vlaneseq
  %v2697 = vshrl.u32 %v2696, 7
  %v2698 = vsub.s32 0, %v2697
  %v2699 = vrot.slane %v2694, %v2698
  %v2733 = vunpack.c.l.b16 %v2662
  %v2734 = vunpack.c.l.b16 %v2663
  %v2735 = vunpack.c.l.b16 %v2664
  %v2736 = vunpack.c.l.b16 %v2665
  %v2737 = vunpack.c.l.b16 %v2666
  %v2738 = vunpack.c.l.b16 %v2667
  %v2739 = vunpack.c.l.b16 %v2668
  %v2740 = vunpack.c.l.b16 %v2669
  %v2741 = vunpack.c.l.b16 %v2670
  %v2742 = vunpack.c.l.b16 %v2671
  %v2743 = vunpack.c.l.b16 %v2672
  %v2744 = vunpack.c.l.b16 %v2673
  %v2745 = vunpack.c.l.b16 %v2674
  %v2746 = vunpack.c.l.b16 %v2675
  %v2747 = vunpack.c.l.b16 %v2676
  %v2748 = vunpack.c.l.b16 %v2677
  %v2749 = vunpack.c.l.b16 %v2678
  %v2750 = vunpack.c.l.b16 %v2679
  %v2751 = vunpack.c.l.b16 %v2680
  %v2752 = vunpack.c.l.b16 %v2681
  %v2753 = vunpack.c.l.b16 %v2682
  %v2754 = vunpack.c.l.b16 %v2683
  %v2755 = vunpack.c.l.b16 %v2684
  %v2756 = vunpack.c.l.b16 %v2685
  %v2757 = vunpack.c.l.b16 %v2686
  %v2758 = vunpack.c.l.b16 %v2687
  %v2759 = vunpack.c.l.b16 %v2688
  %v2760 = vunpack.c.l.b16 %v2689
  %v2761 = vunpack.c.l.b16 %v2690
  %v2762 = vunpack.c.l.b16 %v2691
  %v2763 = vunpack.c.l.b16 %v2692
  %v2764 = vunpack.c.l.b16 %v2693
  %v2765 = vpack.c.b16 %v2734, %v2733
  %v2766 = vpack.c.b16 %v2736, %v2735
  %v2767 = vpack.c.b16 %v2738, %v2737
  %v2768 = vpack.c.b16 %v2740, %v2739
  %v2769 = vpack.c.b16 %v2742, %v2741
  %v2770 = vpack.c.b16 %v2744, %v2743
  %v2771 = vpack.c.b16 %v2746, %v2745
  %v2772 = vpack.c.b16 %v2748, %v2747
  %v2773 = vpack.c.b16 %v2750, %v2749
  %v2774 = vpack.c.b16 %v2752, %v2751
  %v2775 = vpack.c.b16 %v2754, %v2753
  %v2776 = vpack.c.b16 %v2756, %v2755
  %v2777 = vpack.c.b16 %v2758, %v2757
  %v2778 = vpack.c.b16 %v2760, %v2759
  %v2779 = vpack.c.b16 %v2762, %v2761
  %v2780 = vpack.c.b16 %v2764, %v2763
  %2797 = vmatprep.subr.bf16.mxu0 0
  %2798 = vmatpush1.bf16.msra.mxu0 %v2765
  %2799 = vmatprep.subr.bf16.mxu0 0
  %2800 = vmatpush1.bf16.msra.mxu0 %v2766
  %2801 = vmatprep.subr.bf16.mxu0 0
  %2802 = vmatpush1.bf16.msra.mxu0 %v2767
  %2803 = vmatprep.subr.bf16.mxu0 0
  %2804 = vmatpush1.bf16.msra.mxu0 %v2768
  %2805 = vmatprep.subr.bf16.mxu0 0
  %2806 = vmatpush1.bf16.msra.mxu0 %v2769
  %2807 = vmatprep.subr.bf16.mxu0 0
  %2808 = vmatpush1.bf16.msra.mxu0 %v2770
  %2809 = vmatprep.subr.bf16.mxu0 0
  %2810 = vmatpush1.bf16.msra.mxu0 %v2771
  %2811 = vmatprep.subr.bf16.mxu0 0
  %2812 = vmatpush1.bf16.msra.mxu0 %v2772
  %2813 = vmatprep.subr.bf16.mxu0 0
  %2814 = vmatpush1.bf16.msra.mxu0 %v2773
  %2815 = vmatprep.subr.bf16.mxu0 0
  %2816 = vmatpush1.bf16.msra.mxu0 %v2774
  %2817 = vmatprep.subr.bf16.mxu0 0
  %2818 = vmatpush1.bf16.msra.mxu0 %v2775
  %2819 = vmatprep.subr.bf16.mxu0 0
  %2820 = vmatpush1.bf16.msra.mxu0 %v2776
  %2821 = vmatprep.subr.bf16.mxu0 0
  %2822 = vmatpush1.bf16.msra.mxu0 %v2777
  %2823 = vmatprep.subr.bf16.mxu0 0
  %2824 = vmatpush1.bf16.msra.mxu0 %v2778
  %2825 = vmatprep.subr.bf16.mxu0 0
  %2826 = vmatpush1.bf16.msra.mxu0 %v2779
  %2827 = vmatprep.subr.bf16.mxu0 0
  %2828 = vmatpush1.bf16.msra.mxu0 %v2780
  %2829 = vmatprep.mubr.bf16.mxu0 %v2661
  %2830 = vmatmul.mubr.bf16.gmra.mrb[0].mxu0 %v2147
  %v2831 = vpop.f32.mrb[0].mxu0
  %v2832 = vadd.f32 %v2699, %v2831
  %v2833 = vpop.f32.mrb[0].mxu0
  %v2834 = vpop.f32.mrb[0].mxu0
  %v2835 = vpop.f32.mrb[0].mxu0
  %2836 = vdwg.mxu0
  %2837 = vst [vmem:[%s18] sm:$0x3] %v2144
  %2838 = vst [vmem:[%s19] sm:$0x3] %v2142
  %2839 = vst [vmem:[%s20] sm:$0x3] %v2660
  %2840 = vst [vmem:[%s21] sm:$0x3] %v2658
  %2841 = vst [vmem:[%s22] sm:$0x3] %v2832
  // Predicated region
  $region74: #{gdram_forward.10} parent=0 // pred_check
    _
  $region75: #{gdram_forward.10} parent=0 // pred_check_branch
    %2843 = sbr.rel (0) target = $region77
  $region76: #{gdram_forward.10} parent=0 // pred_region
    _
  $region77: #{gdram_forward.10} parent=0 // pred_fallthru
    _
  // Predicated region
  $region78: #{gdram_forward.10} parent=0 // pred_check
    _
  $region79: #{gdram_forward.10} parent=0 // pred_check_branch
    %2845 = sbr.rel (0) target = $region81
  $region80: #{gdram_forward.10} parent=0 // pred_region
    _
  $region81: #{gdram_forward.10} parent=0 // pred_fallthru
    _
  // Predicated region
  $region82: #{gdram_forward.10} parent=0 // pred_check
    _
  $region83: #{gdram_forward.10} parent=0 // pred_check_branch
    %2847 = sbr.rel (0) target = $region85
  $region84: #{gdram_forward.10} parent=0 // pred_region
    _
  $region85: #{gdram_forward.10} parent=0 // pred_fallthru
    _
  // Predicated region
  $region86: #{gdram_forward.10} parent=0 // pred_check
    _
  $region87: #{gdram_forward.10} parent=0 // pred_check_branch
    %2849 = sbr.rel (0) target = $region89
  $region88: #{gdram_forward.10} parent=0 // pred_region
    _
  $region89: #{gdram_forward.10} parent=0 // pred_fallthru
    _
  // Predicated region
  $region90: #{gdram_forward.10} parent=0 // pred_check
    _
  $region91: #{gdram_forward.10} parent=0 // pred_check_branch
    %2851 = sbr.rel (0) target = $region93
  $region92: #{gdram_forward.10} parent=0 // pred_region
    _
  $region93: #{gdram_forward.10} parent=0 // pred_fallthru
    _
  // Predicated region
  $region94: #{gdram_forward.10} parent=0 // pred_check
    _
  $region95: #{gdram_forward.10} parent=0 // pred_check_branch
    %2853 = sbr.rel (0) target = $region97
  $region96: #{gdram_forward.10} parent=0 // pred_region
    _
  $region97: #{gdram_forward.10} parent=0 // pred_fallthru
    _
  // Predicated region
  $region98: #{gdram_forward.10} parent=0 // pred_check
    _
  $region99: #{gdram_forward.10} parent=0 // pred_check_branch
    %2855 = sbr.rel (0) target = $region101
  $region100: #{gdram_forward.10} parent=0 // pred_region
    _
  $region101: #{gdram_forward.10} parent=0 // pred_fallthru
    _
  // Predicated region
  $region102: #{gdram_forward.10} parent=0 // pred_check
    _
  $region103: #{gdram_forward.10} parent=0 // pred_check_branch
    %2857 = sbr.rel (0) target = $region105
  $region104: #{gdram_forward.10} parent=0 // pred_region
    _
  $region105: #{gdram_forward.10} parent=0 // pred_fallthru
    _
  // Predicated region
  $region106: #{gdram_forward.10} parent=0 // pred_check
    _
  $region107: #{gdram_forward.10} parent=0 // pred_check_branch
    %2859 = sbr.rel (0) target = $region109
  $region108: #{gdram_forward.10} parent=0 // pred_region
    _
  $region109: #{gdram_forward.10} parent=0 // pred_fallthru
    _
  // Predicated region
  $region110: #{gdram_forward.10} parent=0 // pred_check
    _
  $region111: #{gdram_forward.10} parent=0 // pred_check_branch
    %2861 = sbr.rel (0) target = $region113
  $region112: #{gdram_forward.10} parent=0 // pred_region
    _
  $region113: #{gdram_forward.10} parent=0 // pred_fallthru
    _

</llo_original>
